<compile_context>
chip_gen: v7x
topology: tpu7x:2x2x1
jax: 0.10.0
libtpu: 0.0.40
codegen_flags: <defaults>
</compile_context>

<pallas_src>
import numpy as np
import jax
import jax.numpy as jnp
from jax.experimental import pallas as pl
from jax.experimental.pallas import tpu as pltpu


# ----------------------------------------------------------------------------
# Fused Pallas kernel: 3x (conv3x3 s2 p1 -> folded-BN bias -> ReLU)
# ----------------------------------------------------------------------------
def _tap_conv(y_in, s_ref, w_ref, b_ref):
    """One stride-2 3x3 conv block on a spatially-flattened activation.

    y_in : (Q, Ci)   bf16 previous activation, rows = spatial positions.
    s_ref: (9, P, Q) bf16 0/1 selection matrices (in-kernel im2col gather).
    w_ref: (9, Ci, Co) bf16 per-tap weights (BN scale folded in).
    b_ref: (1, Co)   f32  folded conv-bias + BN shift.
    returns (P, Co) f32 post-ReLU activation.
    """
    ntap = s_ref.shape[0]
    P = s_ref.shape[1]
    Co = w_ref.shape[-1]
    acc = jnp.zeros((P, Co), jnp.float32)
    for t in range(ntap):
        # Gather this tap's stride-2 input slice with a 0/1 matmul (exact for
        # bf16 values), then accumulate the tap's contribution on the MXU.
        sl = jnp.dot(s_ref[t], y_in, preferred_element_type=jnp.float32)
        acc = acc + jnp.dot(sl.astype(jnp.bfloat16), w_ref[t],
                            preferred_element_type=jnp.float32)
    return jnp.maximum(acc + b_ref[...], 0.0)


def _sp_fused_kernel(p1_ref, w1_ref, b1_ref, s2_ref, w2_ref, b2_ref,
                     s3_ref, w3_ref, b3_ref, o_ref):
    # Block 1: wrapper-side im2col patches (M1, K1) @ (K1, 128-padded).
    y1 = jnp.dot(p1_ref[0], w1_ref[...], preferred_element_type=jnp.float32)
    y1 = jnp.maximum(y1 + b1_ref[...], 0.0).astype(jnp.bfloat16)      # (64,128)
    # Blocks 2 & 3: im2col done in-kernel via selection matmuls.
    y2 = _tap_conv(y1, s2_ref, w2_ref, b2_ref).astype(jnp.bfloat16)   # (16,128)
    y3 = _tap_conv(y2, s3_ref, w3_ref, b3_ref)                        # (4, 256)
    o_ref[0] = y3.astype(o_ref.dtype)


# ----------------------------------------------------------------------------
# Host-side helpers (plain JAX / numpy glue, all tiny one-time work)
# ----------------------------------------------------------------------------
def _out_hw(h, w, k=3, stride=2, pad=1):
    return (h + 2 * pad - k) // stride + 1, (w + 2 * pad - k) // stride + 1


def _round_up(x, m):
    return (x + m - 1) // m * m


def _im2col(x_nhwc, k=3, stride=2, pad=1):
    """Stride-2 3x3 patch extraction for block 1 only (raw 3-channel input)."""
    N, H, W, C = x_nhwc.shape
    xp = jnp.pad(x_nhwc, ((0, 0), (pad, pad), (pad, pad), (0, 0)))
    OH, OW = _out_hw(H, W, k, stride, pad)
    cols = []
    for kh in range(k):
        for kw in range(k):
            cols.append(
                xp[:, kh:kh + stride * OH:stride, kw:kw + stride * OW:stride, :])
    return jnp.concatenate(cols, axis=-1), OH, OW   # (N, OH, OW, k*k*C)


def _make_selection(H, W, k=3, stride=2, pad=1, dtype=jnp.bfloat16):
    """0/1 gather matrices: S[t, p, q] = 1 iff output position p reads input
    position q under tap t of a kxk stride-`stride` pad-`pad` conv on HxW."""
    OH, OW = _out_hw(H, W, k, stride, pad)
    S = np.zeros((k * k, OH * OW, H * W), np.float32)
    for kh in range(k):
        for kw in range(k):
            t = kh * k + kw
            for oi in range(OH):
                for oj in range(OW):
                    ii = stride * oi + kh - pad
                    ij = stride * oj + kw - pad
                    if 0 <= ii < H and 0 <= ij < W:
                        S[t, oi * OW + oj, ii * W + ij] = 1.0
    return jnp.asarray(S, dtype)


def prepare_params(params, H, W, eps=1e-5):
    """Fold eval-mode BN into weights/bias, pad block-1 Co to a lane-dense 128,
    build in-kernel im2col selection matrices, cast matmul operands to bf16."""
    p1, p2, p3 = params
    bf = jnp.bfloat16

    def fold(p):
        s = p["gamma"] / jnp.sqrt(p["var"] + eps)
        bias = (p["b"] - p["mean"]) * s + p["beta"]
        return s, bias

    s1, bias1 = fold(p1)
    s2, bias2 = fold(p2)
    s3, bias3 = fold(p3)

    k = p1["w"].shape[2]
    ci1 = p1["w"].shape[1]
    co1 = p1["w"].shape[0]                       # 64
    co1p = max(_round_up(co1, 128), 128)         # 128 (lane-dense block-1 out)
    co2 = p2["w"].shape[0]                       # 128
    co3 = p3["w"].shape[0]                       # 256

    # Block 1: flattened im2col weight (k*k*ci, co), BN scale folded, Co padded.
    w1 = jnp.transpose(p1["w"], (2, 3, 1, 0)).reshape(k * k * ci1, co1)
    w1 = w1 * s1[None, :]
    w1 = jnp.pad(w1, ((0, 0), (0, co1p - co1)))
    b1 = jnp.pad(bias1, (0, co1p - co1)).reshape(1, co1p)

    # Block 2: per-tap (9, Ci, Co); zero rows absorb block-1's padded channels.
    w2 = jnp.transpose(p2["w"], (2, 3, 1, 0)).reshape(k * k, co1, co2)
    w2 = w2 * s2[None, None, :]
    w2 = jnp.pad(w2, ((0, 0), (0, co1p - co1), (0, 0)))
    b2 = bias2.reshape(1, co2)

    # Block 3: per-tap (9, Ci, Co).
    w3 = jnp.transpose(p3["w"], (2, 3, 1, 0)).reshape(k * k, co2, co3)
    w3 = w3 * s3[None, None, :]
    b3 = bias3.reshape(1, co3)

    oh1, ow1 = _out_hw(H, W)
    oh2, ow2 = _out_hw(oh1, ow1)

    return dict(
        w1=w1.astype(bf), b1=b1.astype(jnp.float32),
        w2=w2.astype(bf), b2=b2.astype(jnp.float32),
        w3=w3.astype(bf), b3=b3.astype(jnp.float32),
        s2=_make_selection(oh1, ow1),    # (9, oh2*ow2, oh1*ow1)
        s3=_make_selection(oh2, ow2),    # (9, oh3*ow3, oh2*ow2)
    )


def sp_forward(x_nchw, prep):
    """SP forward: NCHW in, NCHW out (matches the PyTorch module)."""
    N, _, H, W = x_nchw.shape
    oh1, ow1 = _out_hw(H, W)
    oh2, ow2 = _out_hw(oh1, ow1)
    oh3, ow3 = _out_hw(oh2, ow2)
    co3 = prep["w3"].shape[-1]

    # Block-1 im2col stays in the wrapper (raw 3-channel input; tiny).
    x = jnp.transpose(x_nchw, (0, 2, 3, 1))                        # NHWC
    patches, _, _ = _im2col(x)
    p1 = patches.reshape(N, oh1 * ow1, -1).astype(jnp.bfloat16)    # (N, 64, 27)
    m1, k1 = p1.shape[1], p1.shape[2]

    out = pl.pallas_call(
        _sp_fused_kernel,
        out_shape=jax.ShapeDtypeStruct((N, oh3 * ow3, co3), jnp.float32),
        grid=(N,),
        in_specs=[
            pl.BlockSpec((1, m1, k1), lambda i: (i, 0, 0)),
            pl.BlockSpec(prep["w1"].shape, lambda i: (0, 0)),
            pl.BlockSpec(prep["b1"].shape, lambda i: (0, 0)),
            pl.BlockSpec(prep["s2"].shape, lambda i: (0, 0, 0)),
            pl.BlockSpec(prep["w2"].shape, lambda i: (0, 0, 0)),
            pl.BlockSpec(prep["b2"].shape, lambda i: (0, 0)),
            pl.BlockSpec(prep["s3"].shape, lambda i: (0, 0, 0)),
            pl.BlockSpec(prep["w3"].shape, lambda i: (0, 0, 0)),
            pl.BlockSpec(prep["b3"].shape, lambda i: (0, 0)),
        ],
        out_specs=pl.BlockSpec((1, oh3 * ow3, co3), lambda i: (i, 0, 0)),
        compiler_params=pltpu.CompilerParams(
            dimension_semantics=("parallel",)),
    )(p1, prep["w1"], prep["b1"], prep["s2"], prep["w2"], prep["b2"],
      prep["s3"], prep["w3"], prep["b3"])

    y = out.reshape(N, oh3, ow3, co3)
    return jnp.transpose(y, (0, 3, 1, 2))                          # NCHW


# ----------------------------------------------------------------------------
# Deterministic synthetic parameters (shapes from SP.__init__)
# ----------------------------------------------------------------------------
def init_params(key):
    dims = [(3, 64), (64, 128), (128, 256)]
    params = []
    for i, (ci, co) in enumerate(dims):
        k = jax.random.fold_in(key, i)
        kw_, kb, kg, kbe, km, kv = jax.random.split(k, 6)
        params.append(dict(
            w=jax.random.normal(kw_, (co, ci, 3, 3), jnp.float32) * 0.05,
            b=jax.random.normal(kb, (co,), jnp.float32) * 0.05,
            gamma=1.0 + 0.1 * jax.random.normal(kg, (co,), jnp.float32),
            beta=0.1 * jax.random.normal(kbe, (co,), jnp.float32),
            mean=0.1 * jax.random.normal(km, (co,), jnp.float32),
            var=1.0 + 0.1 * jnp.abs(jax.random.normal(kv, (co,), jnp.float32)),
        ))
    return params


# ----------------------------------------------------------------------------
# Pure-JAX f32 reference (lax.conv) for the correctness check
# ----------------------------------------------------------------------------
def sp_reference(x_nchw, params, eps=1e-5):
    x = jnp.transpose(x_nchw, (0, 2, 3, 1))
    for p in params:
        w_hwio = jnp.transpose(p["w"], (2, 3, 1, 0))
        y = jax.lax.conv_general_dilated(
            x, w_hwio, window_strides=(2, 2), padding=((1, 1), (1, 1)),
            dimension_numbers=("NHWC", "HWIO", "NHWC"))
        y = y + p["b"]
        s = p["gamma"] / jnp.sqrt(p["var"] + eps)
        y = (y - p["mean"]) * s + p["beta"]
        x = jnp.maximum(y, 0.0)
    return jnp.transpose(x, (0, 3, 1, 2))


if __name__ == "__main__":
    key = jax.random.PRNGKey(0)
    pkey, xkey = jax.random.split(key)
    params = init_params(pkey)

    # Input matching the PyTorch convention: NCHW, 3 input channels.
    x = jax.random.normal(xkey, (2, 3, 16, 16), jnp.float32)

    prep = prepare_params(params, 16, 16)
    fwd = jax.jit(sp_forward)
    out = jax.block_until_ready(fwd(x, prep))
    assert out.shape == (2, 256, 2, 2), out.shape

    ref = jax.block_until_ready(sp_reference(x, params))
    rel = float(jnp.max(jnp.abs(out - ref)) /
                jnp.maximum(jnp.max(jnp.abs(ref)), 1e-6))
    # bf16 MXU operands with f32 accumulation: allow a few % relative error.
    assert rel < 5e-2, rel

    print("KERNEL_OK")
</pallas_src>

<mosaic_0001>
module attributes {stable_mosaic.version = 11 : i64} {
  func.func @_sp_fused_kernel(%arg0: i32, %arg1: memref<1x64x27xbf16, #tpu.memory_space<vmem>>, %arg2: memref<27x128xbf16, #tpu.memory_space<vmem>>, %arg3: memref<1x128xf32, #tpu.memory_space<vmem>>, %arg4: memref<9x16x64xbf16, #tpu.memory_space<vmem>>, %arg5: memref<9x128x128xbf16, #tpu.memory_space<vmem>>, %arg6: memref<1x128xf32, #tpu.memory_space<vmem>>, %arg7: memref<9x4x16xbf16, #tpu.memory_space<vmem>>, %arg8: memref<9x128x256xbf16, #tpu.memory_space<vmem>>, %arg9: memref<1x256xf32, #tpu.memory_space<vmem>>, %arg10: memref<1x4x256xf32, #tpu.memory_space<vmem>>) attributes {dimension_semantics = [#tpu.dimension_semantics<parallel>], iteration_bounds = array<i64: 2>, scalar_prefetch = 0 : i64, scratch_operands = 0 : i64, tpu.core_type = #tpu.core_type<tc>, window_params = [{transform_indices = @transform_0, window_bounds = array<i64: 1, 64, 27>}, {pipeline_mode = #tpu.pipeline_mode<synchronous>, transform_indices = @transform_1, window_bounds = array<i64: 27, 128>}, {pipeline_mode = #tpu.pipeline_mode<synchronous>, transform_indices = @transform_2, window_bounds = array<i64: 1, 128>}, {pipeline_mode = #tpu.pipeline_mode<synchronous>, transform_indices = @transform_3, window_bounds = array<i64: 9, 16, 64>}, {pipeline_mode = #tpu.pipeline_mode<synchronous>, transform_indices = @transform_4, window_bounds = array<i64: 9, 128, 128>}, {pipeline_mode = #tpu.pipeline_mode<synchronous>, transform_indices = @transform_5, window_bounds = array<i64: 1, 128>}, {pipeline_mode = #tpu.pipeline_mode<synchronous>, transform_indices = @transform_6, window_bounds = array<i64: 9, 4, 16>}, {pipeline_mode = #tpu.pipeline_mode<synchronous>, transform_indices = @transform_7, window_bounds = array<i64: 9, 128, 256>}, {pipeline_mode = #tpu.pipeline_mode<synchronous>, transform_indices = @transform_8, window_bounds = array<i64: 1, 256>}, {transform_indices = @transform_9, window_bounds = array<i64: 1, 4, 256>}]} {
    %c0 = arith.constant 0 : index
    %c0_0 = arith.constant 0 : index
    %c0_1 = arith.constant 0 : index
    %0 = vector.load %arg1[%c0, %c0_0, %c0_1] : memref<1x64x27xbf16, #tpu.memory_space<vmem>>, vector<1x64x27xbf16>
    %1 = vector.shape_cast %0 : vector<1x64x27xbf16> to vector<64x27xbf16>
    %c0_2 = arith.constant 0 : index
    %c0_3 = arith.constant 0 : index
    %2 = vector.load %arg2[%c0_2, %c0_3] : memref<27x128xbf16, #tpu.memory_space<vmem>>, vector<27x128xbf16>
    %cst = arith.constant dense<0.000000e+00> : vector<64x128xf32>
    %3 = tpu.matmul %1, %2, %cst {dimension_numbers = #tpu.dot_dimension_numbers<[1], [0], [0], [1], [0, 0, 1, 1], [], []>} : vector<64x27xbf16>, vector<27x128xbf16>, vector<64x128xf32> -> vector<64x128xf32>
    %c0_4 = arith.constant 0 : index
    %c0_5 = arith.constant 0 : index
    %4 = vector.load %arg3[%c0_4, %c0_5] : memref<1x128xf32, #tpu.memory_space<vmem>>, vector<1x128xf32>
    %5 = vector.broadcast %4 : vector<1x128xf32> to vector<64x128xf32>
    %6 = arith.addf %3, %5 : vector<64x128xf32>
    %cst_6 = arith.constant 0.000000e+00 : f32
    %7 = vector.broadcast %cst_6 : f32 to vector<64x128xf32>
    %8 = arith.maximumf %6, %7 : vector<64x128xf32>
    %9 = arith.truncf %8 : vector<64x128xf32> to vector<64x128xbf16>
    %cst_7 = arith.constant 0.000000e+00 : f32
    %10 = vector.broadcast %cst_7 : f32 to vector<16x128xf32>
    %c0_8 = arith.constant 0 : index
    %c0_9 = arith.constant 0 : index
    %c0_10 = arith.constant 0 : index
    %11 = vector.load %arg4[%c0_8, %c0_9, %c0_10] : memref<9x16x64xbf16, #tpu.memory_space<vmem>>, vector<1x16x64xbf16>
    %12 = vector.shape_cast %11 : vector<1x16x64xbf16> to vector<16x64xbf16>
    %cst_11 = arith.constant dense<0.000000e+00> : vector<16x128xf32>
    %13 = tpu.matmul %12, %9, %cst_11 {dimension_numbers = #tpu.dot_dimension_numbers<[1], [0], [0], [1], [0, 0, 1, 1], [], []>} : vector<16x64xbf16>, vector<64x128xbf16>, vector<16x128xf32> -> vector<16x128xf32>
    %14 = arith.truncf %13 : vector<16x128xf32> to vector<16x128xbf16>
    %c0_12 = arith.constant 0 : index
    %c0_13 = arith.constant 0 : index
    %c0_14 = arith.constant 0 : index
    %15 = vector.load %arg5[%c0_12, %c0_13, %c0_14] : memref<9x128x128xbf16, #tpu.memory_space<vmem>>, vector<1x128x128xbf16>
    %16 = vector.shape_cast %15 : vector<1x128x128xbf16> to vector<128x128xbf16>
    %cst_15 = arith.constant dense<0.000000e+00> : vector<16x128xf32>
    %17 = tpu.matmul %14, %16, %cst_15 {dimension_numbers = #tpu.dot_dimension_numbers<[1], [0], [0], [1], [0, 0, 1, 1], [], []>} : vector<16x128xbf16>, vector<128x128xbf16>, vector<16x128xf32> -> vector<16x128xf32>
    %18 = arith.addf %10, %17 : vector<16x128xf32>
    %c1 = arith.constant 1 : index
    %c0_16 = arith.constant 0 : index
    %c0_17 = arith.constant 0 : index
    %19 = vector.load %arg4[%c1, %c0_16, %c0_17] : memref<9x16x64xbf16, #tpu.memory_space<vmem>>, vector<1x16x64xbf16>
    %20 = vector.shape_cast %19 : vector<1x16x64xbf16> to vector<16x64xbf16>
    %cst_18 = arith.constant dense<0.000000e+00> : vector<16x128xf32>
    %21 = tpu.matmul %20, %9, %cst_18 {dimension_numbers = #tpu.dot_dimension_numbers<[1], [0], [0], [1], [0, 0, 1, 1], [], []>} : vector<16x64xbf16>, vector<64x128xbf16>, vector<16x128xf32> -> vector<16x128xf32>
    %22 = arith.truncf %21 : vector<16x128xf32> to vector<16x128xbf16>
    %c1_19 = arith.constant 1 : index
    %c0_20 = arith.constant 0 : index
    %c0_21 = arith.constant 0 : index
    %23 = vector.load %arg5[%c1_19, %c0_20, %c0_21] : memref<9x128x128xbf16, #tpu.memory_space<vmem>>, vector<1x128x128xbf16>
    %24 = vector.shape_cast %23 : vector<1x128x128xbf16> to vector<128x128xbf16>
    %cst_22 = arith.constant dense<0.000000e+00> : vector<16x128xf32>
    %25 = tpu.matmul %22, %24, %cst_22 {dimension_numbers = #tpu.dot_dimension_numbers<[1], [0], [0], [1], [0, 0, 1, 1], [], []>} : vector<16x128xbf16>, vector<128x128xbf16>, vector<16x128xf32> -> vector<16x128xf32>
    %26 = arith.addf %18, %25 : vector<16x128xf32>
    %c2 = arith.constant 2 : index
    %c0_23 = arith.constant 0 : index
    %c0_24 = arith.constant 0 : index
    %27 = vector.load %arg4[%c2, %c0_23, %c0_24] : memref<9x16x64xbf16, #tpu.memory_space<vmem>>, vector<1x16x64xbf16>
    %28 = vector.shape_cast %27 : vector<1x16x64xbf16> to vector<16x64xbf16>
    %cst_25 = arith.constant dense<0.000000e+00> : vector<16x128xf32>
    %29 = tpu.matmul %28, %9, %cst_25 {dimension_numbers = #tpu.dot_dimension_numbers<[1], [0], [0], [1], [0, 0, 1, 1], [], []>} : vector<16x64xbf16>, vector<64x128xbf16>, vector<16x128xf32> -> vector<16x128xf32>
    %30 = arith.truncf %29 : vector<16x128xf32> to vector<16x128xbf16>
    %c2_26 = arith.constant 2 : index
    %c0_27 = arith.constant 0 : index
    %c0_28 = arith.constant 0 : index
    %31 = vector.load %arg5[%c2_26, %c0_27, %c0_28] : memref<9x128x128xbf16, #tpu.memory_space<vmem>>, vector<1x128x128xbf16>
    %32 = vector.shape_cast %31 : vector<1x128x128xbf16> to vector<128x128xbf16>
    %cst_29 = arith.constant dense<0.000000e+00> : vector<16x128xf32>
    %33 = tpu.matmul %30, %32, %cst_29 {dimension_numbers = #tpu.dot_dimension_numbers<[1], [0], [0], [1], [0, 0, 1, 1], [], []>} : vector<16x128xbf16>, vector<128x128xbf16>, vector<16x128xf32> -> vector<16x128xf32>
    %34 = arith.addf %26, %33 : vector<16x128xf32>
    %c3 = arith.constant 3 : index
    %c0_30 = arith.constant 0 : index
    %c0_31 = arith.constant 0 : index
    %35 = vector.load %arg4[%c3, %c0_30, %c0_31] : memref<9x16x64xbf16, #tpu.memory_space<vmem>>, vector<1x16x64xbf16>
    %36 = vector.shape_cast %35 : vector<1x16x64xbf16> to vector<16x64xbf16>
    %cst_32 = arith.constant dense<0.000000e+00> : vector<16x128xf32>
    %37 = tpu.matmul %36, %9, %cst_32 {dimension_numbers = #tpu.dot_dimension_numbers<[1], [0], [0], [1], [0, 0, 1, 1], [], []>} : vector<16x64xbf16>, vector<64x128xbf16>, vector<16x128xf32> -> vector<16x128xf32>
    %38 = arith.truncf %37 : vector<16x128xf32> to vector<16x128xbf16>
    %c3_33 = arith.constant 3 : index
    %c0_34 = arith.constant 0 : index
    %c0_35 = arith.constant 0 : index
    %39 = vector.load %arg5[%c3_33, %c0_34, %c0_35] : memref<9x128x128xbf16, #tpu.memory_space<vmem>>, vector<1x128x128xbf16>
    %40 = vector.shape_cast %39 : vector<1x128x128xbf16> to vector<128x128xbf16>
    %cst_36 = arith.constant dense<0.000000e+00> : vector<16x128xf32>
    %41 = tpu.matmul %38, %40, %cst_36 {dimension_numbers = #tpu.dot_dimension_numbers<[1], [0], [0], [1], [0, 0, 1, 1], [], []>} : vector<16x128xbf16>, vector<128x128xbf16>, vector<16x128xf32> -> vector<16x128xf32>
    %42 = arith.addf %34, %41 : vector<16x128xf32>
    %c4 = arith.constant 4 : index
    %c0_37 = arith.constant 0 : index
    %c0_38 = arith.constant 0 : index
    %43 = vector.load %arg4[%c4, %c0_37, %c0_38] : memref<9x16x64xbf16, #tpu.memory_space<vmem>>, vector<1x16x64xbf16>
    %44 = vector.shape_cast %43 : vector<1x16x64xbf16> to vector<16x64xbf16>
    %cst_39 = arith.constant dense<0.000000e+00> : vector<16x128xf32>
    %45 = tpu.matmul %44, %9, %cst_39 {dimension_numbers = #tpu.dot_dimension_numbers<[1], [0], [0], [1], [0, 0, 1, 1], [], []>} : vector<16x64xbf16>, vector<64x128xbf16>, vector<16x128xf32> -> vector<16x128xf32>
    %46 = arith.truncf %45 : vector<16x128xf32> to vector<16x128xbf16>
    %c4_40 = arith.constant 4 : index
    %c0_41 = arith.constant 0 : index
    %c0_42 = arith.constant 0 : index
    %47 = vector.load %arg5[%c4_40, %c0_41, %c0_42] : memref<9x128x128xbf16, #tpu.memory_space<vmem>>, vector<1x128x128xbf16>
    %48 = vector.shape_cast %47 : vector<1x128x128xbf16> to vector<128x128xbf16>
    %cst_43 = arith.constant dense<0.000000e+00> : vector<16x128xf32>
    %49 = tpu.matmul %46, %48, %cst_43 {dimension_numbers = #tpu.dot_dimension_numbers<[1], [0], [0], [1], [0, 0, 1, 1], [], []>} : vector<16x128xbf16>, vector<128x128xbf16>, vector<16x128xf32> -> vector<16x128xf32>
    %50 = arith.addf %42, %49 : vector<16x128xf32>
    %c5 = arith.constant 5 : index
    %c0_44 = arith.constant 0 : index
    %c0_45 = arith.constant 0 : index
    %51 = vector.load %arg4[%c5, %c0_44, %c0_45] : memref<9x16x64xbf16, #tpu.memory_space<vmem>>, vector<1x16x64xbf16>
    %52 = vector.shape_cast %51 : vector<1x16x64xbf16> to vector<16x64xbf16>
    %cst_46 = arith.constant dense<0.000000e+00> : vector<16x128xf32>
    %53 = tpu.matmul %52, %9, %cst_46 {dimension_numbers = #tpu.dot_dimension_numbers<[1], [0], [0], [1], [0, 0, 1, 1], [], []>} : vector<16x64xbf16>, vector<64x128xbf16>, vector<16x128xf32> -> vector<16x128xf32>
    %54 = arith.truncf %53 : vector<16x128xf32> to vector<16x128xbf16>
    %c5_47 = arith.constant 5 : index
    %c0_48 = arith.constant 0 : index
    %c0_49 = arith.constant 0 : index
    %55 = vector.load %arg5[%c5_47, %c0_48, %c0_49] : memref<9x128x128xbf16, #tpu.memory_space<vmem>>, vector<1x128x128xbf16>
    %56 = vector.shape_cast %55 : vector<1x128x128xbf16> to vector<128x128xbf16>
    %cst_50 = arith.constant dense<0.000000e+00> : vector<16x128xf32>
    %57 = tpu.matmul %54, %56, %cst_50 {dimension_numbers = #tpu.dot_dimension_numbers<[1], [0], [0], [1], [0, 0, 1, 1], [], []>} : vector<16x128xbf16>, vector<128x128xbf16>, vector<16x128xf32> -> vector<16x128xf32>
    %58 = arith.addf %50, %57 : vector<16x128xf32>
    %c6 = arith.constant 6 : index
    %c0_51 = arith.constant 0 : index
    %c0_52 = arith.constant 0 : index
    %59 = vector.load %arg4[%c6, %c0_51, %c0_52] : memref<9x16x64xbf16, #tpu.memory_space<vmem>>, vector<1x16x64xbf16>
    %60 = vector.shape_cast %59 : vector<1x16x64xbf16> to vector<16x64xbf16>
    %cst_53 = arith.constant dense<0.000000e+00> : vector<16x128xf32>
    %61 = tpu.matmul %60, %9, %cst_53 {dimension_numbers = #tpu.dot_dimension_numbers<[1], [0], [0], [1], [0, 0, 1, 1], [], []>} : vector<16x64xbf16>, vector<64x128xbf16>, vector<16x128xf32> -> vector<16x128xf32>
    %62 = arith.truncf %61 : vector<16x128xf32> to vector<16x128xbf16>
    %c6_54 = arith.constant 6 : index
    %c0_55 = arith.constant 0 : index
    %c0_56 = arith.constant 0 : index
    %63 = vector.load %arg5[%c6_54, %c0_55, %c0_56] : memref<9x128x128xbf16, #tpu.memory_space<vmem>>, vector<1x128x128xbf16>
    %64 = vector.shape_cast %63 : vector<1x128x128xbf16> to vector<128x128xbf16>
    %cst_57 = arith.constant dense<0.000000e+00> : vector<16x128xf32>
    %65 = tpu.matmul %62, %64, %cst_57 {dimension_numbers = #tpu.dot_dimension_numbers<[1], [0], [0], [1], [0, 0, 1, 1], [], []>} : vector<16x128xbf16>, vector<128x128xbf16>, vector<16x128xf32> -> vector<16x128xf32>
    %66 = arith.addf %58, %65 : vector<16x128xf32>
    %c7 = arith.constant 7 : index
    %c0_58 = arith.constant 0 : index
    %c0_59 = arith.constant 0 : index
    %67 = vector.load %arg4[%c7, %c0_58, %c0_59] : memref<9x16x64xbf16, #tpu.memory_space<vmem>>, vector<1x16x64xbf16>
    %68 = vector.shape_cast %67 : vector<1x16x64xbf16> to vector<16x64xbf16>
    %cst_60 = arith.constant dense<0.000000e+00> : vector<16x128xf32>
    %69 = tpu.matmul %68, %9, %cst_60 {dimension_numbers = #tpu.dot_dimension_numbers<[1], [0], [0], [1], [0, 0, 1, 1], [], []>} : vector<16x64xbf16>, vector<64x128xbf16>, vector<16x128xf32> -> vector<16x128xf32>
    %70 = arith.truncf %69 : vector<16x128xf32> to vector<16x128xbf16>
    %c7_61 = arith.constant 7 : index
    %c0_62 = arith.constant 0 : index
    %c0_63 = arith.constant 0 : index
    %71 = vector.load %arg5[%c7_61, %c0_62, %c0_63] : memref<9x128x128xbf16, #tpu.memory_space<vmem>>, vector<1x128x128xbf16>
    %72 = vector.shape_cast %71 : vector<1x128x128xbf16> to vector<128x128xbf16>
    %cst_64 = arith.constant dense<0.000000e+00> : vector<16x128xf32>
    %73 = tpu.matmul %70, %72, %cst_64 {dimension_numbers = #tpu.dot_dimension_numbers<[1], [0], [0], [1], [0, 0, 1, 1], [], []>} : vector<16x128xbf16>, vector<128x128xbf16>, vector<16x128xf32> -> vector<16x128xf32>
    %74 = arith.addf %66, %73 : vector<16x128xf32>
    %c8 = arith.constant 8 : index
    %c0_65 = arith.constant 0 : index
    %c0_66 = arith.constant 0 : index
    %75 = vector.load %arg4[%c8, %c0_65, %c0_66] : memref<9x16x64xbf16, #tpu.memory_space<vmem>>, vector<1x16x64xbf16>
    %76 = vector.shape_cast %75 : vector<1x16x64xbf16> to vector<16x64xbf16>
    %cst_67 = arith.constant dense<0.000000e+00> : vector<16x128xf32>
    %77 = tpu.matmul %76, %9, %cst_67 {dimension_numbers = #tpu.dot_dimension_numbers<[1], [0], [0], [1], [0, 0, 1, 1], [], []>} : vector<16x64xbf16>, vector<64x128xbf16>, vector<16x128xf32> -> vector<16x128xf32>
    %78 = arith.truncf %77 : vector<16x128xf32> to vector<16x128xbf16>
    %c8_68 = arith.constant 8 : index
    %c0_69 = arith.constant 0 : index
    %c0_70 = arith.constant 0 : index
    %79 = vector.load %arg5[%c8_68, %c0_69, %c0_70] : memref<9x128x128xbf16, #tpu.memory_space<vmem>>, vector<1x128x128xbf16>
    %80 = vector.shape_cast %79 : vector<1x128x128xbf16> to vector<128x128xbf16>
    %cst_71 = arith.constant dense<0.000000e+00> : vector<16x128xf32>
    %81 = tpu.matmul %78, %80, %cst_71 {dimension_numbers = #tpu.dot_dimension_numbers<[1], [0], [0], [1], [0, 0, 1, 1], [], []>} : vector<16x128xbf16>, vector<128x128xbf16>, vector<16x128xf32> -> vector<16x128xf32>
    %82 = arith.addf %74, %81 : vector<16x128xf32>
    %c0_72 = arith.constant 0 : index
    %c0_73 = arith.constant 0 : index
    %83 = vector.load %arg6[%c0_72, %c0_73] : memref<1x128xf32, #tpu.memory_space<vmem>>, vector<1x128xf32>
    %84 = vector.broadcast %83 : vector<1x128xf32> to vector<16x128xf32>
    %85 = arith.addf %82, %84 : vector<16x128xf32>
    %cst_74 = arith.constant 0.000000e+00 : f32
    %86 = vector.broadcast %cst_74 : f32 to vector<16x128xf32>
    %87 = arith.maximumf %85, %86 : vector<16x128xf32>
    %88 = arith.truncf %87 : vector<16x128xf32> to vector<16x128xbf16>
    %cst_75 = arith.constant 0.000000e+00 : f32
    %89 = vector.broadcast %cst_75 : f32 to vector<4x256xf32>
    %c0_76 = arith.constant 0 : index
    %c0_77 = arith.constant 0 : index
    %c0_78 = arith.constant 0 : index
    %90 = vector.load %arg7[%c0_76, %c0_77, %c0_78] : memref<9x4x16xbf16, #tpu.memory_space<vmem>>, vector<1x4x16xbf16>
    %91 = vector.shape_cast %90 : vector<1x4x16xbf16> to vector<4x16xbf16>
    %cst_79 = arith.constant dense<0.000000e+00> : vector<4x128xf32>
    %92 = tpu.matmul %91, %88, %cst_79 {dimension_numbers = #tpu.dot_dimension_numbers<[1], [0], [0], [1], [0, 0, 1, 1], [], []>} : vector<4x16xbf16>, vector<16x128xbf16>, vector<4x128xf32> -> vector<4x128xf32>
    %93 = arith.truncf %92 : vector<4x128xf32> to vector<4x128xbf16>
    %c0_80 = arith.constant 0 : index
    %c0_81 = arith.constant 0 : index
    %c0_82 = arith.constant 0 : index
    %94 = vector.load %arg8[%c0_80, %c0_81, %c0_82] : memref<9x128x256xbf16, #tpu.memory_space<vmem>>, vector<1x128x256xbf16>
    %95 = vector.shape_cast %94 : vector<1x128x256xbf16> to vector<128x256xbf16>
    %cst_83 = arith.constant dense<0.000000e+00> : vector<4x256xf32>
    %96 = tpu.matmul %93, %95, %cst_83 {dimension_numbers = #tpu.dot_dimension_numbers<[1], [0], [0], [1], [0, 0, 1, 1], [], []>} : vector<4x128xbf16>, vector<128x256xbf16>, vector<4x256xf32> -> vector<4x256xf32>
    %97 = arith.addf %89, %96 : vector<4x256xf32>
    %c1_84 = arith.constant 1 : index
    %c0_85 = arith.constant 0 : index
    %c0_86 = arith.constant 0 : index
    %98 = vector.load %arg7[%c1_84, %c0_85, %c0_86] : memref<9x4x16xbf16, #tpu.memory_space<vmem>>, vector<1x4x16xbf16>
    %99 = vector.shape_cast %98 : vector<1x4x16xbf16> to vector<4x16xbf16>
    %cst_87 = arith.constant dense<0.000000e+00> : vector<4x128xf32>
    %100 = tpu.matmul %99, %88, %cst_87 {dimension_numbers = #tpu.dot_dimension_numbers<[1], [0], [0], [1], [0, 0, 1, 1], [], []>} : vector<4x16xbf16>, vector<16x128xbf16>, vector<4x128xf32> -> vector<4x128xf32>
    %101 = arith.truncf %100 : vector<4x128xf32> to vector<4x128xbf16>
    %c1_88 = arith.constant 1 : index
    %c0_89 = arith.constant 0 : index
    %c0_90 = arith.constant 0 : index
    %102 = vector.load %arg8[%c1_88, %c0_89, %c0_90] : memref<9x128x256xbf16, #tpu.memory_space<vmem>>, vector<1x128x256xbf16>
    %103 = vector.shape_cast %102 : vector<1x128x256xbf16> to vector<128x256xbf16>
    %cst_91 = arith.constant dense<0.000000e+00> : vector<4x256xf32>
    %104 = tpu.matmul %101, %103, %cst_91 {dimension_numbers = #tpu.dot_dimension_numbers<[1], [0], [0], [1], [0, 0, 1, 1], [], []>} : vector<4x128xbf16>, vector<128x256xbf16>, vector<4x256xf32> -> vector<4x256xf32>
    %105 = arith.addf %97, %104 : vector<4x256xf32>
    %c2_92 = arith.constant 2 : index
    %c0_93 = arith.constant 0 : index
    %c0_94 = arith.constant 0 : index
    %106 = vector.load %arg7[%c2_92, %c0_93, %c0_94] : memref<9x4x16xbf16, #tpu.memory_space<vmem>>, vector<1x4x16xbf16>
    %107 = vector.shape_cast %106 : vector<1x4x16xbf16> to vector<4x16xbf16>
    %cst_95 = arith.constant dense<0.000000e+00> : vector<4x128xf32>
    %108 = tpu.matmul %107, %88, %cst_95 {dimension_numbers = #tpu.dot_dimension_numbers<[1], [0], [0], [1], [0, 0, 1, 1], [], []>} : vector<4x16xbf16>, vector<16x128xbf16>, vector<4x128xf32> -> vector<4x128xf32>
    %109 = arith.truncf %108 : vector<4x128xf32> to vector<4x128xbf16>
    %c2_96 = arith.constant 2 : index
    %c0_97 = arith.constant 0 : index
    %c0_98 = arith.constant 0 : index
    %110 = vector.load %arg8[%c2_96, %c0_97, %c0_98] : memref<9x128x256xbf16, #tpu.memory_space<vmem>>, vector<1x128x256xbf16>
    %111 = vector.shape_cast %110 : vector<1x128x256xbf16> to vector<128x256xbf16>
    %cst_99 = arith.constant dense<0.000000e+00> : vector<4x256xf32>
    %112 = tpu.matmul %109, %111, %cst_99 {dimension_numbers = #tpu.dot_dimension_numbers<[1], [0], [0], [1], [0, 0, 1, 1], [], []>} : vector<4x128xbf16>, vector<128x256xbf16>, vector<4x256xf32> -> vector<4x256xf32>
    %113 = arith.addf %105, %112 : vector<4x256xf32>
    %c3_100 = arith.constant 3 : index
    %c0_101 = arith.constant 0 : index
    %c0_102 = arith.constant 0 : index
    %114 = vector.load %arg7[%c3_100, %c0_101, %c0_102] : memref<9x4x16xbf16, #tpu.memory_space<vmem>>, vector<1x4x16xbf16>
    %115 = vector.shape_cast %114 : vector<1x4x16xbf16> to vector<4x16xbf16>
    %cst_103 = arith.constant dense<0.000000e+00> : vector<4x128xf32>
    %116 = tpu.matmul %115, %88, %cst_103 {dimension_numbers = #tpu.dot_dimension_numbers<[1], [0], [0], [1], [0, 0, 1, 1], [], []>} : vector<4x16xbf16>, vector<16x128xbf16>, vector<4x128xf32> -> vector<4x128xf32>
    %117 = arith.truncf %116 : vector<4x128xf32> to vector<4x128xbf16>
    %c3_104 = arith.constant 3 : index
    %c0_105 = arith.constant 0 : index
    %c0_106 = arith.constant 0 : index
    %118 = vector.load %arg8[%c3_104, %c0_105, %c0_106] : memref<9x128x256xbf16, #tpu.memory_space<vmem>>, vector<1x128x256xbf16>
    %119 = vector.shape_cast %118 : vector<1x128x256xbf16> to vector<128x256xbf16>
    %cst_107 = arith.constant dense<0.000000e+00> : vector<4x256xf32>
    %120 = tpu.matmul %117, %119, %cst_107 {dimension_numbers = #tpu.dot_dimension_numbers<[1], [0], [0], [1], [0, 0, 1, 1], [], []>} : vector<4x128xbf16>, vector<128x256xbf16>, vector<4x256xf32> -> vector<4x256xf32>
    %121 = arith.addf %113, %120 : vector<4x256xf32>
    %c4_108 = arith.constant 4 : index
    %c0_109 = arith.constant 0 : index
    %c0_110 = arith.constant 0 : index
    %122 = vector.load %arg7[%c4_108, %c0_109, %c0_110] : memref<9x4x16xbf16, #tpu.memory_space<vmem>>, vector<1x4x16xbf16>
    %123 = vector.shape_cast %122 : vector<1x4x16xbf16> to vector<4x16xbf16>
    %cst_111 = arith.constant dense<0.000000e+00> : vector<4x128xf32>
    %124 = tpu.matmul %123, %88, %cst_111 {dimension_numbers = #tpu.dot_dimension_numbers<[1], [0], [0], [1], [0, 0, 1, 1], [], []>} : vector<4x16xbf16>, vector<16x128xbf16>, vector<4x128xf32> -> vector<4x128xf32>
    %125 = arith.truncf %124 : vector<4x128xf32> to vector<4x128xbf16>
    %c4_112 = arith.constant 4 : index
    %c0_113 = arith.constant 0 : index
    %c0_114 = arith.constant 0 : index
    %126 = vector.load %arg8[%c4_112, %c0_113, %c0_114] : memref<9x128x256xbf16, #tpu.memory_space<vmem>>, vector<1x128x256xbf16>
    %127 = vector.shape_cast %126 : vector<1x128x256xbf16> to vector<128x256xbf16>
    %cst_115 = arith.constant dense<0.000000e+00> : vector<4x256xf32>
    %128 = tpu.matmul %125, %127, %cst_115 {dimension_numbers = #tpu.dot_dimension_numbers<[1], [0], [0], [1], [0, 0, 1, 1], [], []>} : vector<4x128xbf16>, vector<128x256xbf16>, vector<4x256xf32> -> vector<4x256xf32>
    %129 = arith.addf %121, %128 : vector<4x256xf32>
    %c5_116 = arith.constant 5 : index
    %c0_117 = arith.constant 0 : index
    %c0_118 = arith.constant 0 : index
    %130 = vector.load %arg7[%c5_116, %c0_117, %c0_118] : memref<9x4x16xbf16, #tpu.memory_space<vmem>>, vector<1x4x16xbf16>
    %131 = vector.shape_cast %130 : vector<1x4x16xbf16> to vector<4x16xbf16>
    %cst_119 = arith.constant dense<0.000000e+00> : vector<4x128xf32>
    %132 = tpu.matmul %131, %88, %cst_119 {dimension_numbers = #tpu.dot_dimension_numbers<[1], [0], [0], [1], [0, 0, 1, 1], [], []>} : vector<4x16xbf16>, vector<16x128xbf16>, vector<4x128xf32> -> vector<4x128xf32>
    %133 = arith.truncf %132 : vector<4x128xf32> to vector<4x128xbf16>
    %c5_120 = arith.constant 5 : index
    %c0_121 = arith.constant 0 : index
    %c0_122 = arith.constant 0 : index
    %134 = vector.load %arg8[%c5_120, %c0_121, %c0_122] : memref<9x128x256xbf16, #tpu.memory_space<vmem>>, vector<1x128x256xbf16>
    %135 = vector.shape_cast %134 : vector<1x128x256xbf16> to vector<128x256xbf16>
    %cst_123 = arith.constant dense<0.000000e+00> : vector<4x256xf32>
    %136 = tpu.matmul %133, %135, %cst_123 {dimension_numbers = #tpu.dot_dimension_numbers<[1], [0], [0], [1], [0, 0, 1, 1], [], []>} : vector<4x128xbf16>, vector<128x256xbf16>, vector<4x256xf32> -> vector<4x256xf32>
    %137 = arith.addf %129, %136 : vector<4x256xf32>
    %c6_124 = arith.constant 6 : index
    %c0_125 = arith.constant 0 : index
    %c0_126 = arith.constant 0 : index
    %138 = vector.load %arg7[%c6_124, %c0_125, %c0_126] : memref<9x4x16xbf16, #tpu.memory_space<vmem>>, vector<1x4x16xbf16>
    %139 = vector.shape_cast %138 : vector<1x4x16xbf16> to vector<4x16xbf16>
    %cst_127 = arith.constant dense<0.000000e+00> : vector<4x128xf32>
    %140 = tpu.matmul %139, %88, %cst_127 {dimension_numbers = #tpu.dot_dimension_numbers<[1], [0], [0], [1], [0, 0, 1, 1], [], []>} : vector<4x16xbf16>, vector<16x128xbf16>, vector<4x128xf32> -> vector<4x128xf32>
    %141 = arith.truncf %140 : vector<4x128xf32> to vector<4x128xbf16>
    %c6_128 = arith.constant 6 : index
    %c0_129 = arith.constant 0 : index
    %c0_130 = arith.constant 0 : index
    %142 = vector.load %arg8[%c6_128, %c0_129, %c0_130] : memref<9x128x256xbf16, #tpu.memory_space<vmem>>, vector<1x128x256xbf16>
    %143 = vector.shape_cast %142 : vector<1x128x256xbf16> to vector<128x256xbf16>
    %cst_131 = arith.constant dense<0.000000e+00> : vector<4x256xf32>
    %144 = tpu.matmul %141, %143, %cst_131 {dimension_numbers = #tpu.dot_dimension_numbers<[1], [0], [0], [1], [0, 0, 1, 1], [], []>} : vector<4x128xbf16>, vector<128x256xbf16>, vector<4x256xf32> -> vector<4x256xf32>
    %145 = arith.addf %137, %144 : vector<4x256xf32>
    %c7_132 = arith.constant 7 : index
    %c0_133 = arith.constant 0 : index
    %c0_134 = arith.constant 0 : index
    %146 = vector.load %arg7[%c7_132, %c0_133, %c0_134] : memref<9x4x16xbf16, #tpu.memory_space<vmem>>, vector<1x4x16xbf16>
    %147 = vector.shape_cast %146 : vector<1x4x16xbf16> to vector<4x16xbf16>
    %cst_135 = arith.constant dense<0.000000e+00> : vector<4x128xf32>
    %148 = tpu.matmul %147, %88, %cst_135 {dimension_numbers = #tpu.dot_dimension_numbers<[1], [0], [0], [1], [0, 0, 1, 1], [], []>} : vector<4x16xbf16>, vector<16x128xbf16>, vector<4x128xf32> -> vector<4x128xf32>
    %149 = arith.truncf %148 : vector<4x128xf32> to vector<4x128xbf16>
    %c7_136 = arith.constant 7 : index
    %c0_137 = arith.constant 0 : index
    %c0_138 = arith.constant 0 : index
    %150 = vector.load %arg8[%c7_136, %c0_137, %c0_138] : memref<9x128x256xbf16, #tpu.memory_space<vmem>>, vector<1x128x256xbf16>
    %151 = vector.shape_cast %150 : vector<1x128x256xbf16> to vector<128x256xbf16>
    %cst_139 = arith.constant dense<0.000000e+00> : vector<4x256xf32>
    %152 = tpu.matmul %149, %151, %cst_139 {dimension_numbers = #tpu.dot_dimension_numbers<[1], [0], [0], [1], [0, 0, 1, 1], [], []>} : vector<4x128xbf16>, vector<128x256xbf16>, vector<4x256xf32> -> vector<4x256xf32>
    %153 = arith.addf %145, %152 : vector<4x256xf32>
    %c8_140 = arith.constant 8 : index
    %c0_141 = arith.constant 0 : index
    %c0_142 = arith.constant 0 : index
    %154 = vector.load %arg7[%c8_140, %c0_141, %c0_142] : memref<9x4x16xbf16, #tpu.memory_space<vmem>>, vector<1x4x16xbf16>
    %155 = vector.shape_cast %154 : vector<1x4x16xbf16> to vector<4x16xbf16>
    %cst_143 = arith.constant dense<0.000000e+00> : vector<4x128xf32>
    %156 = tpu.matmul %155, %88, %cst_143 {dimension_numbers = #tpu.dot_dimension_numbers<[1], [0], [0], [1], [0, 0, 1, 1], [], []>} : vector<4x16xbf16>, vector<16x128xbf16>, vector<4x128xf32> -> vector<4x128xf32>
    %157 = arith.truncf %156 : vector<4x128xf32> to vector<4x128xbf16>
    %c8_144 = arith.constant 8 : index
    %c0_145 = arith.constant 0 : index
    %c0_146 = arith.constant 0 : index
    %158 = vector.load %arg8[%c8_144, %c0_145, %c0_146] : memref<9x128x256xbf16, #tpu.memory_space<vmem>>, vector<1x128x256xbf16>
    %159 = vector.shape_cast %158 : vector<1x128x256xbf16> to vector<128x256xbf16>
    %cst_147 = arith.constant dense<0.000000e+00> : vector<4x256xf32>
    %160 = tpu.matmul %157, %159, %cst_147 {dimension_numbers = #tpu.dot_dimension_numbers<[1], [0], [0], [1], [0, 0, 1, 1], [], []>} : vector<4x128xbf16>, vector<128x256xbf16>, vector<4x256xf32> -> vector<4x256xf32>
    %161 = arith.addf %153, %160 : vector<4x256xf32>
    %c0_148 = arith.constant 0 : index
    %c0_149 = arith.constant 0 : index
    %162 = vector.load %arg9[%c0_148, %c0_149] : memref<1x256xf32, #tpu.memory_space<vmem>>, vector<1x256xf32>
    %163 = vector.broadcast %162 : vector<1x256xf32> to vector<4x256xf32>
    %164 = arith.addf %161, %163 : vector<4x256xf32>
    %cst_150 = arith.constant 0.000000e+00 : f32
    %165 = vector.broadcast %cst_150 : f32 to vector<4x256xf32>
    %166 = arith.maximumf %164, %165 : vector<4x256xf32>
    %c0_151 = arith.constant 0 : index
    %c0_152 = arith.constant 0 : index
    %c0_153 = arith.constant 0 : index
    %167 = vector.load %arg10[%c0_151, %c0_152, %c0_153] : memref<1x4x256xf32, #tpu.memory_space<vmem>>, vector<1x4x256xf32>
    %168 = vector.shape_cast %167 : vector<1x4x256xf32> to vector<4x256xf32>
    %169 = vector.shape_cast %166 : vector<4x256xf32> to vector<1x4x256xf32>
    tpu.vector_store %arg10[%c0_151, %c0_152, %c0_153], %169 {strides = array<i32>} : memref<1x4x256xf32, #tpu.memory_space<vmem>>, vector<1x4x256xf32>,
    return
  }
  func.func @transform_0(%arg0: i32) -> (i32, i32, i32) {
    %c0_i32 = arith.constant 0 : i32
    %c0_i32_0 = arith.constant 0 : i32
    %c0_i32_1 = arith.constant 0 : i32
    return %arg0, %c0_i32, %c0_i32_0 : i32, i32, i32
  }
  func.func @transform_1(%arg0: i32) -> (i32, i32) {
    %c0_i32 = arith.constant 0 : i32
    %c0_i32_0 = arith.constant 0 : i32
    %c0_i32_1 = arith.constant 0 : i32
    return %c0_i32, %c0_i32_0 : i32, i32
  }
  func.func @transform_2(%arg0: i32) -> (i32, i32) {
    %c0_i32 = arith.constant 0 : i32
    %c0_i32_0 = arith.constant 0 : i32
    %c0_i32_1 = arith.constant 0 : i32
    return %c0_i32, %c0_i32_0 : i32, i32
  }
  func.func @transform_3(%arg0: i32) -> (i32, i32, i32) {
    %c0_i32 = arith.constant 0 : i32
    %c0_i32_0 = arith.constant 0 : i32
    %c0_i32_1 = arith.constant 0 : i32
    %c0_i32_2 = arith.constant 0 : i32
    return %c0_i32, %c0_i32_0, %c0_i32_1 : i32, i32, i32
  }
  func.func @transform_4(%arg0: i32) -> (i32, i32, i32) {
    %c0_i32 = arith.constant 0 : i32
    %c0_i32_0 = arith.constant 0 : i32
    %c0_i32_1 = arith.constant 0 : i32
    %c0_i32_2 = arith.constant 0 : i32
    return %c0_i32, %c0_i32_0, %c0_i32_1 : i32, i32, i32
  }
  func.func @transform_5(%arg0: i32) -> (i32, i32) {
    %c0_i32 = arith.constant 0 : i32
    %c0_i32_0 = arith.constant 0 : i32
    %c0_i32_1 = arith.constant 0 : i32
    return %c0_i32, %c0_i32_0 : i32, i32
  }
  func.func @transform_6(%arg0: i32) -> (i32, i32, i32) {
    %c0_i32 = arith.constant 0 : i32
    %c0_i32_0 = arith.constant 0 : i32
    %c0_i32_1 = arith.constant 0 : i32
    %c0_i32_2 = arith.constant 0 : i32
    return %c0_i32, %c0_i32_0, %c0_i32_1 : i32, i32, i32
  }
  func.func @transform_7(%arg0: i32) -> (i32, i32, i32) {
    %c0_i32 = arith.constant 0 : i32
    %c0_i32_0 = arith.constant 0 : i32
    %c0_i32_1 = arith.constant 0 : i32
    %c0_i32_2 = arith.constant 0 : i32
    return %c0_i32, %c0_i32_0, %c0_i32_1 : i32, i32, i32
  }
  func.func @transform_8(%arg0: i32) -> (i32, i32) {
    %c0_i32 = arith.constant 0 : i32
    %c0_i32_0 = arith.constant 0 : i32
    %c0_i32_1 = arith.constant 0 : i32
    return %c0_i32, %c0_i32_0 : i32, i32
  }
  func.func @transform_9(%arg0: i32) -> (i32, i32, i32) {
    %c0_i32 = arith.constant 0 : i32
    %c0_i32_0 = arith.constant 0 : i32
    %c0_i32_1 = arith.constant 0 : i32
    return %arg0, %c0_i32, %c0_i32_0 : i32, i32, i32
  }
}

</mosaic_0001>

<llo_original>
// kernel: sp_forward.1
$region0: #{sp_forward.1}
  #allocation0 [shape = 'u32[]', space=smem, size = 0x4, offset = 0x4, fixed_abs, tag = 'smem constant byte address 0x4 - core index']
  #allocation1 [shape = 'u32[144,128]{1,0:T(1,128)}', space=vmem, size = 0x12000, scoped, tag = 'internal scratch']
  %s0 = inlined_call_operand.vmem [shape: bf16[2,64,27], index: 0, kind: input, shape index: {}]
  %s1 = inlined_call_operand.vmem [shape: bf16[27,128], index: 1, kind: input, shape index: {}]
  %s2 = inlined_call_operand.vmem [shape: f32[1,128], index: 2, kind: input, shape index: {}]
  %s3 = inlined_call_operand.vmem [shape: bf16[9,16,64], index: 3, kind: input, shape index: {}]
  %s4 = inlined_call_operand.vmem [shape: bf16[9,128,128], index: 4, kind: input, shape index: {}]
  %s5 = inlined_call_operand.vmem [shape: f32[1,128], index: 5, kind: input, shape index: {}]
  %s6 = inlined_call_operand.vmem [shape: bf16[9,4,16], index: 6, kind: input, shape index: {}]
  %s7 = inlined_call_operand.vmem [shape: bf16[9,128,256], index: 7, kind: input, shape index: {}]
  %s8 = inlined_call_operand.vmem [shape: f32[1,256], index: 8, kind: input, shape index: {}]
  %s9 = inlined_call_operand.vmem [shape: f32[2,4,256], index: 9, kind: output, shape index: {}]
  %s10 = sld [smem:[#allocation0]]
  $region69: #{sp_forward.1} parent=0
    _
  %s12 = ssub.s32 1, %s10
  %s13 = scalar_select 0, %s12, %s10
  loop: start=0, step=1, limit=4
  $region2: #{sp_forward.1} parent=0 // loop_pre_header
    _
  $region3: #{sp_forward.1} parent=0 // loop_header
    %s15 = sphi 0, %s19
    %p16 = scmp.ge.s32.totalorder %s15, 4
    %s25 = sphi 0, %s27
    %s28 = sphi 0, %s25
    %s29 = sphi 0, %s28
    %s45 = sphi 0, %s29
    %s49 = sphi 0, %s49
    %s51 = sphi 0, %s49
    %s52 = sphi 0, %s51
    %s66 = sphi 0, %s52
    %s70 = sphi 0, %s70
    %s72 = sphi 0, %s70
    %s73 = sphi 0, %s72
    %s87 = sphi 0, %s73
    %s91 = sphi 0, %s91
    %s93 = sphi 0, %s91
    %s94 = sphi 0, %s93
    %s108 = sphi 0, %s94
    %s112 = sphi 0, %s112
    %s114 = sphi 0, %s112
    %s115 = sphi 0, %s114
    %s129 = sphi 0, %s115
    %s133 = sphi 0, %s133
    %s135 = sphi 0, %s133
    %s136 = sphi 0, %s135
    %s150 = sphi 0, %s136
    %s154 = sphi 0, %s154
    %s156 = sphi 0, %s154
    %s157 = sphi 0, %s156
    %s171 = sphi 0, %s157
    %s175 = sphi 0, %s175
    %s177 = sphi 0, %s175
    %s178 = sphi 0, %s177
    %s192 = sphi 0, %s178
    %s196 = sphi 0, %s196
    %s198 = sphi 0, %s196
    %s199 = sphi 0, %s198
    %s213 = sphi 0, %s199
    %s219 = sphi 0, %s221
    %s222 = sphi 0, %s219
    %s223 = sphi 0, %s222
    %s239 = sphi 0, %s223
  $region4: #{sp_forward.1} parent=0 // loop_header_branch
    %18 = sbr.rel (%p16) target = $region8
  $region5: #{sp_forward.1} parent=0 // loop_body
    %s20 = ssub.s32 %s15, 1
    %s21 = ssub.s32 %s15, 2
    %s22 = sadd.s32 %s15, 1
    %s23 = ssub.s32 %s15, %s22
    %p24 = scmp.eq.s32.totalorder %s23, 0
    %s26 = sadd.s32 %s25, 1
    %s27 = scalar_select %p24, %s25, %s26
    %p30 = pneg %p24
    %p31 = scmp.eq.s32.totalorder %s15, 1
    %p32 = por %p30, %p31
    %p33 = scmp.ne.s32.totalorder %s25, %s28
    %p34 = scmp.eq.s32.totalorder %s15, 0
    %p35 = por %p33, %p34
    %p36 = scmp.ne.s32.totalorder %s25, %s28
    %p37 = scmp.eq.s32.totalorder %s20, 1
    %p38 = por %p36, %p37
    %p39 = scmp.ne.s32.totalorder %s28, %s29
    %p40 = scmp.eq.s32.totalorder %s20, 0
    %p41 = por %p39, %p40
    %p42 = scmp.ne.s32.totalorder %s28, %s29
    %p43 = scmp.eq.s32.totalorder %s21, 1
    %p44 = por %p42, %p43
    %p46 = scmp.ne.s32.totalorder %s29, %s45
    %p47 = scmp.eq.s32.totalorder %s21, 0
    %p48 = por %p46, %p47
    %s50 = sadd.s32 %s49, 1
    %p53 = scmp.eq.s32.totalorder %s15, 1
    %p54 = scmp.ne.s32.totalorder %s49, %s51
    %p55 = scmp.eq.s32.totalorder %s15, 0
    %p56 = por %p54, %p55
    %p57 = scmp.ne.s32.totalorder %s49, %s51
    %p58 = scmp.eq.s32.totalorder %s20, 1
    %p59 = por %p57, %p58
    %p60 = scmp.ne.s32.totalorder %s51, %s52
    %p61 = scmp.eq.s32.totalorder %s20, 0
    %p62 = por %p60, %p61
    %p63 = scmp.ne.s32.totalorder %s51, %s52
    %p64 = scmp.eq.s32.totalorder %s21, 1
    %p65 = por %p63, %p64
    %p67 = scmp.ne.s32.totalorder %s52, %s66
    %p68 = scmp.eq.s32.totalorder %s21, 0
    %p69 = por %p67, %p68
    %s71 = sadd.s32 %s70, 1
    %p74 = scmp.eq.s32.totalorder %s15, 1
    %p75 = scmp.ne.s32.totalorder %s70, %s72
    %p76 = scmp.eq.s32.totalorder %s15, 0
    %p77 = por %p75, %p76
    %p78 = scmp.ne.s32.totalorder %s70, %s72
    %p79 = scmp.eq.s32.totalorder %s20, 1
    %p80 = por %p78, %p79
    %p81 = scmp.ne.s32.totalorder %s72, %s73
    %p82 = scmp.eq.s32.totalorder %s20, 0
    %p83 = por %p81, %p82
    %p84 = scmp.ne.s32.totalorder %s72, %s73
    %p85 = scmp.eq.s32.totalorder %s21, 1
    %p86 = por %p84, %p85
    %p88 = scmp.ne.s32.totalorder %s73, %s87
    %p89 = scmp.eq.s32.totalorder %s21, 0
    %p90 = por %p88, %p89
    %s92 = sadd.s32 %s91, 1
    %p95 = scmp.eq.s32.totalorder %s15, 1
    %p96 = scmp.ne.s32.totalorder %s91, %s93
    %p97 = scmp.eq.s32.totalorder %s15, 0
    %p98 = por %p96, %p97
    %p99 = scmp.ne.s32.totalorder %s91, %s93
    %p100 = scmp.eq.s32.totalorder %s20, 1
    %p101 = por %p99, %p100
    %p102 = scmp.ne.s32.totalorder %s93, %s94
    %p103 = scmp.eq.s32.totalorder %s20, 0
    %p104 = por %p102, %p103
    %p105 = scmp.ne.s32.totalorder %s93, %s94
    %p106 = scmp.eq.s32.totalorder %s21, 1
    %p107 = por %p105, %p106
    %p109 = scmp.ne.s32.totalorder %s94, %s108
    %p110 = scmp.eq.s32.totalorder %s21, 0
    %p111 = por %p109, %p110
    %s113 = sadd.s32 %s112, 1
    %p116 = scmp.eq.s32.totalorder %s15, 1
    %p117 = scmp.ne.s32.totalorder %s112, %s114
    %p118 = scmp.eq.s32.totalorder %s15, 0
    %p119 = por %p117, %p118
    %p120 = scmp.ne.s32.totalorder %s112, %s114
    %p121 = scmp.eq.s32.totalorder %s20, 1
    %p122 = por %p120, %p121
    %p123 = scmp.ne.s32.totalorder %s114, %s115
    %p124 = scmp.eq.s32.totalorder %s20, 0
    %p125 = por %p123, %p124
    %p126 = scmp.ne.s32.totalorder %s114, %s115
    %p127 = scmp.eq.s32.totalorder %s21, 1
    %p128 = por %p126, %p127
    %p130 = scmp.ne.s32.totalorder %s115, %s129
    %p131 = scmp.eq.s32.totalorder %s21, 0
    %p132 = por %p130, %p131
    %s134 = sadd.s32 %s133, 1
    %p137 = scmp.eq.s32.totalorder %s15, 1
    %p138 = scmp.ne.s32.totalorder %s133, %s135
    %p139 = scmp.eq.s32.totalorder %s15, 0
    %p140 = por %p138, %p139
    %p141 = scmp.ne.s32.totalorder %s133, %s135
    %p142 = scmp.eq.s32.totalorder %s20, 1
    %p143 = por %p141, %p142
    %p144 = scmp.ne.s32.totalorder %s135, %s136
    %p145 = scmp.eq.s32.totalorder %s20, 0
    %p146 = por %p144, %p145
    %p147 = scmp.ne.s32.totalorder %s135, %s136
    %p148 = scmp.eq.s32.totalorder %s21, 1
    %p149 = por %p147, %p148
    %p151 = scmp.ne.s32.totalorder %s136, %s150
    %p152 = scmp.eq.s32.totalorder %s21, 0
    %p153 = por %p151, %p152
    %s155 = sadd.s32 %s154, 1
    %p158 = scmp.eq.s32.totalorder %s15, 1
    %p159 = scmp.ne.s32.totalorder %s154, %s156
    %p160 = scmp.eq.s32.totalorder %s15, 0
    %p161 = por %p159, %p160
    %p162 = scmp.ne.s32.totalorder %s154, %s156
    %p163 = scmp.eq.s32.totalorder %s20, 1
    %p164 = por %p162, %p163
    %p165 = scmp.ne.s32.totalorder %s156, %s157
    %p166 = scmp.eq.s32.totalorder %s20, 0
    %p167 = por %p165, %p166
    %p168 = scmp.ne.s32.totalorder %s156, %s157
    %p169 = scmp.eq.s32.totalorder %s21, 1
    %p170 = por %p168, %p169
    %p172 = scmp.ne.s32.totalorder %s157, %s171
    %p173 = scmp.eq.s32.totalorder %s21, 0
    %p174 = por %p172, %p173
    %s176 = sadd.s32 %s175, 1
    %p179 = scmp.eq.s32.totalorder %s15, 1
    %p180 = scmp.ne.s32.totalorder %s175, %s177
    %p181 = scmp.eq.s32.totalorder %s15, 0
    %p182 = por %p180, %p181
    %p183 = scmp.ne.s32.totalorder %s175, %s177
    %p184 = scmp.eq.s32.totalorder %s20, 1
    %p185 = por %p183, %p184
    %p186 = scmp.ne.s32.totalorder %s177, %s178
    %p187 = scmp.eq.s32.totalorder %s20, 0
    %p188 = por %p186, %p187
    %p189 = scmp.ne.s32.totalorder %s177, %s178
    %p190 = scmp.eq.s32.totalorder %s21, 1
    %p191 = por %p189, %p190
    %p193 = scmp.ne.s32.totalorder %s178, %s192
    %p194 = scmp.eq.s32.totalorder %s21, 0
    %p195 = por %p193, %p194
    %s197 = sadd.s32 %s196, 1
    %p200 = scmp.eq.s32.totalorder %s15, 1
    %p201 = scmp.ne.s32.totalorder %s196, %s198
    %p202 = scmp.eq.s32.totalorder %s15, 0
    %p203 = por %p201, %p202
    %p204 = scmp.ne.s32.totalorder %s196, %s198
    %p205 = scmp.eq.s32.totalorder %s20, 1
    %p206 = por %p204, %p205
    %p207 = scmp.ne.s32.totalorder %s198, %s199
    %p208 = scmp.eq.s32.totalorder %s20, 0
    %p209 = por %p207, %p208
    %p210 = scmp.ne.s32.totalorder %s198, %s199
    %p211 = scmp.eq.s32.totalorder %s21, 1
    %p212 = por %p210, %p211
    %p214 = scmp.ne.s32.totalorder %s199, %s213
    %p215 = scmp.eq.s32.totalorder %s21, 0
    %p216 = por %p214, %p215
    %s217 = ssub.s32 %s15, %s22
    %p218 = scmp.eq.s32.totalorder %s217, 0
    %s220 = sadd.s32 %s219, 1
    %s221 = scalar_select %p218, %s219, %s220
    %p224 = pneg %p218
    %p225 = scmp.eq.s32.totalorder %s15, 1
    %p226 = por %p224, %p225
    %p227 = scmp.ne.s32.totalorder %s219, %s222
    %p228 = scmp.eq.s32.totalorder %s15, 0
    %p229 = por %p227, %p228
    %p230 = scmp.ne.s32.totalorder %s219, %s222
    %p231 = scmp.eq.s32.totalorder %s20, 1
    %p232 = por %p230, %p231
    %p233 = scmp.ne.s32.totalorder %s222, %s223
    %p234 = scmp.eq.s32.totalorder %s20, 0
    %p235 = por %p233, %p234
    %p236 = scmp.ne.s32.totalorder %s222, %s223
    %p237 = scmp.eq.s32.totalorder %s21, 1
    %p238 = por %p236, %p237
    %p240 = scmp.ne.s32.totalorder %s223, %s239
    %p241 = scmp.eq.s32.totalorder %s21, 0
    %p242 = por %p240, %p241
    %p243 = scmp.le.s32.totalorder 1, %s15
    %p244 = scmp.lt.s32.totalorder %s15, 3
    %p245 = pnand %p243, %p244
    %p246 = pneg %p245
    // Predicated region
    $region9: #{sp_forward.1} parent=5 // pred_check
      _
    $region10: #{sp_forward.1} parent=5 // pred_check_branch
      %248 = sbr.rel (%p245) target = $region12
    $region11: #{sp_forward.1} parent=5 // pred_region
      %s249 = ssub.s32 %s15, 1
      // Predicated region
      $region13: #{sp_forward.1} parent=11 // pred_check
        %p250 = pneg %p62
      $region14: #{sp_forward.1} parent=11 // pred_check_branch
        %252 = sbr.rel (%p250) target = $region16
      $region15: #{sp_forward.1} parent=11 // pred_region
        _
      $region16: #{sp_forward.1} parent=11 // pred_fallthru
        _
      // Predicated region
      $region17: #{sp_forward.1} parent=11 // pred_check
        %p253 = pneg %p83
      $region18: #{sp_forward.1} parent=11 // pred_check_branch
        %255 = sbr.rel (%p253) target = $region20
      $region19: #{sp_forward.1} parent=11 // pred_region
        _
      $region20: #{sp_forward.1} parent=11 // pred_fallthru
        _
      // Predicated region
      $region21: #{sp_forward.1} parent=11 // pred_check
        %p256 = pneg %p104
      $region22: #{sp_forward.1} parent=11 // pred_check_branch
        %258 = sbr.rel (%p256) target = $region24
      $region23: #{sp_forward.1} parent=11 // pred_region
        _
      $region24: #{sp_forward.1} parent=11 // pred_fallthru
        _
      // Predicated region
      $region25: #{sp_forward.1} parent=11 // pred_check
        %p259 = pneg %p125
      $region26: #{sp_forward.1} parent=11 // pred_check_branch
        %261 = sbr.rel (%p259) target = $region28
      $region27: #{sp_forward.1} parent=11 // pred_region
        _
      $region28: #{sp_forward.1} parent=11 // pred_fallthru
        _
      // Predicated region
      $region29: #{sp_forward.1} parent=11 // pred_check
        %p262 = pneg %p146
      $region30: #{sp_forward.1} parent=11 // pred_check_branch
        %264 = sbr.rel (%p262) target = $region32
      $region31: #{sp_forward.1} parent=11 // pred_region
        _
      $region32: #{sp_forward.1} parent=11 // pred_fallthru
        _
      // Predicated region
      $region33: #{sp_forward.1} parent=11 // pred_check
        %p265 = pneg %p167
      $region34: #{sp_forward.1} parent=11 // pred_check_branch
        %267 = sbr.rel (%p265) target = $region36
      $region35: #{sp_forward.1} parent=11 // pred_region
        _
      $region36: #{sp_forward.1} parent=11 // pred_fallthru
        _
      // Predicated region
      $region37: #{sp_forward.1} parent=11 // pred_check
        %p268 = pneg %p188
      $region38: #{sp_forward.1} parent=11 // pred_check_branch
        %270 = sbr.rel (%p268) target = $region40
      $region39: #{sp_forward.1} parent=11 // pred_region
        _
      $region40: #{sp_forward.1} parent=11 // pred_fallthru
        _
      // Predicated region
      $region41: #{sp_forward.1} parent=11 // pred_check
        %p271 = pneg %p209
      $region42: #{sp_forward.1} parent=11 // pred_check_branch
        %273 = sbr.rel (%p271) target = $region44
      $region43: #{sp_forward.1} parent=11 // pred_region
        _
      $region44: #{sp_forward.1} parent=11 // pred_fallthru
        _
    $region12: #{sp_forward.1} parent=5 // pred_fallthru
      _
    %p274 = scmp.lt.s32.totalorder %s15, 2
    // Predicated region
    $region45: #{sp_forward.1} parent=5 // pred_check
      %p275 = pneg %p274
    $region46: #{sp_forward.1} parent=5 // pred_check_branch
      %277 = sbr.rel (%p275) target = $region48
    $region47: #{sp_forward.1} parent=5 // pred_region
      // Predicated region
      $region49: #{sp_forward.1} parent=47 // pred_check
        %p278 = pneg %p35
      $region50: #{sp_forward.1} parent=47 // pred_check_branch
        %280 = sbr.rel (%p278) target = $region52
      $region51: #{sp_forward.1} parent=47 // pred_region
        %p281 = scmp.lt.s32.totalorder %s15, 1
        %s282 = scalar_select %p281, %s15, 1
        %s283 = smul.addr %s282, 8
        %s284 = smul.addr %s283, 4
        %s285 = scalar_lea.vmem %s0, %s284
      $region52: #{sp_forward.1} parent=47 // pred_fallthru
        _
    $region48: #{sp_forward.1} parent=5 // pred_fallthru
      _
    %p286 = scmp.le.s32.totalorder 1, %s15
    %p287 = scmp.lt.s32.totalorder %s15, 3
    %p288 = pnand %p286, %p287
    %p289 = pneg %p288
    // Predicated region
    $region53: #{sp_forward.1} parent=5 // pred_check
      _
    $region54: #{sp_forward.1} parent=5 // pred_check_branch
      %291 = sbr.rel (%p288) target = $region56
    $region55: #{sp_forward.1} parent=5 // pred_region
      %s292 = ssub.s32 %s15, 1
      %p293 = scmp.lt.s32.totalorder %s20, 1
      %s294 = scalar_select %p293, %s20, 1
      %s295 = smul.addr %s294, 8
      %s296 = smul.addr %s295, 4
      %s297 = scalar_lea.vmem %s0, %s296
      %p298 = pneg %p41
      %p299 = pneg %p38
      %p300 = pneg %p62
      %p301 = pneg %p59
      %p302 = pneg %p83
      %p303 = pneg %p80
      %p304 = pneg %p104
      %p305 = pneg %p101
      %p306 = pneg %p125
      %p307 = pneg %p122
      %p308 = pneg %p146
      %p309 = pneg %p143
      %p310 = pneg %p167
      %p311 = pneg %p164
      %p312 = pneg %p188
      %p313 = pneg %p185
      %p314 = pneg %p209
      %p315 = pneg %p206
      %p316 = pneg %p235
      %p317 = pneg %p232
      %p318 = scmp.lt.s32.totalorder %s20, 1
      %s319 = scalar_select %p318, %s20, 1
      %s320 = smul.addr %s319, 2
      %s321 = smul.addr %s320, 4
      %s322 = scalar_lea.vmem %s9, %s321
      %p323 = scmp.lt.s32.totalorder %s20, 1
      %s324 = scalar_select %p323, %s20, 1
      %s325 = smul.addr %s324, 8
      %s326 = smul.addr %s325, 4
      %s327 = scalar_lea.vmem %s0, %s326
      %p328 = scmp.lt.s32.totalorder %s20, 1
      %s329 = scalar_select %p328, %s20, 1
      %s330 = smul.addr %s329, 2
      %s331 = smul.addr %s330, 4
      %s332 = scalar_lea.vmem %s9, %s331
      %v334 = vld [vmem:[%s327] sm:$0xf]
      %v335 = vld [vmem:[%s327 + $0x4] sm:$0xf]
      %v336 = vld [vmem:[%s327 + $0x8] sm:$0xf]
      %v337 = vld [vmem:[%s327 + $0xc] sm:$0xf]
      %v338 = vld [vmem:[%s327 + $0x10] sm:$0xf]
      %v339 = vld [vmem:[%s327 + $0x14] sm:$0xf]
      %v340 = vld [vmem:[%s327 + $0x18] sm:$0xf]
      %v341 = vld [vmem:[%s327 + $0x1c] sm:$0xf]
      %v342 = vld [vmem:[%s1] sm:$0xf]
      %v343 = vld [vmem:[%s1 + $0x4] sm:$0xf]
      %v344 = vld [vmem:[%s1 + $0x8] sm:$0xf]
      %v345 = vld [vmem:[%s1 + $0xc] sm:$0x3]
      %v346 = vld [vmem:[%s2] sm:$0x1]
      %v348 = vlaneseq
      %v349 = vshrl.u32 %v348, 7
      %v350 = vsub.s32 0, %v349
      %v351 = vrot.slane %v346, %v350
      %v361 = vunpack.c.l.b16 %v334
      %v362 = vunpack.c.l.b16 %v335
      %v363 = vunpack.c.l.b16 %v336
      %v364 = vunpack.c.l.b16 %v337
      %v365 = vunpack.c.l.b16 %v338
      %v366 = vunpack.c.l.b16 %v339
      %v367 = vunpack.c.l.b16 %v340
      %v368 = vunpack.c.l.b16 %v341
      %v369 = vpack.c.b16 %v362, %v361
      %v370 = vpack.c.b16 %v364, %v363
      %v371 = vpack.c.b16 %v366, %v365
      %v372 = vpack.c.b16 %v368, %v367
      %v377 = vunpack.c.l.b16 %v342
      %v378 = vunpack.c.l.b16 %v343
      %v379 = vunpack.c.l.b16 %v344
      %v380 = vunpack.c.l.b16 %v345
      %v381 = vpack.c.b16 %v378, %v377
      %v382 = vpack.c.b16 %v380, %v379
      %vm384 = vcmask 220160
      %v386 = vsel %vm384, %v369, 0
      %v389 = vsel %vm384, %v370, 0
      %v392 = vsel %vm384, %v371, 0
      %v395 = vsel %vm384, %v372, 0
      %vm397 = vcmask 1044480
      %vm398 = vcmask 1045504
      %v399 = vsel %vm397, 4294967295, 65535
      %v400 = vsel %vm398, %v399, 0
      %v402 = vand.u32 %v382, %v400
      %404 = vmatprep.subr.bf16.mxu0 0
      %405 = vmatpush1.bf16.msra.mxu0 %v381
      %406 = vmatprep.subr.bf16.mxu0 0
      %407 = vmatpush1.bf16.msra.mxu0 %v402
      %408 = vmatprep.subr.bf16.mxu0 0
      %409 = vmatpush1.bf16.msra.mxu0 0
      %410 = vmatprep.subr.bf16.mxu0 0
      %411 = vmatpush1.bf16.msra.mxu0 0
      %412 = vmatprep.subr.bf16.mxu0 0
      %413 = vmatpush1.bf16.msra.mxu0 0
      %414 = vmatprep.subr.bf16.mxu0 0
      %415 = vmatpush1.bf16.msra.mxu0 0
      %416 = vmatprep.subr.bf16.mxu0 0
      %417 = vmatpush1.bf16.msra.mxu0 0
      %418 = vmatprep.subr.bf16.mxu0 0
      %419 = vmatpush1.bf16.msra.mxu0 0
      %420 = vmatprep.subr.bf16.mxu0 0
      %421 = vmatpush1.bf16.msra.mxu0 0
      %422 = vmatprep.subr.bf16.mxu0 0
      %423 = vmatpush1.bf16.msra.mxu0 0
      %424 = vmatprep.subr.bf16.mxu0 0
      %425 = vmatpush1.bf16.msra.mxu0 0
      %426 = vmatprep.subr.bf16.mxu0 0
      %427 = vmatpush1.bf16.msra.mxu0 0
      %428 = vmatprep.subr.bf16.mxu0 0
      %429 = vmatpush1.bf16.msra.mxu0 0
      %430 = vmatprep.subr.bf16.mxu0 0
      %431 = vmatpush1.bf16.msra.mxu0 0
      %432 = vmatprep.subr.bf16.mxu0 0
      %433 = vmatpush1.bf16.msra.mxu0 0
      %434 = vmatprep.subr.bf16.mxu0 0
      %435 = vmatpush1.bf16.msra.mxu0 0
      %436 = vmatprep.mubr.bf16.mxu0 0
      %437 = vmatmul.mubr.bf16.gmra.mrb[0].mxu0 %v386
      %v438 = vpop.f32.mrb[0].mxu0
      %v439 = vadd.f32 %v351, %v438
      %v440 = vpop.f32.mrb[0].mxu0
      %v441 = vpop.f32.mrb[0].mxu0
      %v442 = vadd.f32 %v351, %v441
      %v443 = vpop.f32.mrb[0].mxu0
      %444 = vmatprep.mubr.bf16.mxu0 0
      %445 = vmatmul.mubr.bf16.gmra.mrb[0].mxu0 %v389
      %v446 = vpop.f32.mrb[0].mxu0
      %v447 = vadd.f32 %v351, %v446
      %v448 = vpop.f32.mrb[0].mxu0
      %v449 = vpop.f32.mrb[0].mxu0
      %v450 = vadd.f32 %v351, %v449
      %v451 = vpop.f32.mrb[0].mxu0
      %452 = vmatprep.mubr.bf16.mxu0 0
      %453 = vmatmul.mubr.bf16.gmra.mrb[0].mxu0 %v392
      %v454 = vpop.f32.mrb[0].mxu0
      %v455 = vadd.f32 %v351, %v454
      %v456 = vpop.f32.mrb[0].mxu0
      %v457 = vpop.f32.mrb[0].mxu0
      %v458 = vadd.f32 %v351, %v457
      %v459 = vpop.f32.mrb[0].mxu0
      %460 = vmatprep.mubr.bf16.mxu0 0
      %461 = vmatmul.mubr.bf16.gmra.mrb[0].mxu0 %v395
      %v462 = vpop.f32.mrb[0].mxu0
      %v463 = vadd.f32 %v351, %v462
      %v464 = vpop.f32.mrb[0].mxu0
      %v465 = vpop.f32.mrb[0].mxu0
      %v466 = vadd.f32 %v351, %v465
      %v467 = vpop.f32.mrb[0].mxu0
      %468 = vdwg.mxu0
      %v469 = vmax.f32 %v439, 0.0
      %v470 = vmax.f32 %v442, 0.0
      %v471 = vmax.f32 %v447, 0.0
      %v472 = vmax.f32 %v450, 0.0
      %v473 = vmax.f32 %v455, 0.0
      %v474 = vmax.f32 %v458, 0.0
      %v475 = vmax.f32 %v463, 0.0
      %v476 = vmax.f32 %v466, 0.0
      %v477 = vpack.c.bf16 %v470, %v469
      %v478 = vpack.c.bf16 %v472, %v471
      %v479 = vpack.c.bf16 %v474, %v473
      %v480 = vpack.c.bf16 %v476, %v475
      %v481 = vld [vmem:[%s3] sm:$0xf]
      %v482 = vld [vmem:[%s3 + $0x4] sm:$0xf]
      %v485 = vunpack.c.l.b16 %v481
      %v486 = vunpack.c.l.b16 %v482
      %v487 = vpack.c.b16 %v486, %v485
      %vm488 = vcmask 523264
      %v490 = vsel %vm488, %v487, 0
      %492 = vmatprep.subr.bf16.mxu0 0
      %493 = vmatpush1.bf16.msra.mxu0 %v477
      %494 = vmatprep.subr.bf16.mxu0 0
      %495 = vmatpush1.bf16.msra.mxu0 %v478
      %496 = vmatprep.subr.bf16.mxu0 0
      %497 = vmatpush1.bf16.msra.mxu0 %v479
      %498 = vmatprep.subr.bf16.mxu0 0
      %499 = vmatpush1.bf16.msra.mxu0 %v480
      %500 = vmatprep.subr.bf16.mxu0 0
      %501 = vmatpush1.bf16.msra.mxu0 0
      %502 = vmatprep.subr.bf16.mxu0 0
      %503 = vmatpush1.bf16.msra.mxu0 0
      %504 = vmatprep.subr.bf16.mxu0 0
      %505 = vmatpush1.bf16.msra.mxu0 0
      %506 = vmatprep.subr.bf16.mxu0 0
      %507 = vmatpush1.bf16.msra.mxu0 0
      %508 = vmatprep.subr.bf16.mxu0 0
      %509 = vmatpush1.bf16.msra.mxu0 0
      %510 = vmatprep.subr.bf16.mxu0 0
      %511 = vmatpush1.bf16.msra.mxu0 0
      %512 = vmatprep.subr.bf16.mxu0 0
      %513 = vmatpush1.bf16.msra.mxu0 0
      %514 = vmatprep.subr.bf16.mxu0 0
      %515 = vmatpush1.bf16.msra.mxu0 0
      %516 = vmatprep.subr.bf16.mxu0 0
      %517 = vmatpush1.bf16.msra.mxu0 0
      %518 = vmatprep.subr.bf16.mxu0 0
      %519 = vmatpush1.bf16.msra.mxu0 0
      %520 = vmatprep.subr.bf16.mxu0 0
      %521 = vmatpush1.bf16.msra.mxu0 0
      %522 = vmatprep.subr.bf16.mxu0 0
      %523 = vmatpush1.bf16.msra.mxu0 0
      %524 = vmatprep.mubr.bf16.mxu0 0
      %525 = vmatmul.mubr.bf16.gmra.mrb[0].mxu0 %v490
      %v526 = vpop.f32.mrb[0].mxu0
      %v527 = vadd.f32 0.0, %v526
      %v528 = vpop.f32.mrb[0].mxu0
      %v529 = vpop.f32.mrb[0].mxu0
      %v530 = vadd.f32 0.0, %v529
      %v531 = vpop.f32.mrb[0].mxu0
      %532 = vdwg.mxu0
      %v533 = vpack.c.bf16 %v530, %v527
      %v534 = vld [vmem:[%s4] sm:$0xf]
      %v535 = vld [vmem:[%s4 + $0x4] sm:$0xf]
      %v536 = vld [vmem:[%s4 + $0x8] sm:$0xf]
      %v537 = vld [vmem:[%s4 + $0xc] sm:$0xf]
      %v538 = vld [vmem:[%s4 + $0x10] sm:$0xf]
      %v539 = vld [vmem:[%s4 + $0x14] sm:$0xf]
      %v540 = vld [vmem:[%s4 + $0x18] sm:$0xf]
      %v541 = vld [vmem:[%s4 + $0x1c] sm:$0xf]
      %v542 = vld [vmem:[%s4 + $0x20] sm:$0xf]
      %v543 = vld [vmem:[%s4 + $0x24] sm:$0xf]
      %v544 = vld [vmem:[%s4 + $0x28] sm:$0xf]
      %v545 = vld [vmem:[%s4 + $0x2c] sm:$0xf]
      %v546 = vld [vmem:[%s4 + $0x30] sm:$0xf]
      %v547 = vld [vmem:[%s4 + $0x34] sm:$0xf]
      %v548 = vld [vmem:[%s4 + $0x38] sm:$0xf]
      %v549 = vld [vmem:[%s4 + $0x3c] sm:$0xf]
      %s550 = scalar_lea.vmem %s3, 8
      %v551 = vld [vmem:[%s550] sm:$0xf]
      %v552 = vld [vmem:[%s550 + $0x4] sm:$0xf]
      %v555 = vunpack.c.l.b16 %v551
      %v556 = vunpack.c.l.b16 %v552
      %v557 = vpack.c.b16 %v556, %v555
      %v559 = vsel %vm488, %v557, 0
      %561 = vmatprep.subr.bf16.mxu0 0
      %562 = vmatpush1.bf16.msra.mxu0 %v477
      %563 = vmatprep.subr.bf16.mxu0 0
      %564 = vmatpush1.bf16.msra.mxu0 %v478
      %565 = vmatprep.subr.bf16.mxu0 0
      %566 = vmatpush1.bf16.msra.mxu0 %v479
      %567 = vmatprep.subr.bf16.mxu0 0
      %568 = vmatpush1.bf16.msra.mxu0 %v480
      %569 = vmatprep.subr.bf16.mxu0 0
      %570 = vmatpush1.bf16.msra.mxu0 0
      %571 = vmatprep.subr.bf16.mxu0 0
      %572 = vmatpush1.bf16.msra.mxu0 0
      %573 = vmatprep.subr.bf16.mxu0 0
      %574 = vmatpush1.bf16.msra.mxu0 0
      %575 = vmatprep.subr.bf16.mxu0 0
      %576 = vmatpush1.bf16.msra.mxu0 0
      %577 = vmatprep.subr.bf16.mxu0 0
      %578 = vmatpush1.bf16.msra.mxu0 0
      %579 = vmatprep.subr.bf16.mxu0 0
      %580 = vmatpush1.bf16.msra.mxu0 0
      %581 = vmatprep.subr.bf16.mxu0 0
      %582 = vmatpush1.bf16.msra.mxu0 0
      %583 = vmatprep.subr.bf16.mxu0 0
      %584 = vmatpush1.bf16.msra.mxu0 0
      %585 = vmatprep.subr.bf16.mxu0 0
      %586 = vmatpush1.bf16.msra.mxu0 0
      %587 = vmatprep.subr.bf16.mxu0 0
      %588 = vmatpush1.bf16.msra.mxu0 0
      %589 = vmatprep.subr.bf16.mxu0 0
      %590 = vmatpush1.bf16.msra.mxu0 0
      %591 = vmatprep.subr.bf16.mxu0 0
      %592 = vmatpush1.bf16.msra.mxu0 0
      %593 = vmatprep.mubr.bf16.mxu0 0
      %594 = vmatmul.mubr.bf16.gmra.mrb[0].mxu0 %v559
      %v595 = vpop.f32.mrb[0].mxu0
      %v596 = vadd.f32 0.0, %v595
      %v597 = vpop.f32.mrb[0].mxu0
      %v598 = vpop.f32.mrb[0].mxu0
      %v599 = vadd.f32 0.0, %v598
      %v600 = vpop.f32.mrb[0].mxu0
      %601 = vdwg.mxu0
      %v602 = vpack.c.bf16 %v599, %v596
      %s603 = scalar_lea.vmem %s4, 64
      %v604 = vld [vmem:[%s603] sm:$0xf]
      %v605 = vld [vmem:[%s603 + $0x4] sm:$0xf]
      %v606 = vld [vmem:[%s603 + $0x8] sm:$0xf]
      %v607 = vld [vmem:[%s603 + $0xc] sm:$0xf]
      %v608 = vld [vmem:[%s603 + $0x10] sm:$0xf]
      %v609 = vld [vmem:[%s603 + $0x14] sm:$0xf]
      %v610 = vld [vmem:[%s603 + $0x18] sm:$0xf]
      %v611 = vld [vmem:[%s603 + $0x1c] sm:$0xf]
      %v612 = vld [vmem:[%s603 + $0x20] sm:$0xf]
      %v613 = vld [vmem:[%s603 + $0x24] sm:$0xf]
      %v614 = vld [vmem:[%s603 + $0x28] sm:$0xf]
      %v615 = vld [vmem:[%s603 + $0x2c] sm:$0xf]
      %v616 = vld [vmem:[%s603 + $0x30] sm:$0xf]
      %v617 = vld [vmem:[%s603 + $0x34] sm:$0xf]
      %v618 = vld [vmem:[%s603 + $0x38] sm:$0xf]
      %v619 = vld [vmem:[%s603 + $0x3c] sm:$0xf]
      %v636 = vunpack.c.l.b16 %v604
      %v637 = vunpack.c.l.b16 %v605
      %v638 = vunpack.c.l.b16 %v606
      %v639 = vunpack.c.l.b16 %v607
      %v640 = vunpack.c.l.b16 %v608
      %v641 = vunpack.c.l.b16 %v609
      %v642 = vunpack.c.l.b16 %v610
      %v643 = vunpack.c.l.b16 %v611
      %v644 = vunpack.c.l.b16 %v612
      %v645 = vunpack.c.l.b16 %v613
      %v646 = vunpack.c.l.b16 %v614
      %v647 = vunpack.c.l.b16 %v615
      %v648 = vunpack.c.l.b16 %v616
      %v649 = vunpack.c.l.b16 %v617
      %v650 = vunpack.c.l.b16 %v618
      %v651 = vunpack.c.l.b16 %v619
      %v652 = vpack.c.b16 %v637, %v636
      %v653 = vpack.c.b16 %v639, %v638
      %v654 = vpack.c.b16 %v641, %v640
      %v655 = vpack.c.b16 %v643, %v642
      %v656 = vpack.c.b16 %v645, %v644
      %v657 = vpack.c.b16 %v647, %v646
      %v658 = vpack.c.b16 %v649, %v648
      %v659 = vpack.c.b16 %v651, %v650
      %668 = vmatprep.subr.bf16.mxu0 0
      %669 = vmatpush1.bf16.msra.mxu0 %v652
      %670 = vmatprep.subr.bf16.mxu0 0
      %671 = vmatpush1.bf16.msra.mxu0 %v653
      %672 = vmatprep.subr.bf16.mxu0 0
      %673 = vmatpush1.bf16.msra.mxu0 %v654
      %674 = vmatprep.subr.bf16.mxu0 0
      %675 = vmatpush1.bf16.msra.mxu0 %v655
      %676 = vmatprep.subr.bf16.mxu0 0
      %677 = vmatpush1.bf16.msra.mxu0 %v656
      %678 = vmatprep.subr.bf16.mxu0 0
      %679 = vmatpush1.bf16.msra.mxu0 %v657
      %680 = vmatprep.subr.bf16.mxu0 0
      %681 = vmatpush1.bf16.msra.mxu0 %v658
      %682 = vmatprep.subr.bf16.mxu0 0
      %683 = vmatpush1.bf16.msra.mxu0 %v659
      %684 = vmatprep.subr.bf16.mxu0 0
      %685 = vmatpush1.bf16.msra.mxu0 0
      %686 = vmatprep.subr.bf16.mxu0 0
      %687 = vmatpush1.bf16.msra.mxu0 0
      %688 = vmatprep.subr.bf16.mxu0 0
      %689 = vmatpush1.bf16.msra.mxu0 0
      %690 = vmatprep.subr.bf16.mxu0 0
      %691 = vmatpush1.bf16.msra.mxu0 0
      %692 = vmatprep.subr.bf16.mxu0 0
      %693 = vmatpush1.bf16.msra.mxu0 0
      %694 = vmatprep.subr.bf16.mxu0 0
      %695 = vmatpush1.bf16.msra.mxu0 0
      %696 = vmatprep.subr.bf16.mxu0 0
      %697 = vmatpush1.bf16.msra.mxu0 0
      %698 = vmatprep.subr.bf16.mxu0 0
      %699 = vmatpush1.bf16.msra.mxu0 0
      %700 = vmatprep.mubr.bf16.mxu0 0
      %701 = vmatmul.mubr.bf16.gmra.mrb[0].mxu0 %v602
      %v702 = vpop.f32.mrb[0].mxu0
      %v703 = vadd.f32 0.0, %v702
      %v704 = vpop.f32.mrb[0].mxu0
      %v705 = vpop.f32.mrb[0].mxu0
      %v706 = vadd.f32 0.0, %v705
      %v707 = vpop.f32.mrb[0].mxu0
      %708 = vdwg.mxu0
      %v725 = vunpack.c.l.b16 %v534
      %v726 = vunpack.c.l.b16 %v535
      %v727 = vunpack.c.l.b16 %v536
      %v728 = vunpack.c.l.b16 %v537
      %v729 = vunpack.c.l.b16 %v538
      %v730 = vunpack.c.l.b16 %v539
      %v731 = vunpack.c.l.b16 %v540
      %v732 = vunpack.c.l.b16 %v541
      %v733 = vunpack.c.l.b16 %v542
      %v734 = vunpack.c.l.b16 %v543
      %v735 = vunpack.c.l.b16 %v544
      %v736 = vunpack.c.l.b16 %v545
      %v737 = vunpack.c.l.b16 %v546
      %v738 = vunpack.c.l.b16 %v547
      %v739 = vunpack.c.l.b16 %v548
      %v740 = vunpack.c.l.b16 %v549
      %v741 = vpack.c.b16 %v726, %v725
      %v742 = vpack.c.b16 %v728, %v727
      %v743 = vpack.c.b16 %v730, %v729
      %v744 = vpack.c.b16 %v732, %v731
      %v745 = vpack.c.b16 %v734, %v733
      %v746 = vpack.c.b16 %v736, %v735
      %v747 = vpack.c.b16 %v738, %v737
      %v748 = vpack.c.b16 %v740, %v739
      %757 = vmatprep.subr.bf16.mxu0 0
      %758 = vmatpush1.bf16.msra.mxu0 %v741
      %759 = vmatprep.subr.bf16.mxu0 0
      %760 = vmatpush1.bf16.msra.mxu0 %v742
      %761 = vmatprep.subr.bf16.mxu0 0
      %762 = vmatpush1.bf16.msra.mxu0 %v743
      %763 = vmatprep.subr.bf16.mxu0 0
      %764 = vmatpush1.bf16.msra.mxu0 %v744
      %765 = vmatprep.subr.bf16.mxu0 0
      %766 = vmatpush1.bf16.msra.mxu0 %v745
      %767 = vmatprep.subr.bf16.mxu0 0
      %768 = vmatpush1.bf16.msra.mxu0 %v746
      %769 = vmatprep.subr.bf16.mxu0 0
      %770 = vmatpush1.bf16.msra.mxu0 %v747
      %771 = vmatprep.subr.bf16.mxu0 0
      %772 = vmatpush1.bf16.msra.mxu0 %v748
      %773 = vmatprep.subr.bf16.mxu0 0
      %774 = vmatpush1.bf16.msra.mxu0 0
      %775 = vmatprep.subr.bf16.mxu0 0
      %776 = vmatpush1.bf16.msra.mxu0 0
      %777 = vmatprep.subr.bf16.mxu0 0
      %778 = vmatpush1.bf16.msra.mxu0 0
      %779 = vmatprep.subr.bf16.mxu0 0
      %780 = vmatpush1.bf16.msra.mxu0 0
      %781 = vmatprep.subr.bf16.mxu0 0
      %782 = vmatpush1.bf16.msra.mxu0 0
      %783 = vmatprep.subr.bf16.mxu0 0
      %784 = vmatpush1.bf16.msra.mxu0 0
      %785 = vmatprep.subr.bf16.mxu0 0
      %786 = vmatpush1.bf16.msra.mxu0 0
      %787 = vmatprep.subr.bf16.mxu0 0
      %788 = vmatpush1.bf16.msra.mxu0 0
      %789 = vmatprep.mubr.bf16.mxu0 0
      %790 = vmatmul.mubr.bf16.gmra.mrb[0].mxu0 %v533
      %v791 = vpop.f32.mrb[0].mxu0
      %v792 = vadd.f32 %v703, %v791
      %v793 = vpop.f32.mrb[0].mxu0
      %v794 = vpop.f32.mrb[0].mxu0
      %v795 = vadd.f32 %v706, %v794
      %v796 = vpop.f32.mrb[0].mxu0
      %797 = vdwg.mxu0
      %s798 = scalar_lea.vmem %s3, 16
      %v799 = vld [vmem:[%s798] sm:$0xf]
      %v800 = vld [vmem:[%s798 + $0x4] sm:$0xf]
      %v803 = vunpack.c.l.b16 %v799
      %v804 = vunpack.c.l.b16 %v800
      %v805 = vpack.c.b16 %v804, %v803
      %v807 = vsel %vm488, %v805, 0
      %809 = vmatprep.subr.bf16.mxu0 0
      %810 = vmatpush1.bf16.msra.mxu0 %v477
      %811 = vmatprep.subr.bf16.mxu0 0
      %812 = vmatpush1.bf16.msra.mxu0 %v478
      %813 = vmatprep.subr.bf16.mxu0 0
      %814 = vmatpush1.bf16.msra.mxu0 %v479
      %815 = vmatprep.subr.bf16.mxu0 0
      %816 = vmatpush1.bf16.msra.mxu0 %v480
      %817 = vmatprep.subr.bf16.mxu0 0
      %818 = vmatpush1.bf16.msra.mxu0 0
      %819 = vmatprep.subr.bf16.mxu0 0
      %820 = vmatpush1.bf16.msra.mxu0 0
      %821 = vmatprep.subr.bf16.mxu0 0
      %822 = vmatpush1.bf16.msra.mxu0 0
      %823 = vmatprep.subr.bf16.mxu0 0
      %824 = vmatpush1.bf16.msra.mxu0 0
      %825 = vmatprep.subr.bf16.mxu0 0
      %826 = vmatpush1.bf16.msra.mxu0 0
      %827 = vmatprep.subr.bf16.mxu0 0
      %828 = vmatpush1.bf16.msra.mxu0 0
      %829 = vmatprep.subr.bf16.mxu0 0
      %830 = vmatpush1.bf16.msra.mxu0 0
      %831 = vmatprep.subr.bf16.mxu0 0
      %832 = vmatpush1.bf16.msra.mxu0 0
      %833 = vmatprep.subr.bf16.mxu0 0
      %834 = vmatpush1.bf16.msra.mxu0 0
      %835 = vmatprep.subr.bf16.mxu0 0
      %836 = vmatpush1.bf16.msra.mxu0 0
      %837 = vmatprep.subr.bf16.mxu0 0
      %838 = vmatpush1.bf16.msra.mxu0 0
      %839 = vmatprep.subr.bf16.mxu0 0
      %840 = vmatpush1.bf16.msra.mxu0 0
      %841 = vmatprep.mubr.bf16.mxu0 0
      %842 = vmatmul.mubr.bf16.gmra.mrb[0].mxu0 %v807
      %v843 = vpop.f32.mrb[0].mxu0
      %v844 = vadd.f32 0.0, %v843
      %v845 = vpop.f32.mrb[0].mxu0
      %v846 = vpop.f32.mrb[0].mxu0
      %v847 = vadd.f32 0.0, %v846
      %v848 = vpop.f32.mrb[0].mxu0
      %849 = vdwg.mxu0
      %v850 = vpack.c.bf16 %v847, %v844
      %s851 = scalar_lea.vmem %s4, 128
      %v852 = vld [vmem:[%s851] sm:$0xf]
      %v853 = vld [vmem:[%s851 + $0x4] sm:$0xf]
      %v854 = vld [vmem:[%s851 + $0x8] sm:$0xf]
      %v855 = vld [vmem:[%s851 + $0xc] sm:$0xf]
      %v856 = vld [vmem:[%s851 + $0x10] sm:$0xf]
      %v857 = vld [vmem:[%s851 + $0x14] sm:$0xf]
      %v858 = vld [vmem:[%s851 + $0x18] sm:$0xf]
      %v859 = vld [vmem:[%s851 + $0x1c] sm:$0xf]
      %v860 = vld [vmem:[%s851 + $0x20] sm:$0xf]
      %v861 = vld [vmem:[%s851 + $0x24] sm:$0xf]
      %v862 = vld [vmem:[%s851 + $0x28] sm:$0xf]
      %v863 = vld [vmem:[%s851 + $0x2c] sm:$0xf]
      %v864 = vld [vmem:[%s851 + $0x30] sm:$0xf]
      %v865 = vld [vmem:[%s851 + $0x34] sm:$0xf]
      %v866 = vld [vmem:[%s851 + $0x38] sm:$0xf]
      %v867 = vld [vmem:[%s851 + $0x3c] sm:$0xf]
      %v884 = vunpack.c.l.b16 %v852
      %v885 = vunpack.c.l.b16 %v853
      %v886 = vunpack.c.l.b16 %v854
      %v887 = vunpack.c.l.b16 %v855
      %v888 = vunpack.c.l.b16 %v856
      %v889 = vunpack.c.l.b16 %v857
      %v890 = vunpack.c.l.b16 %v858
      %v891 = vunpack.c.l.b16 %v859
      %v892 = vunpack.c.l.b16 %v860
      %v893 = vunpack.c.l.b16 %v861
      %v894 = vunpack.c.l.b16 %v862
      %v895 = vunpack.c.l.b16 %v863
      %v896 = vunpack.c.l.b16 %v864
      %v897 = vunpack.c.l.b16 %v865
      %v898 = vunpack.c.l.b16 %v866
      %v899 = vunpack.c.l.b16 %v867
      %v900 = vpack.c.b16 %v885, %v884
      %v901 = vpack.c.b16 %v887, %v886
      %v902 = vpack.c.b16 %v889, %v888
      %v903 = vpack.c.b16 %v891, %v890
      %v904 = vpack.c.b16 %v893, %v892
      %v905 = vpack.c.b16 %v895, %v894
      %v906 = vpack.c.b16 %v897, %v896
      %v907 = vpack.c.b16 %v899, %v898
      %916 = vmatprep.subr.bf16.mxu0 0
      %917 = vmatpush1.bf16.msra.mxu0 %v900
      %918 = vmatprep.subr.bf16.mxu0 0
      %919 = vmatpush1.bf16.msra.mxu0 %v901
      %920 = vmatprep.subr.bf16.mxu0 0
      %921 = vmatpush1.bf16.msra.mxu0 %v902
      %922 = vmatprep.subr.bf16.mxu0 0
      %923 = vmatpush1.bf16.msra.mxu0 %v903
      %924 = vmatprep.subr.bf16.mxu0 0
      %925 = vmatpush1.bf16.msra.mxu0 %v904
      %926 = vmatprep.subr.bf16.mxu0 0
      %927 = vmatpush1.bf16.msra.mxu0 %v905
      %928 = vmatprep.subr.bf16.mxu0 0
      %929 = vmatpush1.bf16.msra.mxu0 %v906
      %930 = vmatprep.subr.bf16.mxu0 0
      %931 = vmatpush1.bf16.msra.mxu0 %v907
      %932 = vmatprep.subr.bf16.mxu0 0
      %933 = vmatpush1.bf16.msra.mxu0 0
      %934 = vmatprep.subr.bf16.mxu0 0
      %935 = vmatpush1.bf16.msra.mxu0 0
      %936 = vmatprep.subr.bf16.mxu0 0
      %937 = vmatpush1.bf16.msra.mxu0 0
      %938 = vmatprep.subr.bf16.mxu0 0
      %939 = vmatpush1.bf16.msra.mxu0 0
      %940 = vmatprep.subr.bf16.mxu0 0
      %941 = vmatpush1.bf16.msra.mxu0 0
      %942 = vmatprep.subr.bf16.mxu0 0
      %943 = vmatpush1.bf16.msra.mxu0 0
      %944 = vmatprep.subr.bf16.mxu0 0
      %945 = vmatpush1.bf16.msra.mxu0 0
      %946 = vmatprep.subr.bf16.mxu0 0
      %947 = vmatpush1.bf16.msra.mxu0 0
      %948 = vmatprep.mubr.bf16.mxu0 0
      %949 = vmatmul.mubr.bf16.gmra.mrb[0].mxu0 %v850
      %v950 = vpop.f32.mrb[0].mxu0
      %v951 = vadd.f32 0.0, %v950
      %v952 = vpop.f32.mrb[0].mxu0
      %v953 = vpop.f32.mrb[0].mxu0
      %v954 = vadd.f32 0.0, %v953
      %v955 = vpop.f32.mrb[0].mxu0
      %956 = vdwg.mxu0
      %v957 = vadd.f32 %v792, %v951
      %v958 = vadd.f32 %v795, %v954
      %s959 = scalar_lea.vmem %s3, 24
      %v960 = vld [vmem:[%s959] sm:$0xf]
      %v961 = vld [vmem:[%s959 + $0x4] sm:$0xf]
      %v964 = vunpack.c.l.b16 %v960
      %v965 = vunpack.c.l.b16 %v961
      %v966 = vpack.c.b16 %v965, %v964
      %v968 = vsel %vm488, %v966, 0
      %970 = vmatprep.subr.bf16.mxu0 0
      %971 = vmatpush1.bf16.msra.mxu0 %v477
      %972 = vmatprep.subr.bf16.mxu0 0
      %973 = vmatpush1.bf16.msra.mxu0 %v478
      %974 = vmatprep.subr.bf16.mxu0 0
      %975 = vmatpush1.bf16.msra.mxu0 %v479
      %976 = vmatprep.subr.bf16.mxu0 0
      %977 = vmatpush1.bf16.msra.mxu0 %v480
      %978 = vmatprep.subr.bf16.mxu0 0
      %979 = vmatpush1.bf16.msra.mxu0 0
      %980 = vmatprep.subr.bf16.mxu0 0
      %981 = vmatpush1.bf16.msra.mxu0 0
      %982 = vmatprep.subr.bf16.mxu0 0
      %983 = vmatpush1.bf16.msra.mxu0 0
      %984 = vmatprep.subr.bf16.mxu0 0
      %985 = vmatpush1.bf16.msra.mxu0 0
      %986 = vmatprep.subr.bf16.mxu0 0
      %987 = vmatpush1.bf16.msra.mxu0 0
      %988 = vmatprep.subr.bf16.mxu0 0
      %989 = vmatpush1.bf16.msra.mxu0 0
      %990 = vmatprep.subr.bf16.mxu0 0
      %991 = vmatpush1.bf16.msra.mxu0 0
      %992 = vmatprep.subr.bf16.mxu0 0
      %993 = vmatpush1.bf16.msra.mxu0 0
      %994 = vmatprep.subr.bf16.mxu0 0
      %995 = vmatpush1.bf16.msra.mxu0 0
      %996 = vmatprep.subr.bf16.mxu0 0
      %997 = vmatpush1.bf16.msra.mxu0 0
      %998 = vmatprep.subr.bf16.mxu0 0
      %999 = vmatpush1.bf16.msra.mxu0 0
      %1000 = vmatprep.subr.bf16.mxu0 0
      %1001 = vmatpush1.bf16.msra.mxu0 0
      %1002 = vmatprep.mubr.bf16.mxu0 0
      %1003 = vmatmul.mubr.bf16.gmra.mrb[0].mxu0 %v968
      %v1004 = vpop.f32.mrb[0].mxu0
      %v1005 = vadd.f32 0.0, %v1004
      %v1006 = vpop.f32.mrb[0].mxu0
      %v1007 = vpop.f32.mrb[0].mxu0
      %v1008 = vadd.f32 0.0, %v1007
      %v1009 = vpop.f32.mrb[0].mxu0
      %1010 = vdwg.mxu0
      %v1011 = vpack.c.bf16 %v1008, %v1005
      %s1012 = scalar_lea.vmem %s4, 192
      %v1013 = vld [vmem:[%s1012] sm:$0xf]
      %v1014 = vld [vmem:[%s1012 + $0x4] sm:$0xf]
      %v1015 = vld [vmem:[%s1012 + $0x8] sm:$0xf]
      %v1016 = vld [vmem:[%s1012 + $0xc] sm:$0xf]
      %v1017 = vld [vmem:[%s1012 + $0x10] sm:$0xf]
      %v1018 = vld [vmem:[%s1012 + $0x14] sm:$0xf]
      %v1019 = vld [vmem:[%s1012 + $0x18] sm:$0xf]
      %v1020 = vld [vmem:[%s1012 + $0x1c] sm:$0xf]
      %v1021 = vld [vmem:[%s1012 + $0x20] sm:$0xf]
      %v1022 = vld [vmem:[%s1012 + $0x24] sm:$0xf]
      %v1023 = vld [vmem:[%s1012 + $0x28] sm:$0xf]
      %v1024 = vld [vmem:[%s1012 + $0x2c] sm:$0xf]
      %v1025 = vld [vmem:[%s1012 + $0x30] sm:$0xf]
      %v1026 = vld [vmem:[%s1012 + $0x34] sm:$0xf]
      %v1027 = vld [vmem:[%s1012 + $0x38] sm:$0xf]
      %v1028 = vld [vmem:[%s1012 + $0x3c] sm:$0xf]
      %v1045 = vunpack.c.l.b16 %v1013
      %v1046 = vunpack.c.l.b16 %v1014
      %v1047 = vunpack.c.l.b16 %v1015
      %v1048 = vunpack.c.l.b16 %v1016
      %v1049 = vunpack.c.l.b16 %v1017
      %v1050 = vunpack.c.l.b16 %v1018
      %v1051 = vunpack.c.l.b16 %v1019
      %v1052 = vunpack.c.l.b16 %v1020
      %v1053 = vunpack.c.l.b16 %v1021
      %v1054 = vunpack.c.l.b16 %v1022
      %v1055 = vunpack.c.l.b16 %v1023
      %v1056 = vunpack.c.l.b16 %v1024
      %v1057 = vunpack.c.l.b16 %v1025
      %v1058 = vunpack.c.l.b16 %v1026
      %v1059 = vunpack.c.l.b16 %v1027
      %v1060 = vunpack.c.l.b16 %v1028
      %v1061 = vpack.c.b16 %v1046, %v1045
      %v1062 = vpack.c.b16 %v1048, %v1047
      %v1063 = vpack.c.b16 %v1050, %v1049
      %v1064 = vpack.c.b16 %v1052, %v1051
      %v1065 = vpack.c.b16 %v1054, %v1053
      %v1066 = vpack.c.b16 %v1056, %v1055
      %v1067 = vpack.c.b16 %v1058, %v1057
      %v1068 = vpack.c.b16 %v1060, %v1059
      %1077 = vmatprep.subr.bf16.mxu0 0
      %1078 = vmatpush1.bf16.msra.mxu0 %v1061
      %1079 = vmatprep.subr.bf16.mxu0 0
      %1080 = vmatpush1.bf16.msra.mxu0 %v1062
      %1081 = vmatprep.subr.bf16.mxu0 0
      %1082 = vmatpush1.bf16.msra.mxu0 %v1063
      %1083 = vmatprep.subr.bf16.mxu0 0
      %1084 = vmatpush1.bf16.msra.mxu0 %v1064
      %1085 = vmatprep.subr.bf16.mxu0 0
      %1086 = vmatpush1.bf16.msra.mxu0 %v1065
      %1087 = vmatprep.subr.bf16.mxu0 0
      %1088 = vmatpush1.bf16.msra.mxu0 %v1066
      %1089 = vmatprep.subr.bf16.mxu0 0
      %1090 = vmatpush1.bf16.msra.mxu0 %v1067
      %1091 = vmatprep.subr.bf16.mxu0 0
      %1092 = vmatpush1.bf16.msra.mxu0 %v1068
      %1093 = vmatprep.subr.bf16.mxu0 0
      %1094 = vmatpush1.bf16.msra.mxu0 0
      %1095 = vmatprep.subr.bf16.mxu0 0
      %1096 = vmatpush1.bf16.msra.mxu0 0
      %1097 = vmatprep.subr.bf16.mxu0 0
      %1098 = vmatpush1.bf16.msra.mxu0 0
      %1099 = vmatprep.subr.bf16.mxu0 0
      %1100 = vmatpush1.bf16.msra.mxu0 0
      %1101 = vmatprep.subr.bf16.mxu0 0
      %1102 = vmatpush1.bf16.msra.mxu0 0
      %1103 = vmatprep.subr.bf16.mxu0 0
      %1104 = vmatpush1.bf16.msra.mxu0 0
      %1105 = vmatprep.subr.bf16.mxu0 0
      %1106 = vmatpush1.bf16.msra.mxu0 0
      %1107 = vmatprep.subr.bf16.mxu0 0
      %1108 = vmatpush1.bf16.msra.mxu0 0
      %1109 = vmatprep.mubr.bf16.mxu0 0
      %1110 = vmatmul.mubr.bf16.gmra.mrb[0].mxu0 %v1011
      %v1111 = vpop.f32.mrb[0].mxu0
      %v1112 = vadd.f32 0.0, %v1111
      %v1113 = vpop.f32.mrb[0].mxu0
      %v1114 = vpop.f32.mrb[0].mxu0
      %v1115 = vadd.f32 0.0, %v1114
      %v1116 = vpop.f32.mrb[0].mxu0
      %1117 = vdwg.mxu0
      %v1118 = vadd.f32 %v957, %v1112
      %v1119 = vadd.f32 %v958, %v1115
      %s1120 = scalar_lea.vmem %s3, 32
      %v1121 = vld [vmem:[%s1120] sm:$0xf]
      %v1122 = vld [vmem:[%s1120 + $0x4] sm:$0xf]
      %v1125 = vunpack.c.l.b16 %v1121
      %v1126 = vunpack.c.l.b16 %v1122
      %v1127 = vpack.c.b16 %v1126, %v1125
      %v1129 = vsel %vm488, %v1127, 0
      %1131 = vmatprep.subr.bf16.mxu0 0
      %1132 = vmatpush1.bf16.msra.mxu0 %v477
      %1133 = vmatprep.subr.bf16.mxu0 0
      %1134 = vmatpush1.bf16.msra.mxu0 %v478
      %1135 = vmatprep.subr.bf16.mxu0 0
      %1136 = vmatpush1.bf16.msra.mxu0 %v479
      %1137 = vmatprep.subr.bf16.mxu0 0
      %1138 = vmatpush1.bf16.msra.mxu0 %v480
      %1139 = vmatprep.subr.bf16.mxu0 0
      %1140 = vmatpush1.bf16.msra.mxu0 0
      %1141 = vmatprep.subr.bf16.mxu0 0
      %1142 = vmatpush1.bf16.msra.mxu0 0
      %1143 = vmatprep.subr.bf16.mxu0 0
      %1144 = vmatpush1.bf16.msra.mxu0 0
      %1145 = vmatprep.subr.bf16.mxu0 0
      %1146 = vmatpush1.bf16.msra.mxu0 0
      %1147 = vmatprep.subr.bf16.mxu0 0
      %1148 = vmatpush1.bf16.msra.mxu0 0
      %1149 = vmatprep.subr.bf16.mxu0 0
      %1150 = vmatpush1.bf16.msra.mxu0 0
      %1151 = vmatprep.subr.bf16.mxu0 0
      %1152 = vmatpush1.bf16.msra.mxu0 0
      %1153 = vmatprep.subr.bf16.mxu0 0
      %1154 = vmatpush1.bf16.msra.mxu0 0
      %1155 = vmatprep.subr.bf16.mxu0 0
      %1156 = vmatpush1.bf16.msra.mxu0 0
      %1157 = vmatprep.subr.bf16.mxu0 0
      %1158 = vmatpush1.bf16.msra.mxu0 0
      %1159 = vmatprep.subr.bf16.mxu0 0
      %1160 = vmatpush1.bf16.msra.mxu0 0
      %1161 = vmatprep.subr.bf16.mxu0 0
      %1162 = vmatpush1.bf16.msra.mxu0 0
      %1163 = vmatprep.mubr.bf16.mxu0 0
      %1164 = vmatmul.mubr.bf16.gmra.mrb[0].mxu0 %v1129
      %v1165 = vpop.f32.mrb[0].mxu0
      %v1166 = vadd.f32 0.0, %v1165
      %v1167 = vpop.f32.mrb[0].mxu0
      %v1168 = vpop.f32.mrb[0].mxu0
      %v1169 = vadd.f32 0.0, %v1168
      %v1170 = vpop.f32.mrb[0].mxu0
      %1171 = vdwg.mxu0
      %v1172 = vpack.c.bf16 %v1169, %v1166
      %s1173 = scalar_lea.vmem %s4, 256
      %v1174 = vld [vmem:[%s1173] sm:$0xf]
      %v1175 = vld [vmem:[%s1173 + $0x4] sm:$0xf]
      %v1176 = vld [vmem:[%s1173 + $0x8] sm:$0xf]
      %v1177 = vld [vmem:[%s1173 + $0xc] sm:$0xf]
      %v1178 = vld [vmem:[%s1173 + $0x10] sm:$0xf]
      %v1179 = vld [vmem:[%s1173 + $0x14] sm:$0xf]
      %v1180 = vld [vmem:[%s1173 + $0x18] sm:$0xf]
      %v1181 = vld [vmem:[%s1173 + $0x1c] sm:$0xf]
      %v1182 = vld [vmem:[%s1173 + $0x20] sm:$0xf]
      %v1183 = vld [vmem:[%s1173 + $0x24] sm:$0xf]
      %v1184 = vld [vmem:[%s1173 + $0x28] sm:$0xf]
      %v1185 = vld [vmem:[%s1173 + $0x2c] sm:$0xf]
      %v1186 = vld [vmem:[%s1173 + $0x30] sm:$0xf]
      %v1187 = vld [vmem:[%s1173 + $0x34] sm:$0xf]
      %v1188 = vld [vmem:[%s1173 + $0x38] sm:$0xf]
      %v1189 = vld [vmem:[%s1173 + $0x3c] sm:$0xf]
      %v1206 = vunpack.c.l.b16 %v1174
      %v1207 = vunpack.c.l.b16 %v1175
      %v1208 = vunpack.c.l.b16 %v1176
      %v1209 = vunpack.c.l.b16 %v1177
      %v1210 = vunpack.c.l.b16 %v1178
      %v1211 = vunpack.c.l.b16 %v1179
      %v1212 = vunpack.c.l.b16 %v1180
      %v1213 = vunpack.c.l.b16 %v1181
      %v1214 = vunpack.c.l.b16 %v1182
      %v1215 = vunpack.c.l.b16 %v1183
      %v1216 = vunpack.c.l.b16 %v1184
      %v1217 = vunpack.c.l.b16 %v1185
      %v1218 = vunpack.c.l.b16 %v1186
      %v1219 = vunpack.c.l.b16 %v1187
      %v1220 = vunpack.c.l.b16 %v1188
      %v1221 = vunpack.c.l.b16 %v1189
      %v1222 = vpack.c.b16 %v1207, %v1206
      %v1223 = vpack.c.b16 %v1209, %v1208
      %v1224 = vpack.c.b16 %v1211, %v1210
      %v1225 = vpack.c.b16 %v1213, %v1212
      %v1226 = vpack.c.b16 %v1215, %v1214
      %v1227 = vpack.c.b16 %v1217, %v1216
      %v1228 = vpack.c.b16 %v1219, %v1218
      %v1229 = vpack.c.b16 %v1221, %v1220
      %1238 = vmatprep.subr.bf16.mxu0 0
      %1239 = vmatpush1.bf16.msra.mxu0 %v1222
      %1240 = vmatprep.subr.bf16.mxu0 0
      %1241 = vmatpush1.bf16.msra.mxu0 %v1223
      %1242 = vmatprep.subr.bf16.mxu0 0
      %1243 = vmatpush1.bf16.msra.mxu0 %v1224
      %1244 = vmatprep.subr.bf16.mxu0 0
      %1245 = vmatpush1.bf16.msra.mxu0 %v1225
      %1246 = vmatprep.subr.bf16.mxu0 0
      %1247 = vmatpush1.bf16.msra.mxu0 %v1226
      %1248 = vmatprep.subr.bf16.mxu0 0
      %1249 = vmatpush1.bf16.msra.mxu0 %v1227
      %1250 = vmatprep.subr.bf16.mxu0 0
      %1251 = vmatpush1.bf16.msra.mxu0 %v1228
      %1252 = vmatprep.subr.bf16.mxu0 0
      %1253 = vmatpush1.bf16.msra.mxu0 %v1229
      %1254 = vmatprep.subr.bf16.mxu0 0
      %1255 = vmatpush1.bf16.msra.mxu0 0
      %1256 = vmatprep.subr.bf16.mxu0 0
      %1257 = vmatpush1.bf16.msra.mxu0 0
      %1258 = vmatprep.subr.bf16.mxu0 0
      %1259 = vmatpush1.bf16.msra.mxu0 0
      %1260 = vmatprep.subr.bf16.mxu0 0
      %1261 = vmatpush1.bf16.msra.mxu0 0
      %1262 = vmatprep.subr.bf16.mxu0 0
      %1263 = vmatpush1.bf16.msra.mxu0 0
      %1264 = vmatprep.subr.bf16.mxu0 0
      %1265 = vmatpush1.bf16.msra.mxu0 0
      %1266 = vmatprep.subr.bf16.mxu0 0
      %1267 = vmatpush1.bf16.msra.mxu0 0
      %1268 = vmatprep.subr.bf16.mxu0 0
      %1269 = vmatpush1.bf16.msra.mxu0 0
      %1270 = vmatprep.mubr.bf16.mxu0 0
      %1271 = vmatmul.mubr.bf16.gmra.mrb[0].mxu0 %v1172
      %v1272 = vpop.f32.mrb[0].mxu0
      %v1273 = vadd.f32 0.0, %v1272
      %v1274 = vpop.f32.mrb[0].mxu0
      %v1275 = vpop.f32.mrb[0].mxu0
      %v1276 = vadd.f32 0.0, %v1275
      %v1277 = vpop.f32.mrb[0].mxu0
      %1278 = vdwg.mxu0
      %v1279 = vadd.f32 %v1118, %v1273
      %v1280 = vadd.f32 %v1119, %v1276
      %s1281 = scalar_lea.vmem %s3, 40
      %v1282 = vld [vmem:[%s1281] sm:$0xf]
      %v1283 = vld [vmem:[%s1281 + $0x4] sm:$0xf]
      %v1286 = vunpack.c.l.b16 %v1282
      %v1287 = vunpack.c.l.b16 %v1283
      %v1288 = vpack.c.b16 %v1287, %v1286
      %v1290 = vsel %vm488, %v1288, 0
      %1292 = vmatprep.subr.bf16.mxu0 0
      %1293 = vmatpush1.bf16.msra.mxu0 %v477
      %1294 = vmatprep.subr.bf16.mxu0 0
      %1295 = vmatpush1.bf16.msra.mxu0 %v478
      %1296 = vmatprep.subr.bf16.mxu0 0
      %1297 = vmatpush1.bf16.msra.mxu0 %v479
      %1298 = vmatprep.subr.bf16.mxu0 0
      %1299 = vmatpush1.bf16.msra.mxu0 %v480
      %1300 = vmatprep.subr.bf16.mxu0 0
      %1301 = vmatpush1.bf16.msra.mxu0 0
      %1302 = vmatprep.subr.bf16.mxu0 0
      %1303 = vmatpush1.bf16.msra.mxu0 0
      %1304 = vmatprep.subr.bf16.mxu0 0
      %1305 = vmatpush1.bf16.msra.mxu0 0
      %1306 = vmatprep.subr.bf16.mxu0 0
      %1307 = vmatpush1.bf16.msra.mxu0 0
      %1308 = vmatprep.subr.bf16.mxu0 0
      %1309 = vmatpush1.bf16.msra.mxu0 0
      %1310 = vmatprep.subr.bf16.mxu0 0
      %1311 = vmatpush1.bf16.msra.mxu0 0
      %1312 = vmatprep.subr.bf16.mxu0 0
      %1313 = vmatpush1.bf16.msra.mxu0 0
      %1314 = vmatprep.subr.bf16.mxu0 0
      %1315 = vmatpush1.bf16.msra.mxu0 0
      %1316 = vmatprep.subr.bf16.mxu0 0
      %1317 = vmatpush1.bf16.msra.mxu0 0
      %1318 = vmatprep.subr.bf16.mxu0 0
      %1319 = vmatpush1.bf16.msra.mxu0 0
      %1320 = vmatprep.subr.bf16.mxu0 0
      %1321 = vmatpush1.bf16.msra.mxu0 0
      %1322 = vmatprep.subr.bf16.mxu0 0
      %1323 = vmatpush1.bf16.msra.mxu0 0
      %1324 = vmatprep.mubr.bf16.mxu0 0
      %1325 = vmatmul.mubr.bf16.gmra.mrb[0].mxu0 %v1290
      %v1326 = vpop.f32.mrb[0].mxu0
      %v1327 = vadd.f32 0.0, %v1326
      %v1328 = vpop.f32.mrb[0].mxu0
      %v1329 = vpop.f32.mrb[0].mxu0
      %v1330 = vadd.f32 0.0, %v1329
      %v1331 = vpop.f32.mrb[0].mxu0
      %1332 = vdwg.mxu0
      %v1333 = vpack.c.bf16 %v1330, %v1327
      %s1334 = scalar_lea.vmem %s4, 320
      %v1335 = vld [vmem:[%s1334] sm:$0xf]
      %v1336 = vld [vmem:[%s1334 + $0x4] sm:$0xf]
      %v1337 = vld [vmem:[%s1334 + $0x8] sm:$0xf]
      %v1338 = vld [vmem:[%s1334 + $0xc] sm:$0xf]
      %v1339 = vld [vmem:[%s1334 + $0x10] sm:$0xf]
      %v1340 = vld [vmem:[%s1334 + $0x14] sm:$0xf]
      %v1341 = vld [vmem:[%s1334 + $0x18] sm:$0xf]
      %v1342 = vld [vmem:[%s1334 + $0x1c] sm:$0xf]
      %v1343 = vld [vmem:[%s1334 + $0x20] sm:$0xf]
      %v1344 = vld [vmem:[%s1334 + $0x24] sm:$0xf]
      %v1345 = vld [vmem:[%s1334 + $0x28] sm:$0xf]
      %v1346 = vld [vmem:[%s1334 + $0x2c] sm:$0xf]
      %v1347 = vld [vmem:[%s1334 + $0x30] sm:$0xf]
      %v1348 = vld [vmem:[%s1334 + $0x34] sm:$0xf]
      %v1349 = vld [vmem:[%s1334 + $0x38] sm:$0xf]
      %v1350 = vld [vmem:[%s1334 + $0x3c] sm:$0xf]
      %v1367 = vunpack.c.l.b16 %v1335
      %v1368 = vunpack.c.l.b16 %v1336
      %v1369 = vunpack.c.l.b16 %v1337
      %v1370 = vunpack.c.l.b16 %v1338
      %v1371 = vunpack.c.l.b16 %v1339
      %v1372 = vunpack.c.l.b16 %v1340
      %v1373 = vunpack.c.l.b16 %v1341
      %v1374 = vunpack.c.l.b16 %v1342
      %v1375 = vunpack.c.l.b16 %v1343
      %v1376 = vunpack.c.l.b16 %v1344
      %v1377 = vunpack.c.l.b16 %v1345
      %v1378 = vunpack.c.l.b16 %v1346
      %v1379 = vunpack.c.l.b16 %v1347
      %v1380 = vunpack.c.l.b16 %v1348
      %v1381 = vunpack.c.l.b16 %v1349
      %v1382 = vunpack.c.l.b16 %v1350
      %v1383 = vpack.c.b16 %v1368, %v1367
      %v1384 = vpack.c.b16 %v1370, %v1369
      %v1385 = vpack.c.b16 %v1372, %v1371
      %v1386 = vpack.c.b16 %v1374, %v1373
      %v1387 = vpack.c.b16 %v1376, %v1375
      %v1388 = vpack.c.b16 %v1378, %v1377
      %v1389 = vpack.c.b16 %v1380, %v1379
      %v1390 = vpack.c.b16 %v1382, %v1381
      %1399 = vmatprep.subr.bf16.mxu0 0
      %1400 = vmatpush1.bf16.msra.mxu0 %v1383
      %1401 = vmatprep.subr.bf16.mxu0 0
      %1402 = vmatpush1.bf16.msra.mxu0 %v1384
      %1403 = vmatprep.subr.bf16.mxu0 0
      %1404 = vmatpush1.bf16.msra.mxu0 %v1385
      %1405 = vmatprep.subr.bf16.mxu0 0
      %1406 = vmatpush1.bf16.msra.mxu0 %v1386
      %1407 = vmatprep.subr.bf16.mxu0 0
      %1408 = vmatpush1.bf16.msra.mxu0 %v1387
      %1409 = vmatprep.subr.bf16.mxu0 0
      %1410 = vmatpush1.bf16.msra.mxu0 %v1388
      %1411 = vmatprep.subr.bf16.mxu0 0
      %1412 = vmatpush1.bf16.msra.mxu0 %v1389
      %1413 = vmatprep.subr.bf16.mxu0 0
      %1414 = vmatpush1.bf16.msra.mxu0 %v1390
      %1415 = vmatprep.subr.bf16.mxu0 0
      %1416 = vmatpush1.bf16.msra.mxu0 0
      %1417 = vmatprep.subr.bf16.mxu0 0
      %1418 = vmatpush1.bf16.msra.mxu0 0
      %1419 = vmatprep.subr.bf16.mxu0 0
      %1420 = vmatpush1.bf16.msra.mxu0 0
      %1421 = vmatprep.subr.bf16.mxu0 0
      %1422 = vmatpush1.bf16.msra.mxu0 0
      %1423 = vmatprep.subr.bf16.mxu0 0
      %1424 = vmatpush1.bf16.msra.mxu0 0
      %1425 = vmatprep.subr.bf16.mxu0 0
      %1426 = vmatpush1.bf16.msra.mxu0 0
      %1427 = vmatprep.subr.bf16.mxu0 0
      %1428 = vmatpush1.bf16.msra.mxu0 0
      %1429 = vmatprep.subr.bf16.mxu0 0
      %1430 = vmatpush1.bf16.msra.mxu0 0
      %1431 = vmatprep.mubr.bf16.mxu0 0
      %1432 = vmatmul.mubr.bf16.gmra.mrb[0].mxu0 %v1333
      %v1433 = vpop.f32.mrb[0].mxu0
      %v1434 = vadd.f32 0.0, %v1433
      %v1435 = vpop.f32.mrb[0].mxu0
      %v1436 = vpop.f32.mrb[0].mxu0
      %v1437 = vadd.f32 0.0, %v1436
      %v1438 = vpop.f32.mrb[0].mxu0
      %1439 = vdwg.mxu0
      %v1440 = vadd.f32 %v1279, %v1434
      %v1441 = vadd.f32 %v1280, %v1437
      %s1442 = scalar_lea.vmem %s3, 48
      %v1443 = vld [vmem:[%s1442] sm:$0xf]
      %v1444 = vld [vmem:[%s1442 + $0x4] sm:$0xf]
      %v1447 = vunpack.c.l.b16 %v1443
      %v1448 = vunpack.c.l.b16 %v1444
      %v1449 = vpack.c.b16 %v1448, %v1447
      %v1451 = vsel %vm488, %v1449, 0
      %1453 = vmatprep.subr.bf16.mxu0 0
      %1454 = vmatpush1.bf16.msra.mxu0 %v477
      %1455 = vmatprep.subr.bf16.mxu0 0
      %1456 = vmatpush1.bf16.msra.mxu0 %v478
      %1457 = vmatprep.subr.bf16.mxu0 0
      %1458 = vmatpush1.bf16.msra.mxu0 %v479
      %1459 = vmatprep.subr.bf16.mxu0 0
      %1460 = vmatpush1.bf16.msra.mxu0 %v480
      %1461 = vmatprep.subr.bf16.mxu0 0
      %1462 = vmatpush1.bf16.msra.mxu0 0
      %1463 = vmatprep.subr.bf16.mxu0 0
      %1464 = vmatpush1.bf16.msra.mxu0 0
      %1465 = vmatprep.subr.bf16.mxu0 0
      %1466 = vmatpush1.bf16.msra.mxu0 0
      %1467 = vmatprep.subr.bf16.mxu0 0
      %1468 = vmatpush1.bf16.msra.mxu0 0
      %1469 = vmatprep.subr.bf16.mxu0 0
      %1470 = vmatpush1.bf16.msra.mxu0 0
      %1471 = vmatprep.subr.bf16.mxu0 0
      %1472 = vmatpush1.bf16.msra.mxu0 0
      %1473 = vmatprep.subr.bf16.mxu0 0
      %1474 = vmatpush1.bf16.msra.mxu0 0
      %1475 = vmatprep.subr.bf16.mxu0 0
      %1476 = vmatpush1.bf16.msra.mxu0 0
      %1477 = vmatprep.subr.bf16.mxu0 0
      %1478 = vmatpush1.bf16.msra.mxu0 0
      %1479 = vmatprep.subr.bf16.mxu0 0
      %1480 = vmatpush1.bf16.msra.mxu0 0
      %1481 = vmatprep.subr.bf16.mxu0 0
      %1482 = vmatpush1.bf16.msra.mxu0 0
      %1483 = vmatprep.subr.bf16.mxu0 0
      %1484 = vmatpush1.bf16.msra.mxu0 0
      %1485 = vmatprep.mubr.bf16.mxu0 0
      %1486 = vmatmul.mubr.bf16.gmra.mrb[0].mxu0 %v1451
      %v1487 = vpop.f32.mrb[0].mxu0
      %v1488 = vadd.f32 0.0, %v1487
      %v1489 = vpop.f32.mrb[0].mxu0
      %v1490 = vpop.f32.mrb[0].mxu0
      %v1491 = vadd.f32 0.0, %v1490
      %v1492 = vpop.f32.mrb[0].mxu0
      %1493 = vdwg.mxu0
      %v1494 = vpack.c.bf16 %v1491, %v1488
      %s1495 = scalar_lea.vmem %s4, 384
      %v1496 = vld [vmem:[%s1495] sm:$0xf]
      %v1497 = vld [vmem:[%s1495 + $0x4] sm:$0xf]
      %v1498 = vld [vmem:[%s1495 + $0x8] sm:$0xf]
      %v1499 = vld [vmem:[%s1495 + $0xc] sm:$0xf]
      %v1500 = vld [vmem:[%s1495 + $0x10] sm:$0xf]
      %v1501 = vld [vmem:[%s1495 + $0x14] sm:$0xf]
      %v1502 = vld [vmem:[%s1495 + $0x18] sm:$0xf]
      %v1503 = vld [vmem:[%s1495 + $0x1c] sm:$0xf]
      %v1504 = vld [vmem:[%s1495 + $0x20] sm:$0xf]
      %v1505 = vld [vmem:[%s1495 + $0x24] sm:$0xf]
      %v1506 = vld [vmem:[%s1495 + $0x28] sm:$0xf]
      %v1507 = vld [vmem:[%s1495 + $0x2c] sm:$0xf]
      %v1508 = vld [vmem:[%s1495 + $0x30] sm:$0xf]
      %v1509 = vld [vmem:[%s1495 + $0x34] sm:$0xf]
      %v1510 = vld [vmem:[%s1495 + $0x38] sm:$0xf]
      %v1511 = vld [vmem:[%s1495 + $0x3c] sm:$0xf]
      %v1528 = vunpack.c.l.b16 %v1496
      %v1529 = vunpack.c.l.b16 %v1497
      %v1530 = vunpack.c.l.b16 %v1498
      %v1531 = vunpack.c.l.b16 %v1499
      %v1532 = vunpack.c.l.b16 %v1500
      %v1533 = vunpack.c.l.b16 %v1501
      %v1534 = vunpack.c.l.b16 %v1502
      %v1535 = vunpack.c.l.b16 %v1503
      %v1536 = vunpack.c.l.b16 %v1504
      %v1537 = vunpack.c.l.b16 %v1505
      %v1538 = vunpack.c.l.b16 %v1506
      %v1539 = vunpack.c.l.b16 %v1507
      %v1540 = vunpack.c.l.b16 %v1508
      %v1541 = vunpack.c.l.b16 %v1509
      %v1542 = vunpack.c.l.b16 %v1510
      %v1543 = vunpack.c.l.b16 %v1511
      %v1544 = vpack.c.b16 %v1529, %v1528
      %v1545 = vpack.c.b16 %v1531, %v1530
      %v1546 = vpack.c.b16 %v1533, %v1532
      %v1547 = vpack.c.b16 %v1535, %v1534
      %v1548 = vpack.c.b16 %v1537, %v1536
      %v1549 = vpack.c.b16 %v1539, %v1538
      %v1550 = vpack.c.b16 %v1541, %v1540
      %v1551 = vpack.c.b16 %v1543, %v1542
      %1560 = vmatprep.subr.bf16.mxu0 0
      %1561 = vmatpush1.bf16.msra.mxu0 %v1544
      %1562 = vmatprep.subr.bf16.mxu0 0
      %1563 = vmatpush1.bf16.msra.mxu0 %v1545
      %1564 = vmatprep.subr.bf16.mxu0 0
      %1565 = vmatpush1.bf16.msra.mxu0 %v1546
      %1566 = vmatprep.subr.bf16.mxu0 0
      %1567 = vmatpush1.bf16.msra.mxu0 %v1547
      %1568 = vmatprep.subr.bf16.mxu0 0
      %1569 = vmatpush1.bf16.msra.mxu0 %v1548
      %1570 = vmatprep.subr.bf16.mxu0 0
      %1571 = vmatpush1.bf16.msra.mxu0 %v1549
      %1572 = vmatprep.subr.bf16.mxu0 0
      %1573 = vmatpush1.bf16.msra.mxu0 %v1550
      %1574 = vmatprep.subr.bf16.mxu0 0
      %1575 = vmatpush1.bf16.msra.mxu0 %v1551
      %1576 = vmatprep.subr.bf16.mxu0 0
      %1577 = vmatpush1.bf16.msra.mxu0 0
      %1578 = vmatprep.subr.bf16.mxu0 0
      %1579 = vmatpush1.bf16.msra.mxu0 0
      %1580 = vmatprep.subr.bf16.mxu0 0
      %1581 = vmatpush1.bf16.msra.mxu0 0
      %1582 = vmatprep.subr.bf16.mxu0 0
      %1583 = vmatpush1.bf16.msra.mxu0 0
      %1584 = vmatprep.subr.bf16.mxu0 0
      %1585 = vmatpush1.bf16.msra.mxu0 0
      %1586 = vmatprep.subr.bf16.mxu0 0
      %1587 = vmatpush1.bf16.msra.mxu0 0
      %1588 = vmatprep.subr.bf16.mxu0 0
      %1589 = vmatpush1.bf16.msra.mxu0 0
      %1590 = vmatprep.subr.bf16.mxu0 0
      %1591 = vmatpush1.bf16.msra.mxu0 0
      %1592 = vmatprep.mubr.bf16.mxu0 0
      %1593 = vmatmul.mubr.bf16.gmra.mrb[0].mxu0 %v1494
      %v1594 = vpop.f32.mrb[0].mxu0
      %v1595 = vadd.f32 0.0, %v1594
      %v1596 = vpop.f32.mrb[0].mxu0
      %v1597 = vpop.f32.mrb[0].mxu0
      %v1598 = vadd.f32 0.0, %v1597
      %v1599 = vpop.f32.mrb[0].mxu0
      %1600 = vdwg.mxu0
      %v1601 = vadd.f32 %v1440, %v1595
      %v1602 = vadd.f32 %v1441, %v1598
      %s1603 = scalar_lea.vmem %s3, 56
      %v1604 = vld [vmem:[%s1603] sm:$0xf]
      %v1605 = vld [vmem:[%s1603 + $0x4] sm:$0xf]
      %v1608 = vunpack.c.l.b16 %v1604
      %v1609 = vunpack.c.l.b16 %v1605
      %v1610 = vpack.c.b16 %v1609, %v1608
      %v1612 = vsel %vm488, %v1610, 0
      %1614 = vmatprep.subr.bf16.mxu0 0
      %1615 = vmatpush1.bf16.msra.mxu0 %v477
      %1616 = vmatprep.subr.bf16.mxu0 0
      %1617 = vmatpush1.bf16.msra.mxu0 %v478
      %1618 = vmatprep.subr.bf16.mxu0 0
      %1619 = vmatpush1.bf16.msra.mxu0 %v479
      %1620 = vmatprep.subr.bf16.mxu0 0
      %1621 = vmatpush1.bf16.msra.mxu0 %v480
      %1622 = vmatprep.subr.bf16.mxu0 0
      %1623 = vmatpush1.bf16.msra.mxu0 0
      %1624 = vmatprep.subr.bf16.mxu0 0
      %1625 = vmatpush1.bf16.msra.mxu0 0
      %1626 = vmatprep.subr.bf16.mxu0 0
      %1627 = vmatpush1.bf16.msra.mxu0 0
      %1628 = vmatprep.subr.bf16.mxu0 0
      %1629 = vmatpush1.bf16.msra.mxu0 0
      %1630 = vmatprep.subr.bf16.mxu0 0
      %1631 = vmatpush1.bf16.msra.mxu0 0
      %1632 = vmatprep.subr.bf16.mxu0 0
      %1633 = vmatpush1.bf16.msra.mxu0 0
      %1634 = vmatprep.subr.bf16.mxu0 0
      %1635 = vmatpush1.bf16.msra.mxu0 0
      %1636 = vmatprep.subr.bf16.mxu0 0
      %1637 = vmatpush1.bf16.msra.mxu0 0
      %1638 = vmatprep.subr.bf16.mxu0 0
      %1639 = vmatpush1.bf16.msra.mxu0 0
      %1640 = vmatprep.subr.bf16.mxu0 0
      %1641 = vmatpush1.bf16.msra.mxu0 0
      %1642 = vmatprep.subr.bf16.mxu0 0
      %1643 = vmatpush1.bf16.msra.mxu0 0
      %1644 = vmatprep.subr.bf16.mxu0 0
      %1645 = vmatpush1.bf16.msra.mxu0 0
      %1646 = vmatprep.mubr.bf16.mxu0 0
      %1647 = vmatmul.mubr.bf16.gmra.mrb[0].mxu0 %v1612
      %v1648 = vpop.f32.mrb[0].mxu0
      %v1649 = vadd.f32 0.0, %v1648
      %v1650 = vpop.f32.mrb[0].mxu0
      %v1651 = vpop.f32.mrb[0].mxu0
      %v1652 = vadd.f32 0.0, %v1651
      %v1653 = vpop.f32.mrb[0].mxu0
      %1654 = vdwg.mxu0
      %v1655 = vpack.c.bf16 %v1652, %v1649
      %s1656 = scalar_lea.vmem %s4, 448
      %v1657 = vld [vmem:[%s1656] sm:$0xf]
      %v1658 = vld [vmem:[%s1656 + $0x4] sm:$0xf]
      %v1659 = vld [vmem:[%s1656 + $0x8] sm:$0xf]
      %v1660 = vld [vmem:[%s1656 + $0xc] sm:$0xf]
      %v1661 = vld [vmem:[%s1656 + $0x10] sm:$0xf]
      %v1662 = vld [vmem:[%s1656 + $0x14] sm:$0xf]
      %v1663 = vld [vmem:[%s1656 + $0x18] sm:$0xf]
      %v1664 = vld [vmem:[%s1656 + $0x1c] sm:$0xf]
      %v1665 = vld [vmem:[%s1656 + $0x20] sm:$0xf]
      %v1666 = vld [vmem:[%s1656 + $0x24] sm:$0xf]
      %v1667 = vld [vmem:[%s1656 + $0x28] sm:$0xf]
      %v1668 = vld [vmem:[%s1656 + $0x2c] sm:$0xf]
      %v1669 = vld [vmem:[%s1656 + $0x30] sm:$0xf]
      %v1670 = vld [vmem:[%s1656 + $0x34] sm:$0xf]
      %v1671 = vld [vmem:[%s1656 + $0x38] sm:$0xf]
      %v1672 = vld [vmem:[%s1656 + $0x3c] sm:$0xf]
      %v1689 = vunpack.c.l.b16 %v1657
      %v1690 = vunpack.c.l.b16 %v1658
      %v1691 = vunpack.c.l.b16 %v1659
      %v1692 = vunpack.c.l.b16 %v1660
      %v1693 = vunpack.c.l.b16 %v1661
      %v1694 = vunpack.c.l.b16 %v1662
      %v1695 = vunpack.c.l.b16 %v1663
      %v1696 = vunpack.c.l.b16 %v1664
      %v1697 = vunpack.c.l.b16 %v1665
      %v1698 = vunpack.c.l.b16 %v1666
      %v1699 = vunpack.c.l.b16 %v1667
      %v1700 = vunpack.c.l.b16 %v1668
      %v1701 = vunpack.c.l.b16 %v1669
      %v1702 = vunpack.c.l.b16 %v1670
      %v1703 = vunpack.c.l.b16 %v1671
      %v1704 = vunpack.c.l.b16 %v1672
      %v1705 = vpack.c.b16 %v1690, %v1689
      %v1706 = vpack.c.b16 %v1692, %v1691
      %v1707 = vpack.c.b16 %v1694, %v1693
      %v1708 = vpack.c.b16 %v1696, %v1695
      %v1709 = vpack.c.b16 %v1698, %v1697
      %v1710 = vpack.c.b16 %v1700, %v1699
      %v1711 = vpack.c.b16 %v1702, %v1701
      %v1712 = vpack.c.b16 %v1704, %v1703
      %1721 = vmatprep.subr.bf16.mxu0 0
      %1722 = vmatpush1.bf16.msra.mxu0 %v1705
      %1723 = vmatprep.subr.bf16.mxu0 0
      %1724 = vmatpush1.bf16.msra.mxu0 %v1706
      %1725 = vmatprep.subr.bf16.mxu0 0
      %1726 = vmatpush1.bf16.msra.mxu0 %v1707
      %1727 = vmatprep.subr.bf16.mxu0 0
      %1728 = vmatpush1.bf16.msra.mxu0 %v1708
      %1729 = vmatprep.subr.bf16.mxu0 0
      %1730 = vmatpush1.bf16.msra.mxu0 %v1709
      %1731 = vmatprep.subr.bf16.mxu0 0
      %1732 = vmatpush1.bf16.msra.mxu0 %v1710
      %1733 = vmatprep.subr.bf16.mxu0 0
      %1734 = vmatpush1.bf16.msra.mxu0 %v1711
      %1735 = vmatprep.subr.bf16.mxu0 0
      %1736 = vmatpush1.bf16.msra.mxu0 %v1712
      %1737 = vmatprep.subr.bf16.mxu0 0
      %1738 = vmatpush1.bf16.msra.mxu0 0
      %1739 = vmatprep.subr.bf16.mxu0 0
      %1740 = vmatpush1.bf16.msra.mxu0 0
      %1741 = vmatprep.subr.bf16.mxu0 0
      %1742 = vmatpush1.bf16.msra.mxu0 0
      %1743 = vmatprep.subr.bf16.mxu0 0
      %1744 = vmatpush1.bf16.msra.mxu0 0
      %1745 = vmatprep.subr.bf16.mxu0 0
      %1746 = vmatpush1.bf16.msra.mxu0 0
      %1747 = vmatprep.subr.bf16.mxu0 0
      %1748 = vmatpush1.bf16.msra.mxu0 0
      %1749 = vmatprep.subr.bf16.mxu0 0
      %1750 = vmatpush1.bf16.msra.mxu0 0
      %1751 = vmatprep.subr.bf16.mxu0 0
      %1752 = vmatpush1.bf16.msra.mxu0 0
      %1753 = vmatprep.mubr.bf16.mxu0 0
      %1754 = vmatmul.mubr.bf16.gmra.mrb[0].mxu0 %v1655
      %v1755 = vpop.f32.mrb[0].mxu0
      %v1756 = vadd.f32 0.0, %v1755
      %v1757 = vpop.f32.mrb[0].mxu0
      %v1758 = vpop.f32.mrb[0].mxu0
      %v1759 = vadd.f32 0.0, %v1758
      %v1760 = vpop.f32.mrb[0].mxu0
      %1761 = vdwg.mxu0
      %v1762 = vadd.f32 %v1601, %v1756
      %v1763 = vadd.f32 %v1602, %v1759
      %s1764 = scalar_lea.vmem %s3, 64
      %v1765 = vld [vmem:[%s1764] sm:$0xf]
      %v1766 = vld [vmem:[%s1764 + $0x4] sm:$0xf]
      %v1769 = vunpack.c.l.b16 %v1765
      %v1770 = vunpack.c.l.b16 %v1766
      %v1771 = vpack.c.b16 %v1770, %v1769
      %v1773 = vsel %vm488, %v1771, 0
      %1775 = vmatprep.subr.bf16.mxu0 0
      %1776 = vmatpush1.bf16.msra.mxu0 %v477
      %1777 = vmatprep.subr.bf16.mxu0 0
      %1778 = vmatpush1.bf16.msra.mxu0 %v478
      %1779 = vmatprep.subr.bf16.mxu0 0
      %1780 = vmatpush1.bf16.msra.mxu0 %v479
      %1781 = vmatprep.subr.bf16.mxu0 0
      %1782 = vmatpush1.bf16.msra.mxu0 %v480
      %1783 = vmatprep.subr.bf16.mxu0 0
      %1784 = vmatpush1.bf16.msra.mxu0 0
      %1785 = vmatprep.subr.bf16.mxu0 0
      %1786 = vmatpush1.bf16.msra.mxu0 0
      %1787 = vmatprep.subr.bf16.mxu0 0
      %1788 = vmatpush1.bf16.msra.mxu0 0
      %1789 = vmatprep.subr.bf16.mxu0 0
      %1790 = vmatpush1.bf16.msra.mxu0 0
      %1791 = vmatprep.subr.bf16.mxu0 0
      %1792 = vmatpush1.bf16.msra.mxu0 0
      %1793 = vmatprep.subr.bf16.mxu0 0
      %1794 = vmatpush1.bf16.msra.mxu0 0
      %1795 = vmatprep.subr.bf16.mxu0 0
      %1796 = vmatpush1.bf16.msra.mxu0 0
      %1797 = vmatprep.subr.bf16.mxu0 0
      %1798 = vmatpush1.bf16.msra.mxu0 0
      %1799 = vmatprep.subr.bf16.mxu0 0
      %1800 = vmatpush1.bf16.msra.mxu0 0
      %1801 = vmatprep.subr.bf16.mxu0 0
      %1802 = vmatpush1.bf16.msra.mxu0 0
      %1803 = vmatprep.subr.bf16.mxu0 0
      %1804 = vmatpush1.bf16.msra.mxu0 0
      %1805 = vmatprep.subr.bf16.mxu0 0
      %1806 = vmatpush1.bf16.msra.mxu0 0
      %1807 = vmatprep.mubr.bf16.mxu0 0
      %1808 = vmatmul.mubr.bf16.gmra.mrb[0].mxu0 %v1773
      %v1809 = vpop.f32.mrb[0].mxu0
      %v1810 = vadd.f32 0.0, %v1809
      %v1811 = vpop.f32.mrb[0].mxu0
      %v1812 = vpop.f32.mrb[0].mxu0
      %v1813 = vadd.f32 0.0, %v1812
      %v1814 = vpop.f32.mrb[0].mxu0
      %1815 = vdwg.mxu0
      %v1816 = vpack.c.bf16 %v1813, %v1810
      %s1817 = scalar_lea.vmem %s4, 512
      %v1818 = vld [vmem:[%s1817] sm:$0xf]
      %v1819 = vld [vmem:[%s1817 + $0x4] sm:$0xf]
      %v1820 = vld [vmem:[%s1817 + $0x8] sm:$0xf]
      %v1821 = vld [vmem:[%s1817 + $0xc] sm:$0xf]
      %v1822 = vld [vmem:[%s1817 + $0x10] sm:$0xf]
      %v1823 = vld [vmem:[%s1817 + $0x14] sm:$0xf]
      %v1824 = vld [vmem:[%s1817 + $0x18] sm:$0xf]
      %v1825 = vld [vmem:[%s1817 + $0x1c] sm:$0xf]
      %v1826 = vld [vmem:[%s1817 + $0x20] sm:$0xf]
      %v1827 = vld [vmem:[%s1817 + $0x24] sm:$0xf]
      %v1828 = vld [vmem:[%s1817 + $0x28] sm:$0xf]
      %v1829 = vld [vmem:[%s1817 + $0x2c] sm:$0xf]
      %v1830 = vld [vmem:[%s1817 + $0x30] sm:$0xf]
      %v1831 = vld [vmem:[%s1817 + $0x34] sm:$0xf]
      %v1832 = vld [vmem:[%s1817 + $0x38] sm:$0xf]
      %v1833 = vld [vmem:[%s1817 + $0x3c] sm:$0xf]
      %v1850 = vunpack.c.l.b16 %v1818
      %v1851 = vunpack.c.l.b16 %v1819
      %v1852 = vunpack.c.l.b16 %v1820
      %v1853 = vunpack.c.l.b16 %v1821
      %v1854 = vunpack.c.l.b16 %v1822
      %v1855 = vunpack.c.l.b16 %v1823
      %v1856 = vunpack.c.l.b16 %v1824
      %v1857 = vunpack.c.l.b16 %v1825
      %v1858 = vunpack.c.l.b16 %v1826
      %v1859 = vunpack.c.l.b16 %v1827
      %v1860 = vunpack.c.l.b16 %v1828
      %v1861 = vunpack.c.l.b16 %v1829
      %v1862 = vunpack.c.l.b16 %v1830
      %v1863 = vunpack.c.l.b16 %v1831
      %v1864 = vunpack.c.l.b16 %v1832
      %v1865 = vunpack.c.l.b16 %v1833
      %v1866 = vpack.c.b16 %v1851, %v1850
      %v1867 = vpack.c.b16 %v1853, %v1852
      %v1868 = vpack.c.b16 %v1855, %v1854
      %v1869 = vpack.c.b16 %v1857, %v1856
      %v1870 = vpack.c.b16 %v1859, %v1858
      %v1871 = vpack.c.b16 %v1861, %v1860
      %v1872 = vpack.c.b16 %v1863, %v1862
      %v1873 = vpack.c.b16 %v1865, %v1864
      %1882 = vmatprep.subr.bf16.mxu0 0
      %1883 = vmatpush1.bf16.msra.mxu0 %v1866
      %1884 = vmatprep.subr.bf16.mxu0 0
      %1885 = vmatpush1.bf16.msra.mxu0 %v1867
      %1886 = vmatprep.subr.bf16.mxu0 0
      %1887 = vmatpush1.bf16.msra.mxu0 %v1868
      %1888 = vmatprep.subr.bf16.mxu0 0
      %1889 = vmatpush1.bf16.msra.mxu0 %v1869
      %1890 = vmatprep.subr.bf16.mxu0 0
      %1891 = vmatpush1.bf16.msra.mxu0 %v1870
      %1892 = vmatprep.subr.bf16.mxu0 0
      %1893 = vmatpush1.bf16.msra.mxu0 %v1871
      %1894 = vmatprep.subr.bf16.mxu0 0
      %1895 = vmatpush1.bf16.msra.mxu0 %v1872
      %1896 = vmatprep.subr.bf16.mxu0 0
      %1897 = vmatpush1.bf16.msra.mxu0 %v1873
      %1898 = vmatprep.subr.bf16.mxu0 0
      %1899 = vmatpush1.bf16.msra.mxu0 0
      %1900 = vmatprep.subr.bf16.mxu0 0
      %1901 = vmatpush1.bf16.msra.mxu0 0
      %1902 = vmatprep.subr.bf16.mxu0 0
      %1903 = vmatpush1.bf16.msra.mxu0 0
      %1904 = vmatprep.subr.bf16.mxu0 0
      %1905 = vmatpush1.bf16.msra.mxu0 0
      %1906 = vmatprep.subr.bf16.mxu0 0
      %1907 = vmatpush1.bf16.msra.mxu0 0
      %1908 = vmatprep.subr.bf16.mxu0 0
      %1909 = vmatpush1.bf16.msra.mxu0 0
      %1910 = vmatprep.subr.bf16.mxu0 0
      %1911 = vmatpush1.bf16.msra.mxu0 0
      %1912 = vmatprep.subr.bf16.mxu0 0
      %1913 = vmatpush1.bf16.msra.mxu0 0
      %1914 = vmatprep.mubr.bf16.mxu0 0
      %1915 = vmatmul.mubr.bf16.gmra.mrb[0].mxu0 %v1816
      %v1916 = vpop.f32.mrb[0].mxu0
      %v1917 = vadd.f32 0.0, %v1916
      %v1918 = vpop.f32.mrb[0].mxu0
      %v1919 = vpop.f32.mrb[0].mxu0
      %v1920 = vadd.f32 0.0, %v1919
      %v1921 = vpop.f32.mrb[0].mxu0
      %1922 = vdwg.mxu0
      %v1923 = vadd.f32 %v1762, %v1917
      %v1924 = vadd.f32 %v1763, %v1920
      %v1925 = vld [vmem:[%s5] sm:$0x1]
      %v1927 = vlaneseq
      %v1928 = vshrl.u32 %v1927, 7
      %v1929 = vsub.s32 0, %v1928
      %v1930 = vrot.slane %v1925, %v1929
      %v1932 = vadd.f32 %v1923, %v1930
      %v1933 = vadd.f32 %v1924, %v1930
      %v1934 = vmax.f32 %v1932, 0.0
      %v1935 = vmax.f32 %v1933, 0.0
      %v1936 = vpack.c.bf16 %v1935, %v1934
      %v1937 = vld [vmem:[%s6] sm:$0x3]
      %vm1938 = vcmask 130048
      %v1940 = vsel %vm1938, %v1937, 0
      %1942 = vmatprep.subr.bf16.mxu0 0
      %1943 = vmatpush1.bf16.msra.mxu0 %v1936
      %1944 = vmatprep.subr.bf16.mxu0 0
      %1945 = vmatpush1.bf16.msra.mxu0 0
      %1946 = vmatprep.subr.bf16.mxu0 0
      %1947 = vmatpush1.bf16.msra.mxu0 0
      %1948 = vmatprep.subr.bf16.mxu0 0
      %1949 = vmatpush1.bf16.msra.mxu0 0
      %1950 = vmatprep.subr.bf16.mxu0 0
      %1951 = vmatpush1.bf16.msra.mxu0 0
      %1952 = vmatprep.subr.bf16.mxu0 0
      %1953 = vmatpush1.bf16.msra.mxu0 0
      %1954 = vmatprep.subr.bf16.mxu0 0
      %1955 = vmatpush1.bf16.msra.mxu0 0
      %1956 = vmatprep.subr.bf16.mxu0 0
      %1957 = vmatpush1.bf16.msra.mxu0 0
      %1958 = vmatprep.subr.bf16.mxu0 0
      %1959 = vmatpush1.bf16.msra.mxu0 0
      %1960 = vmatprep.subr.bf16.mxu0 0
      %1961 = vmatpush1.bf16.msra.mxu0 0
      %1962 = vmatprep.subr.bf16.mxu0 0
      %1963 = vmatpush1.bf16.msra.mxu0 0
      %1964 = vmatprep.subr.bf16.mxu0 0
      %1965 = vmatpush1.bf16.msra.mxu0 0
      %1966 = vmatprep.subr.bf16.mxu0 0
      %1967 = vmatpush1.bf16.msra.mxu0 0
      %1968 = vmatprep.subr.bf16.mxu0 0
      %1969 = vmatpush1.bf16.msra.mxu0 0
      %1970 = vmatprep.subr.bf16.mxu0 0
      %1971 = vmatpush1.bf16.msra.mxu0 0
      %1972 = vmatprep.subr.bf16.mxu0 0
      %1973 = vmatpush1.bf16.msra.mxu0 0
      %1974 = vmatprep.mubr.bf16.mxu0 0
      %1975 = vmatmul.mubr.bf16.gmra.mrb[0].mxu0 %v1940
      %v1976 = vpop.f32.mrb[0].mxu0
      %v1977 = vadd.f32 0.0, %v1976
      %v1978 = vpop.f32.mrb[0].mxu0
      %v1979 = vpop.f32.mrb[0].mxu0
      %v1980 = vpop.f32.mrb[0].mxu0
      %1981 = vdwg.mxu0
      %v1982 = vpack.c.bf16 %v1977, %v1977
      %v1983 = vld [vmem:[%s7] sm:$0xff]
      %v1984 = vld [vmem:[%s7 + $0x8] sm:$0xff]
      %v1985 = vld [vmem:[%s7 + $0x10] sm:$0xff]
      %v1986 = vld [vmem:[%s7 + $0x18] sm:$0xff]
      %v1987 = vld [vmem:[%s7 + $0x20] sm:$0xff]
      %v1988 = vld [vmem:[%s7 + $0x28] sm:$0xff]
      %v1989 = vld [vmem:[%s7 + $0x30] sm:$0xff]
      %v1990 = vld [vmem:[%s7 + $0x38] sm:$0xff]
      %v1991 = vld [vmem:[%s7 + $0x40] sm:$0xff]
      %v1992 = vld [vmem:[%s7 + $0x48] sm:$0xff]
      %v1993 = vld [vmem:[%s7 + $0x50] sm:$0xff]
      %v1994 = vld [vmem:[%s7 + $0x58] sm:$0xff]
      %v1995 = vld [vmem:[%s7 + $0x60] sm:$0xff]
      %v1996 = vld [vmem:[%s7 + $0x68] sm:$0xff]
      %v1997 = vld [vmem:[%s7 + $0x70] sm:$0xff]
      %v1998 = vld [vmem:[%s7 + $0x78] sm:$0xff]
      %s1999 = scalar_lea.vmem %s6, 2
      %v2000 = vld [vmem:[%s1999] sm:$0x3]
      %v2002 = vsel %vm1938, %v2000, 0
      %2004 = vmatprep.subr.bf16.mxu0 0
      %2005 = vmatpush1.bf16.msra.mxu0 %v1936
      %2006 = vmatprep.subr.bf16.mxu0 0
      %2007 = vmatpush1.bf16.msra.mxu0 0
      %2008 = vmatprep.subr.bf16.mxu0 0
      %2009 = vmatpush1.bf16.msra.mxu0 0
      %2010 = vmatprep.subr.bf16.mxu0 0
      %2011 = vmatpush1.bf16.msra.mxu0 0
      %2012 = vmatprep.subr.bf16.mxu0 0
      %2013 = vmatpush1.bf16.msra.mxu0 0
      %2014 = vmatprep.subr.bf16.mxu0 0
      %2015 = vmatpush1.bf16.msra.mxu0 0
      %2016 = vmatprep.subr.bf16.mxu0 0
      %2017 = vmatpush1.bf16.msra.mxu0 0
      %2018 = vmatprep.subr.bf16.mxu0 0
      %2019 = vmatpush1.bf16.msra.mxu0 0
      %2020 = vmatprep.subr.bf16.mxu0 0
      %2021 = vmatpush1.bf16.msra.mxu0 0
      %2022 = vmatprep.subr.bf16.mxu0 0
      %2023 = vmatpush1.bf16.msra.mxu0 0
      %2024 = vmatprep.subr.bf16.mxu0 0
      %2025 = vmatpush1.bf16.msra.mxu0 0
      %2026 = vmatprep.subr.bf16.mxu0 0
      %2027 = vmatpush1.bf16.msra.mxu0 0
      %2028 = vmatprep.subr.bf16.mxu0 0
      %2029 = vmatpush1.bf16.msra.mxu0 0
      %2030 = vmatprep.subr.bf16.mxu0 0
      %2031 = vmatpush1.bf16.msra.mxu0 0
      %2032 = vmatprep.subr.bf16.mxu0 0
      %2033 = vmatpush1.bf16.msra.mxu0 0
      %2034 = vmatprep.subr.bf16.mxu0 0
      %2035 = vmatpush1.bf16.msra.mxu0 0
      %2036 = vmatprep.mubr.bf16.mxu0 0
      %2037 = vmatmul.mubr.bf16.gmra.mrb[0].mxu0 %v2002
      %v2038 = vpop.f32.mrb[0].mxu0
      %v2039 = vadd.f32 0.0, %v2038
      %v2040 = vpop.f32.mrb[0].mxu0
      %v2041 = vpop.f32.mrb[0].mxu0
      %v2042 = vpop.f32.mrb[0].mxu0
      %2043 = vdwg.mxu0
      %v2044 = vpack.c.bf16 %v2039, %v2039
      %s2045 = scalar_lea.vmem %s7, 128
      %v2046 = vld [vmem:[%s2045] sm:$0xff]
      %v2047 = vld [vmem:[%s2045 + $0x8] sm:$0xff]
      %v2048 = vld [vmem:[%s2045 + $0x10] sm:$0xff]
      %v2049 = vld [vmem:[%s2045 + $0x18] sm:$0xff]
      %v2050 = vld [vmem:[%s2045 + $0x20] sm:$0xff]
      %v2051 = vld [vmem:[%s2045 + $0x28] sm:$0xff]
      %v2052 = vld [vmem:[%s2045 + $0x30] sm:$0xff]
      %v2053 = vld [vmem:[%s2045 + $0x38] sm:$0xff]
      %v2054 = vld [vmem:[%s2045 + $0x40] sm:$0xff]
      %v2055 = vld [vmem:[%s2045 + $0x48] sm:$0xff]
      %v2056 = vld [vmem:[%s2045 + $0x50] sm:$0xff]
      %v2057 = vld [vmem:[%s2045 + $0x58] sm:$0xff]
      %v2058 = vld [vmem:[%s2045 + $0x60] sm:$0xff]
      %v2059 = vld [vmem:[%s2045 + $0x68] sm:$0xff]
      %v2060 = vld [vmem:[%s2045 + $0x70] sm:$0xff]
      %v2061 = vld [vmem:[%s2045 + $0x78] sm:$0xff]
      %v2078 = vunpack.c.l.b16 %v2046
      %v2079 = vunpack.c.h.b16 %v2046
      %v2080 = vunpack.c.l.b16 %v2047
      %v2081 = vunpack.c.h.b16 %v2047
      %v2082 = vunpack.c.l.b16 %v2048
      %v2083 = vunpack.c.h.b16 %v2048
      %v2084 = vunpack.c.l.b16 %v2049
      %v2085 = vunpack.c.h.b16 %v2049
      %v2086 = vunpack.c.l.b16 %v2050
      %v2087 = vunpack.c.h.b16 %v2050
      %v2088 = vunpack.c.l.b16 %v2051
      %v2089 = vunpack.c.h.b16 %v2051
      %v2090 = vunpack.c.l.b16 %v2052
      %v2091 = vunpack.c.h.b16 %v2052
      %v2092 = vunpack.c.l.b16 %v2053
      %v2093 = vunpack.c.h.b16 %v2053
      %v2094 = vunpack.c.l.b16 %v2054
      %v2095 = vunpack.c.h.b16 %v2054
      %v2096 = vunpack.c.l.b16 %v2055
      %v2097 = vunpack.c.h.b16 %v2055
      %v2098 = vunpack.c.l.b16 %v2056
      %v2099 = vunpack.c.h.b16 %v2056
      %v2100 = vunpack.c.l.b16 %v2057
      %v2101 = vunpack.c.h.b16 %v2057
      %v2102 = vunpack.c.l.b16 %v2058
      %v2103 = vunpack.c.h.b16 %v2058
      %v2104 = vunpack.c.l.b16 %v2059
      %v2105 = vunpack.c.h.b16 %v2059
      %v2106 = vunpack.c.l.b16 %v2060
      %v2107 = vunpack.c.h.b16 %v2060
      %v2108 = vunpack.c.l.b16 %v2061
      %v2109 = vunpack.c.h.b16 %v2061
      %v2110 = vpack.c.b16 %v2080, %v2078
      %v2111 = vpack.c.b16 %v2081, %v2079
      %v2112 = vpack.c.b16 %v2084, %v2082
      %v2113 = vpack.c.b16 %v2085, %v2083
      %v2114 = vpack.c.b16 %v2088, %v2086
      %v2115 = vpack.c.b16 %v2089, %v2087
      %v2116 = vpack.c.b16 %v2092, %v2090
      %v2117 = vpack.c.b16 %v2093, %v2091
      %v2118 = vpack.c.b16 %v2096, %v2094
      %v2119 = vpack.c.b16 %v2097, %v2095
      %v2120 = vpack.c.b16 %v2100, %v2098
      %v2121 = vpack.c.b16 %v2101, %v2099
      %v2122 = vpack.c.b16 %v2104, %v2102
      %v2123 = vpack.c.b16 %v2105, %v2103
      %v2124 = vpack.c.b16 %v2108, %v2106
      %v2125 = vpack.c.b16 %v2109, %v2107
      %2142 = vmatprep.subr.bf16.mxu0 %v2111
      %2143 = vmatpush1.bf16.msra.mxu0 %v2110
      %2144 = vmatprep.subr.bf16.mxu0 %v2113
      %2145 = vmatpush1.bf16.msra.mxu0 %v2112
      %2146 = vmatprep.subr.bf16.mxu0 %v2115
      %2147 = vmatpush1.bf16.msra.mxu0 %v2114
      %2148 = vmatprep.subr.bf16.mxu0 %v2117
      %2149 = vmatpush1.bf16.msra.mxu0 %v2116
      %2150 = vmatprep.subr.bf16.mxu0 %v2119
      %2151 = vmatpush1.bf16.msra.mxu0 %v2118
      %2152 = vmatprep.subr.bf16.mxu0 %v2121
      %2153 = vmatpush1.bf16.msra.mxu0 %v2120
      %2154 = vmatprep.subr.bf16.mxu0 %v2123
      %2155 = vmatpush1.bf16.msra.mxu0 %v2122
      %2156 = vmatprep.subr.bf16.mxu0 %v2125
      %2157 = vmatpush1.bf16.msra.mxu0 %v2124
      %2158 = vmatprep.subr.bf16.mxu0 0
      %2159 = vmatpush1.bf16.msra.mxu0 0
      %2160 = vmatprep.subr.bf16.mxu0 0
      %2161 = vmatpush1.bf16.msra.mxu0 0
      %2162 = vmatprep.subr.bf16.mxu0 0
      %2163 = vmatpush1.bf16.msra.mxu0 0
      %2164 = vmatprep.subr.bf16.mxu0 0
      %2165 = vmatpush1.bf16.msra.mxu0 0
      %2166 = vmatprep.subr.bf16.mxu0 0
      %2167 = vmatpush1.bf16.msra.mxu0 0
      %2168 = vmatprep.subr.bf16.mxu0 0
      %2169 = vmatpush1.bf16.msra.mxu0 0
      %2170 = vmatprep.subr.bf16.mxu0 0
      %2171 = vmatpush1.bf16.msra.mxu0 0
      %2172 = vmatprep.subr.bf16.mxu0 0
      %2173 = vmatpush1.bf16.msra.mxu0 0
      %2174 = vmatprep.mubr.bf16.mxu0 0
      %2175 = vmatmul.mubr.bf16.gmra.mrb[0].mxu0 %v2044
      %v2176 = vpop.f32.mrb[0].mxu0
      %v2177 = vadd.f32 0.0, %v2176
      %v2178 = vpop.f32.mrb[0].mxu0
      %v2179 = vadd.f32 0.0, %v2178
      %v2180 = vpop.f32.mrb[0].mxu0
      %v2181 = vpop.f32.mrb[0].mxu0
      %2182 = vdwg.mxu0
      %v2199 = vunpack.c.l.b16 %v1983
      %v2200 = vunpack.c.h.b16 %v1983
      %v2201 = vunpack.c.l.b16 %v1984
      %v2202 = vunpack.c.h.b16 %v1984
      %v2203 = vunpack.c.l.b16 %v1985
      %v2204 = vunpack.c.h.b16 %v1985
      %v2205 = vunpack.c.l.b16 %v1986
      %v2206 = vunpack.c.h.b16 %v1986
      %v2207 = vunpack.c.l.b16 %v1987
      %v2208 = vunpack.c.h.b16 %v1987
      %v2209 = vunpack.c.l.b16 %v1988
      %v2210 = vunpack.c.h.b16 %v1988
      %v2211 = vunpack.c.l.b16 %v1989
      %v2212 = vunpack.c.h.b16 %v1989
      %v2213 = vunpack.c.l.b16 %v1990
      %v2214 = vunpack.c.h.b16 %v1990
      %v2215 = vunpack.c.l.b16 %v1991
      %v2216 = vunpack.c.h.b16 %v1991
      %v2217 = vunpack.c.l.b16 %v1992
      %v2218 = vunpack.c.h.b16 %v1992
      %v2219 = vunpack.c.l.b16 %v1993
      %v2220 = vunpack.c.h.b16 %v1993
      %v2221 = vunpack.c.l.b16 %v1994
      %v2222 = vunpack.c.h.b16 %v1994
      %v2223 = vunpack.c.l.b16 %v1995
      %v2224 = vunpack.c.h.b16 %v1995
      %v2225 = vunpack.c.l.b16 %v1996
      %v2226 = vunpack.c.h.b16 %v1996
      %v2227 = vunpack.c.l.b16 %v1997
      %v2228 = vunpack.c.h.b16 %v1997
      %v2229 = vunpack.c.l.b16 %v1998
      %v2230 = vunpack.c.h.b16 %v1998
      %v2231 = vpack.c.b16 %v2201, %v2199
      %v2232 = vpack.c.b16 %v2202, %v2200
      %v2233 = vpack.c.b16 %v2205, %v2203
      %v2234 = vpack.c.b16 %v2206, %v2204
      %v2235 = vpack.c.b16 %v2209, %v2207
      %v2236 = vpack.c.b16 %v2210, %v2208
      %v2237 = vpack.c.b16 %v2213, %v2211
      %v2238 = vpack.c.b16 %v2214, %v2212
      %v2239 = vpack.c.b16 %v2217, %v2215
      %v2240 = vpack.c.b16 %v2218, %v2216
      %v2241 = vpack.c.b16 %v2221, %v2219
      %v2242 = vpack.c.b16 %v2222, %v2220
      %v2243 = vpack.c.b16 %v2225, %v2223
      %v2244 = vpack.c.b16 %v2226, %v2224
      %v2245 = vpack.c.b16 %v2229, %v2227
      %v2246 = vpack.c.b16 %v2230, %v2228
      %2263 = vmatprep.subr.bf16.mxu0 %v2232
      %2264 = vmatpush1.bf16.msra.mxu0 %v2231
      %2265 = vmatprep.subr.bf16.mxu0 %v2234
      %2266 = vmatpush1.bf16.msra.mxu0 %v2233
      %2267 = vmatprep.subr.bf16.mxu0 %v2236
      %2268 = vmatpush1.bf16.msra.mxu0 %v2235
      %2269 = vmatprep.subr.bf16.mxu0 %v2238
      %2270 = vmatpush1.bf16.msra.mxu0 %v2237
      %2271 = vmatprep.subr.bf16.mxu0 %v2240
      %2272 = vmatpush1.bf16.msra.mxu0 %v2239
      %2273 = vmatprep.subr.bf16.mxu0 %v2242
      %2274 = vmatpush1.bf16.msra.mxu0 %v2241
      %2275 = vmatprep.subr.bf16.mxu0 %v2244
      %2276 = vmatpush1.bf16.msra.mxu0 %v2243
      %2277 = vmatprep.subr.bf16.mxu0 %v2246
      %2278 = vmatpush1.bf16.msra.mxu0 %v2245
      %2279 = vmatprep.subr.bf16.mxu0 0
      %2280 = vmatpush1.bf16.msra.mxu0 0
      %2281 = vmatprep.subr.bf16.mxu0 0
      %2282 = vmatpush1.bf16.msra.mxu0 0
      %2283 = vmatprep.subr.bf16.mxu0 0
      %2284 = vmatpush1.bf16.msra.mxu0 0
      %2285 = vmatprep.subr.bf16.mxu0 0
      %2286 = vmatpush1.bf16.msra.mxu0 0
      %2287 = vmatprep.subr.bf16.mxu0 0
      %2288 = vmatpush1.bf16.msra.mxu0 0
      %2289 = vmatprep.subr.bf16.mxu0 0
      %2290 = vmatpush1.bf16.msra.mxu0 0
      %2291 = vmatprep.subr.bf16.mxu0 0
      %2292 = vmatpush1.bf16.msra.mxu0 0
      %2293 = vmatprep.subr.bf16.mxu0 0
      %2294 = vmatpush1.bf16.msra.mxu0 0
      %2295 = vmatprep.mubr.bf16.mxu0 0
      %2296 = vmatmul.mubr.bf16.gmra.mrb[0].mxu0 %v1982
      %v2297 = vpop.f32.mrb[0].mxu0
      %v2298 = vadd.f32 %v2177, %v2297
      %v2299 = vpop.f32.mrb[0].mxu0
      %v2300 = vadd.f32 %v2179, %v2299
      %v2301 = vpop.f32.mrb[0].mxu0
      %v2302 = vpop.f32.mrb[0].mxu0
      %2303 = vdwg.mxu0
      %s2304 = scalar_lea.vmem %s6, 4
      %v2305 = vld [vmem:[%s2304] sm:$0x3]
      %v2307 = vsel %vm1938, %v2305, 0
      %2309 = vmatprep.subr.bf16.mxu0 0
      %2310 = vmatpush1.bf16.msra.mxu0 %v1936
      %2311 = vmatprep.subr.bf16.mxu0 0
      %2312 = vmatpush1.bf16.msra.mxu0 0
      %2313 = vmatprep.subr.bf16.mxu0 0
      %2314 = vmatpush1.bf16.msra.mxu0 0
      %2315 = vmatprep.subr.bf16.mxu0 0
      %2316 = vmatpush1.bf16.msra.mxu0 0
      %2317 = vmatprep.subr.bf16.mxu0 0
      %2318 = vmatpush1.bf16.msra.mxu0 0
      %2319 = vmatprep.subr.bf16.mxu0 0
      %2320 = vmatpush1.bf16.msra.mxu0 0
      %2321 = vmatprep.subr.bf16.mxu0 0
      %2322 = vmatpush1.bf16.msra.mxu0 0
      %2323 = vmatprep.subr.bf16.mxu0 0
      %2324 = vmatpush1.bf16.msra.mxu0 0
      %2325 = vmatprep.subr.bf16.mxu0 0
      %2326 = vmatpush1.bf16.msra.mxu0 0
      %2327 = vmatprep.subr.bf16.mxu0 0
      %2328 = vmatpush1.bf16.msra.mxu0 0
      %2329 = vmatprep.subr.bf16.mxu0 0
      %2330 = vmatpush1.bf16.msra.mxu0 0
      %2331 = vmatprep.subr.bf16.mxu0 0
      %2332 = vmatpush1.bf16.msra.mxu0 0
      %2333 = vmatprep.subr.bf16.mxu0 0
      %2334 = vmatpush1.bf16.msra.mxu0 0
      %2335 = vmatprep.subr.bf16.mxu0 0
      %2336 = vmatpush1.bf16.msra.mxu0 0
      %2337 = vmatprep.subr.bf16.mxu0 0
      %2338 = vmatpush1.bf16.msra.mxu0 0
      %2339 = vmatprep.subr.bf16.mxu0 0
      %2340 = vmatpush1.bf16.msra.mxu0 0
      %2341 = vmatprep.mubr.bf16.mxu0 0
      %2342 = vmatmul.mubr.bf16.gmra.mrb[0].mxu0 %v2307
      %v2343 = vpop.f32.mrb[0].mxu0
      %v2344 = vadd.f32 0.0, %v2343
      %v2345 = vpop.f32.mrb[0].mxu0
      %v2346 = vpop.f32.mrb[0].mxu0
      %v2347 = vpop.f32.mrb[0].mxu0
      %2348 = vdwg.mxu0
      %v2349 = vpack.c.bf16 %v2344, %v2344
      %s2350 = scalar_lea.vmem %s7, 256
      %v2351 = vld [vmem:[%s2350] sm:$0xff]
      %v2352 = vld [vmem:[%s2350 + $0x8] sm:$0xff]
      %v2353 = vld [vmem:[%s2350 + $0x10] sm:$0xff]
      %v2354 = vld [vmem:[%s2350 + $0x18] sm:$0xff]
      %v2355 = vld [vmem:[%s2350 + $0x20] sm:$0xff]
      %v2356 = vld [vmem:[%s2350 + $0x28] sm:$0xff]
      %v2357 = vld [vmem:[%s2350 + $0x30] sm:$0xff]
      %v2358 = vld [vmem:[%s2350 + $0x38] sm:$0xff]
      %v2359 = vld [vmem:[%s2350 + $0x40] sm:$0xff]
      %v2360 = vld [vmem:[%s2350 + $0x48] sm:$0xff]
      %v2361 = vld [vmem:[%s2350 + $0x50] sm:$0xff]
      %v2362 = vld [vmem:[%s2350 + $0x58] sm:$0xff]
      %v2363 = vld [vmem:[%s2350 + $0x60] sm:$0xff]
      %v2364 = vld [vmem:[%s2350 + $0x68] sm:$0xff]
      %v2365 = vld [vmem:[%s2350 + $0x70] sm:$0xff]
      %v2366 = vld [vmem:[%s2350 + $0x78] sm:$0xff]
      %v2383 = vunpack.c.l.b16 %v2351
      %v2384 = vunpack.c.h.b16 %v2351
      %v2385 = vunpack.c.l.b16 %v2352
      %v2386 = vunpack.c.h.b16 %v2352
      %v2387 = vunpack.c.l.b16 %v2353
      %v2388 = vunpack.c.h.b16 %v2353
      %v2389 = vunpack.c.l.b16 %v2354
      %v2390 = vunpack.c.h.b16 %v2354
      %v2391 = vunpack.c.l.b16 %v2355
      %v2392 = vunpack.c.h.b16 %v2355
      %v2393 = vunpack.c.l.b16 %v2356
      %v2394 = vunpack.c.h.b16 %v2356
      %v2395 = vunpack.c.l.b16 %v2357
      %v2396 = vunpack.c.h.b16 %v2357
      %v2397 = vunpack.c.l.b16 %v2358
      %v2398 = vunpack.c.h.b16 %v2358
      %v2399 = vunpack.c.l.b16 %v2359
      %v2400 = vunpack.c.h.b16 %v2359
      %v2401 = vunpack.c.l.b16 %v2360
      %v2402 = vunpack.c.h.b16 %v2360
      %v2403 = vunpack.c.l.b16 %v2361
      %v2404 = vunpack.c.h.b16 %v2361
      %v2405 = vunpack.c.l.b16 %v2362
      %v2406 = vunpack.c.h.b16 %v2362
      %v2407 = vunpack.c.l.b16 %v2363
      %v2408 = vunpack.c.h.b16 %v2363
      %v2409 = vunpack.c.l.b16 %v2364
      %v2410 = vunpack.c.h.b16 %v2364
      %v2411 = vunpack.c.l.b16 %v2365
      %v2412 = vunpack.c.h.b16 %v2365
      %v2413 = vunpack.c.l.b16 %v2366
      %v2414 = vunpack.c.h.b16 %v2366
      %v2415 = vpack.c.b16 %v2385, %v2383
      %v2416 = vpack.c.b16 %v2386, %v2384
      %v2417 = vpack.c.b16 %v2389, %v2387
      %v2418 = vpack.c.b16 %v2390, %v2388
      %v2419 = vpack.c.b16 %v2393, %v2391
      %v2420 = vpack.c.b16 %v2394, %v2392
      %v2421 = vpack.c.b16 %v2397, %v2395
      %v2422 = vpack.c.b16 %v2398, %v2396
      %v2423 = vpack.c.b16 %v2401, %v2399
      %v2424 = vpack.c.b16 %v2402, %v2400
      %v2425 = vpack.c.b16 %v2405, %v2403
      %v2426 = vpack.c.b16 %v2406, %v2404
      %v2427 = vpack.c.b16 %v2409, %v2407
      %v2428 = vpack.c.b16 %v2410, %v2408
      %v2429 = vpack.c.b16 %v2413, %v2411
      %v2430 = vpack.c.b16 %v2414, %v2412
      %2447 = vmatprep.subr.bf16.mxu0 %v2416
      %2448 = vmatpush1.bf16.msra.mxu0 %v2415
      %2449 = vmatprep.subr.bf16.mxu0 %v2418
      %2450 = vmatpush1.bf16.msra.mxu0 %v2417
      %2451 = vmatprep.subr.bf16.mxu0 %v2420
      %2452 = vmatpush1.bf16.msra.mxu0 %v2419
      %2453 = vmatprep.subr.bf16.mxu0 %v2422
      %2454 = vmatpush1.bf16.msra.mxu0 %v2421
      %2455 = vmatprep.subr.bf16.mxu0 %v2424
      %2456 = vmatpush1.bf16.msra.mxu0 %v2423
      %2457 = vmatprep.subr.bf16.mxu0 %v2426
      %2458 = vmatpush1.bf16.msra.mxu0 %v2425
      %2459 = vmatprep.subr.bf16.mxu0 %v2428
      %2460 = vmatpush1.bf16.msra.mxu0 %v2427
      %2461 = vmatprep.subr.bf16.mxu0 %v2430
      %2462 = vmatpush1.bf16.msra.mxu0 %v2429
      %2463 = vmatprep.subr.bf16.mxu0 0
      %2464 = vmatpush1.bf16.msra.mxu0 0
      %2465 = vmatprep.subr.bf16.mxu0 0
      %2466 = vmatpush1.bf16.msra.mxu0 0
      %2467 = vmatprep.subr.bf16.mxu0 0
      %2468 = vmatpush1.bf16.msra.mxu0 0
      %2469 = vmatprep.subr.bf16.mxu0 0
      %2470 = vmatpush1.bf16.msra.mxu0 0
      %2471 = vmatprep.subr.bf16.mxu0 0
      %2472 = vmatpush1.bf16.msra.mxu0 0
      %2473 = vmatprep.subr.bf16.mxu0 0
      %2474 = vmatpush1.bf16.msra.mxu0 0
      %2475 = vmatprep.subr.bf16.mxu0 0
      %2476 = vmatpush1.bf16.msra.mxu0 0
      %2477 = vmatprep.subr.bf16.mxu0 0
      %2478 = vmatpush1.bf16.msra.mxu0 0
      %2479 = vmatprep.mubr.bf16.mxu0 0
      %2480 = vmatmul.mubr.bf16.gmra.mrb[0].mxu0 %v2349
      %v2481 = vpop.f32.mrb[0].mxu0
      %v2482 = vadd.f32 0.0, %v2481
      %v2483 = vpop.f32.mrb[0].mxu0
      %v2484 = vadd.f32 0.0, %v2483
      %v2485 = vpop.f32.mrb[0].mxu0
      %v2486 = vpop.f32.mrb[0].mxu0
      %2487 = vdwg.mxu0
      %v2488 = vadd.f32 %v2298, %v2482
      %v2489 = vadd.f32 %v2300, %v2484
      %s2490 = scalar_lea.vmem %s6, 6
      %v2491 = vld [vmem:[%s2490] sm:$0x3]
      %v2493 = vsel %vm1938, %v2491, 0
      %2495 = vmatprep.subr.bf16.mxu0 0
      %2496 = vmatpush1.bf16.msra.mxu0 %v1936
      %2497 = vmatprep.subr.bf16.mxu0 0
      %2498 = vmatpush1.bf16.msra.mxu0 0
      %2499 = vmatprep.subr.bf16.mxu0 0
      %2500 = vmatpush1.bf16.msra.mxu0 0
      %2501 = vmatprep.subr.bf16.mxu0 0
      %2502 = vmatpush1.bf16.msra.mxu0 0
      %2503 = vmatprep.subr.bf16.mxu0 0
      %2504 = vmatpush1.bf16.msra.mxu0 0
      %2505 = vmatprep.subr.bf16.mxu0 0
      %2506 = vmatpush1.bf16.msra.mxu0 0
      %2507 = vmatprep.subr.bf16.mxu0 0
      %2508 = vmatpush1.bf16.msra.mxu0 0
      %2509 = vmatprep.subr.bf16.mxu0 0
      %2510 = vmatpush1.bf16.msra.mxu0 0
      %2511 = vmatprep.subr.bf16.mxu0 0
      %2512 = vmatpush1.bf16.msra.mxu0 0
      %2513 = vmatprep.subr.bf16.mxu0 0
      %2514 = vmatpush1.bf16.msra.mxu0 0
      %2515 = vmatprep.subr.bf16.mxu0 0
      %2516 = vmatpush1.bf16.msra.mxu0 0
      %2517 = vmatprep.subr.bf16.mxu0 0
      %2518 = vmatpush1.bf16.msra.mxu0 0
      %2519 = vmatprep.subr.bf16.mxu0 0
      %2520 = vmatpush1.bf16.msra.mxu0 0
      %2521 = vmatprep.subr.bf16.mxu0 0
      %2522 = vmatpush1.bf16.msra.mxu0 0
      %2523 = vmatprep.subr.bf16.mxu0 0
      %2524 = vmatpush1.bf16.msra.mxu0 0
      %2525 = vmatprep.subr.bf16.mxu0 0
      %2526 = vmatpush1.bf16.msra.mxu0 0
      %2527 = vmatprep.mubr.bf16.mxu0 0
      %2528 = vmatmul.mubr.bf16.gmra.mrb[0].mxu0 %v2493
      %v2529 = vpop.f32.mrb[0].mxu0
      %v2530 = vadd.f32 0.0, %v2529
      %v2531 = vpop.f32.mrb[0].mxu0
      %v2532 = vpop.f32.mrb[0].mxu0
      %v2533 = vpop.f32.mrb[0].mxu0
      %2534 = vdwg.mxu0
      %v2535 = vpack.c.bf16 %v2530, %v2530
      %s2536 = scalar_lea.vmem %s7, 384
      %v2537 = vld [vmem:[%s2536] sm:$0xff]
      %v2538 = vld [vmem:[%s2536 + $0x8] sm:$0xff]
      %v2539 = vld [vmem:[%s2536 + $0x10] sm:$0xff]
      %v2540 = vld [vmem:[%s2536 + $0x18] sm:$0xff]
      %v2541 = vld [vmem:[%s2536 + $0x20] sm:$0xff]
      %v2542 = vld [vmem:[%s2536 + $0x28] sm:$0xff]
      %v2543 = vld [vmem:[%s2536 + $0x30] sm:$0xff]
      %v2544 = vld [vmem:[%s2536 + $0x38] sm:$0xff]
      %v2545 = vld [vmem:[%s2536 + $0x40] sm:$0xff]
      %v2546 = vld [vmem:[%s2536 + $0x48] sm:$0xff]
      %v2547 = vld [vmem:[%s2536 + $0x50] sm:$0xff]
      %v2548 = vld [vmem:[%s2536 + $0x58] sm:$0xff]
      %v2549 = vld [vmem:[%s2536 + $0x60] sm:$0xff]
      %v2550 = vld [vmem:[%s2536 + $0x68] sm:$0xff]
      %v2551 = vld [vmem:[%s2536 + $0x70] sm:$0xff]
      %v2552 = vld [vmem:[%s2536 + $0x78] sm:$0xff]
      %v2569 = vunpack.c.l.b16 %v2537
      %v2570 = vunpack.c.h.b16 %v2537
      %v2571 = vunpack.c.l.b16 %v2538
      %v2572 = vunpack.c.h.b16 %v2538
      %v2573 = vunpack.c.l.b16 %v2539
      %v2574 = vunpack.c.h.b16 %v2539
      %v2575 = vunpack.c.l.b16 %v2540
      %v2576 = vunpack.c.h.b16 %v2540
      %v2577 = vunpack.c.l.b16 %v2541
      %v2578 = vunpack.c.h.b16 %v2541
      %v2579 = vunpack.c.l.b16 %v2542
      %v2580 = vunpack.c.h.b16 %v2542
      %v2581 = vunpack.c.l.b16 %v2543
      %v2582 = vunpack.c.h.b16 %v2543
      %v2583 = vunpack.c.l.b16 %v2544
      %v2584 = vunpack.c.h.b16 %v2544
      %v2585 = vunpack.c.l.b16 %v2545
      %v2586 = vunpack.c.h.b16 %v2545
      %v2587 = vunpack.c.l.b16 %v2546
      %v2588 = vunpack.c.h.b16 %v2546
      %v2589 = vunpack.c.l.b16 %v2547
      %v2590 = vunpack.c.h.b16 %v2547
      %v2591 = vunpack.c.l.b16 %v2548
      %v2592 = vunpack.c.h.b16 %v2548
      %v2593 = vunpack.c.l.b16 %v2549
      %v2594 = vunpack.c.h.b16 %v2549
      %v2595 = vunpack.c.l.b16 %v2550
      %v2596 = vunpack.c.h.b16 %v2550
      %v2597 = vunpack.c.l.b16 %v2551
      %v2598 = vunpack.c.h.b16 %v2551
      %v2599 = vunpack.c.l.b16 %v2552
      %v2600 = vunpack.c.h.b16 %v2552
      %v2601 = vpack.c.b16 %v2571, %v2569
      %v2602 = vpack.c.b16 %v2572, %v2570
      %v2603 = vpack.c.b16 %v2575, %v2573
      %v2604 = vpack.c.b16 %v2576, %v2574
      %v2605 = vpack.c.b16 %v2579, %v2577
      %v2606 = vpack.c.b16 %v2580, %v2578
      %v2607 = vpack.c.b16 %v2583, %v2581
      %v2608 = vpack.c.b16 %v2584, %v2582
      %v2609 = vpack.c.b16 %v2587, %v2585
      %v2610 = vpack.c.b16 %v2588, %v2586
      %v2611 = vpack.c.b16 %v2591, %v2589
      %v2612 = vpack.c.b16 %v2592, %v2590
      %v2613 = vpack.c.b16 %v2595, %v2593
      %v2614 = vpack.c.b16 %v2596, %v2594
      %v2615 = vpack.c.b16 %v2599, %v2597
      %v2616 = vpack.c.b16 %v2600, %v2598
      %2633 = vmatprep.subr.bf16.mxu0 %v2602
      %2634 = vmatpush1.bf16.msra.mxu0 %v2601
      %2635 = vmatprep.subr.bf16.mxu0 %v2604
      %2636 = vmatpush1.bf16.msra.mxu0 %v2603
      %2637 = vmatprep.subr.bf16.mxu0 %v2606
      %2638 = vmatpush1.bf16.msra.mxu0 %v2605
      %2639 = vmatprep.subr.bf16.mxu0 %v2608
      %2640 = vmatpush1.bf16.msra.mxu0 %v2607
      %2641 = vmatprep.subr.bf16.mxu0 %v2610
      %2642 = vmatpush1.bf16.msra.mxu0 %v2609
      %2643 = vmatprep.subr.bf16.mxu0 %v2612
      %2644 = vmatpush1.bf16.msra.mxu0 %v2611
      %2645 = vmatprep.subr.bf16.mxu0 %v2614
      %2646 = vmatpush1.bf16.msra.mxu0 %v2613
      %2647 = vmatprep.subr.bf16.mxu0 %v2616
      %2648 = vmatpush1.bf16.msra.mxu0 %v2615
      %2649 = vmatprep.subr.bf16.mxu0 0
      %2650 = vmatpush1.bf16.msra.mxu0 0
      %2651 = vmatprep.subr.bf16.mxu0 0
      %2652 = vmatpush1.bf16.msra.mxu0 0
      %2653 = vmatprep.subr.bf16.mxu0 0
      %2654 = vmatpush1.bf16.msra.mxu0 0
      %2655 = vmatprep.subr.bf16.mxu0 0
      %2656 = vmatpush1.bf16.msra.mxu0 0
      %2657 = vmatprep.subr.bf16.mxu0 0
      %2658 = vmatpush1.bf16.msra.mxu0 0
      %2659 = vmatprep.subr.bf16.mxu0 0
      %2660 = vmatpush1.bf16.msra.mxu0 0
      %2661 = vmatprep.subr.bf16.mxu0 0
      %2662 = vmatpush1.bf16.msra.mxu0 0
      %2663 = vmatprep.subr.bf16.mxu0 0
      %2664 = vmatpush1.bf16.msra.mxu0 0
      %2665 = vmatprep.mubr.bf16.mxu0 0
      %2666 = vmatmul.mubr.bf16.gmra.mrb[0].mxu0 %v2535
      %v2667 = vpop.f32.mrb[0].mxu0
      %v2668 = vadd.f32 0.0, %v2667
      %v2669 = vpop.f32.mrb[0].mxu0
      %v2670 = vadd.f32 0.0, %v2669
      %v2671 = vpop.f32.mrb[0].mxu0
      %v2672 = vpop.f32.mrb[0].mxu0
      %2673 = vdwg.mxu0
      %v2674 = vadd.f32 %v2488, %v2668
      %v2675 = vadd.f32 %v2489, %v2670
      %s2676 = scalar_lea.vmem %s6, 8
      %v2677 = vld [vmem:[%s2676] sm:$0x3]
      %v2679 = vsel %vm1938, %v2677, 0
      %2681 = vmatprep.subr.bf16.mxu0 0
      %2682 = vmatpush1.bf16.msra.mxu0 %v1936
      %2683 = vmatprep.subr.bf16.mxu0 0
      %2684 = vmatpush1.bf16.msra.mxu0 0
      %2685 = vmatprep.subr.bf16.mxu0 0
      %2686 = vmatpush1.bf16.msra.mxu0 0
      %2687 = vmatprep.subr.bf16.mxu0 0
      %2688 = vmatpush1.bf16.msra.mxu0 0
      %2689 = vmatprep.subr.bf16.mxu0 0
      %2690 = vmatpush1.bf16.msra.mxu0 0
      %2691 = vmatprep.subr.bf16.mxu0 0
      %2692 = vmatpush1.bf16.msra.mxu0 0
      %2693 = vmatprep.subr.bf16.mxu0 0
      %2694 = vmatpush1.bf16.msra.mxu0 0
      %2695 = vmatprep.subr.bf16.mxu0 0
      %2696 = vmatpush1.bf16.msra.mxu0 0
      %2697 = vmatprep.subr.bf16.mxu0 0
      %2698 = vmatpush1.bf16.msra.mxu0 0
      %2699 = vmatprep.subr.bf16.mxu0 0
      %2700 = vmatpush1.bf16.msra.mxu0 0
      %2701 = vmatprep.subr.bf16.mxu0 0
      %2702 = vmatpush1.bf16.msra.mxu0 0
      %2703 = vmatprep.subr.bf16.mxu0 0
      %2704 = vmatpush1.bf16.msra.mxu0 0
      %2705 = vmatprep.subr.bf16.mxu0 0
      %2706 = vmatpush1.bf16.msra.mxu0 0
      %2707 = vmatprep.subr.bf16.mxu0 0
      %2708 = vmatpush1.bf16.msra.mxu0 0
      %2709 = vmatprep.subr.bf16.mxu0 0
      %2710 = vmatpush1.bf16.msra.mxu0 0
      %2711 = vmatprep.subr.bf16.mxu0 0
      %2712 = vmatpush1.bf16.msra.mxu0 0
      %2713 = vmatprep.mubr.bf16.mxu0 0
      %2714 = vmatmul.mubr.bf16.gmra.mrb[0].mxu0 %v2679
      %v2715 = vpop.f32.mrb[0].mxu0
      %v2716 = vadd.f32 0.0, %v2715
      %v2717 = vpop.f32.mrb[0].mxu0
      %v2718 = vpop.f32.mrb[0].mxu0
      %v2719 = vpop.f32.mrb[0].mxu0
      %2720 = vdwg.mxu0
      %v2721 = vpack.c.bf16 %v2716, %v2716
      %s2722 = scalar_lea.vmem %s7, 512
      %v2723 = vld [vmem:[%s2722] sm:$0xff]
      %v2724 = vld [vmem:[%s2722 + $0x8] sm:$0xff]
      %v2725 = vld [vmem:[%s2722 + $0x10] sm:$0xff]
      %v2726 = vld [vmem:[%s2722 + $0x18] sm:$0xff]
      %v2727 = vld [vmem:[%s2722 + $0x20] sm:$0xff]
      %v2728 = vld [vmem:[%s2722 + $0x28] sm:$0xff]
      %v2729 = vld [vmem:[%s2722 + $0x30] sm:$0xff]
      %v2730 = vld [vmem:[%s2722 + $0x38] sm:$0xff]
      %v2731 = vld [vmem:[%s2722 + $0x40] sm:$0xff]
      %v2732 = vld [vmem:[%s2722 + $0x48] sm:$0xff]
      %v2733 = vld [vmem:[%s2722 + $0x50] sm:$0xff]
      %v2734 = vld [vmem:[%s2722 + $0x58] sm:$0xff]
      %v2735 = vld [vmem:[%s2722 + $0x60] sm:$0xff]
      %v2736 = vld [vmem:[%s2722 + $0x68] sm:$0xff]
      %v2737 = vld [vmem:[%s2722 + $0x70] sm:$0xff]
      %v2738 = vld [vmem:[%s2722 + $0x78] sm:$0xff]
      %v2755 = vunpack.c.l.b16 %v2723
      %v2756 = vunpack.c.h.b16 %v2723
      %v2757 = vunpack.c.l.b16 %v2724
      %v2758 = vunpack.c.h.b16 %v2724
      %v2759 = vunpack.c.l.b16 %v2725
      %v2760 = vunpack.c.h.b16 %v2725
      %v2761 = vunpack.c.l.b16 %v2726
      %v2762 = vunpack.c.h.b16 %v2726
      %v2763 = vunpack.c.l.b16 %v2727
      %v2764 = vunpack.c.h.b16 %v2727
      %v2765 = vunpack.c.l.b16 %v2728
      %v2766 = vunpack.c.h.b16 %v2728
      %v2767 = vunpack.c.l.b16 %v2729
      %v2768 = vunpack.c.h.b16 %v2729
      %v2769 = vunpack.c.l.b16 %v2730
      %v2770 = vunpack.c.h.b16 %v2730
      %v2771 = vunpack.c.l.b16 %v2731
      %v2772 = vunpack.c.h.b16 %v2731
      %v2773 = vunpack.c.l.b16 %v2732
      %v2774 = vunpack.c.h.b16 %v2732
      %v2775 = vunpack.c.l.b16 %v2733
      %v2776 = vunpack.c.h.b16 %v2733
      %v2777 = vunpack.c.l.b16 %v2734
      %v2778 = vunpack.c.h.b16 %v2734
      %v2779 = vunpack.c.l.b16 %v2735
      %v2780 = vunpack.c.h.b16 %v2735
      %v2781 = vunpack.c.l.b16 %v2736
      %v2782 = vunpack.c.h.b16 %v2736
      %v2783 = vunpack.c.l.b16 %v2737
      %v2784 = vunpack.c.h.b16 %v2737
      %v2785 = vunpack.c.l.b16 %v2738
      %v2786 = vunpack.c.h.b16 %v2738
      %v2787 = vpack.c.b16 %v2757, %v2755
      %v2788 = vpack.c.b16 %v2758, %v2756
      %v2789 = vpack.c.b16 %v2761, %v2759
      %v2790 = vpack.c.b16 %v2762, %v2760
      %v2791 = vpack.c.b16 %v2765, %v2763
      %v2792 = vpack.c.b16 %v2766, %v2764
      %v2793 = vpack.c.b16 %v2769, %v2767
      %v2794 = vpack.c.b16 %v2770, %v2768
      %v2795 = vpack.c.b16 %v2773, %v2771
      %v2796 = vpack.c.b16 %v2774, %v2772
      %v2797 = vpack.c.b16 %v2777, %v2775
      %v2798 = vpack.c.b16 %v2778, %v2776
      %v2799 = vpack.c.b16 %v2781, %v2779
      %v2800 = vpack.c.b16 %v2782, %v2780
      %v2801 = vpack.c.b16 %v2785, %v2783
      %v2802 = vpack.c.b16 %v2786, %v2784
      %2819 = vmatprep.subr.bf16.mxu0 %v2788
      %2820 = vmatpush1.bf16.msra.mxu0 %v2787
      %2821 = vmatprep.subr.bf16.mxu0 %v2790
      %2822 = vmatpush1.bf16.msra.mxu0 %v2789
      %2823 = vmatprep.subr.bf16.mxu0 %v2792
      %2824 = vmatpush1.bf16.msra.mxu0 %v2791
      %2825 = vmatprep.subr.bf16.mxu0 %v2794
      %2826 = vmatpush1.bf16.msra.mxu0 %v2793
      %2827 = vmatprep.subr.bf16.mxu0 %v2796
      %2828 = vmatpush1.bf16.msra.mxu0 %v2795
      %2829 = vmatprep.subr.bf16.mxu0 %v2798
      %2830 = vmatpush1.bf16.msra.mxu0 %v2797
      %2831 = vmatprep.subr.bf16.mxu0 %v2800
      %2832 = vmatpush1.bf16.msra.mxu0 %v2799
      %2833 = vmatprep.subr.bf16.mxu0 %v2802
      %2834 = vmatpush1.bf16.msra.mxu0 %v2801
      %2835 = vmatprep.subr.bf16.mxu0 0
      %2836 = vmatpush1.bf16.msra.mxu0 0
      %2837 = vmatprep.subr.bf16.mxu0 0
      %2838 = vmatpush1.bf16.msra.mxu0 0
      %2839 = vmatprep.subr.bf16.mxu0 0
      %2840 = vmatpush1.bf16.msra.mxu0 0
      %2841 = vmatprep.subr.bf16.mxu0 0
      %2842 = vmatpush1.bf16.msra.mxu0 0
      %2843 = vmatprep.subr.bf16.mxu0 0
      %2844 = vmatpush1.bf16.msra.mxu0 0
      %2845 = vmatprep.subr.bf16.mxu0 0
      %2846 = vmatpush1.bf16.msra.mxu0 0
      %2847 = vmatprep.subr.bf16.mxu0 0
      %2848 = vmatpush1.bf16.msra.mxu0 0
      %2849 = vmatprep.subr.bf16.mxu0 0
      %2850 = vmatpush1.bf16.msra.mxu0 0
      %2851 = vmatprep.mubr.bf16.mxu0 0
      %2852 = vmatmul.mubr.bf16.gmra.mrb[0].mxu0 %v2721
      %v2853 = vpop.f32.mrb[0].mxu0
      %v2854 = vadd.f32 0.0, %v2853
      %v2855 = vpop.f32.mrb[0].mxu0
      %v2856 = vadd.f32 0.0, %v2855
      %v2857 = vpop.f32.mrb[0].mxu0
      %v2858 = vpop.f32.mrb[0].mxu0
      %2859 = vdwg.mxu0
      %v2860 = vadd.f32 %v2674, %v2854
      %v2861 = vadd.f32 %v2675, %v2856
      %s2862 = scalar_lea.vmem %s6, 10
      %v2863 = vld [vmem:[%s2862] sm:$0x3]
      %v2865 = vsel %vm1938, %v2863, 0
      %2867 = vmatprep.subr.bf16.mxu0 0
      %2868 = vmatpush1.bf16.msra.mxu0 %v1936
      %2869 = vmatprep.subr.bf16.mxu0 0
      %2870 = vmatpush1.bf16.msra.mxu0 0
      %2871 = vmatprep.subr.bf16.mxu0 0
      %2872 = vmatpush1.bf16.msra.mxu0 0
      %2873 = vmatprep.subr.bf16.mxu0 0
      %2874 = vmatpush1.bf16.msra.mxu0 0
      %2875 = vmatprep.subr.bf16.mxu0 0
      %2876 = vmatpush1.bf16.msra.mxu0 0
      %2877 = vmatprep.subr.bf16.mxu0 0
      %2878 = vmatpush1.bf16.msra.mxu0 0
      %2879 = vmatprep.subr.bf16.mxu0 0
      %2880 = vmatpush1.bf16.msra.mxu0 0
      %2881 = vmatprep.subr.bf16.mxu0 0
      %2882 = vmatpush1.bf16.msra.mxu0 0
      %2883 = vmatprep.subr.bf16.mxu0 0
      %2884 = vmatpush1.bf16.msra.mxu0 0
      %2885 = vmatprep.subr.bf16.mxu0 0
      %2886 = vmatpush1.bf16.msra.mxu0 0
      %2887 = vmatprep.subr.bf16.mxu0 0
      %2888 = vmatpush1.bf16.msra.mxu0 0
      %2889 = vmatprep.subr.bf16.mxu0 0
      %2890 = vmatpush1.bf16.msra.mxu0 0
      %2891 = vmatprep.subr.bf16.mxu0 0
      %2892 = vmatpush1.bf16.msra.mxu0 0
      %2893 = vmatprep.subr.bf16.mxu0 0
      %2894 = vmatpush1.bf16.msra.mxu0 0
      %2895 = vmatprep.subr.bf16.mxu0 0
      %2896 = vmatpush1.bf16.msra.mxu0 0
      %2897 = vmatprep.subr.bf16.mxu0 0
      %2898 = vmatpush1.bf16.msra.mxu0 0
      %2899 = vmatprep.mubr.bf16.mxu0 0
      %2900 = vmatmul.mubr.bf16.gmra.mrb[0].mxu0 %v2865
      %v2901 = vpop.f32.mrb[0].mxu0
      %v2902 = vadd.f32 0.0, %v2901
      %v2903 = vpop.f32.mrb[0].mxu0
      %v2904 = vpop.f32.mrb[0].mxu0
      %v2905 = vpop.f32.mrb[0].mxu0
      %2906 = vdwg.mxu0
      %v2907 = vpack.c.bf16 %v2902, %v2902
      %s2908 = scalar_lea.vmem %s7, 640
      %v2909 = vld [vmem:[%s2908] sm:$0xff]
      %v2910 = vld [vmem:[%s2908 + $0x8] sm:$0xff]
      %v2911 = vld [vmem:[%s2908 + $0x10] sm:$0xff]
      %v2912 = vld [vmem:[%s2908 + $0x18] sm:$0xff]
      %v2913 = vld [vmem:[%s2908 + $0x20] sm:$0xff]
      %v2914 = vld [vmem:[%s2908 + $0x28] sm:$0xff]
      %v2915 = vld [vmem:[%s2908 + $0x30] sm:$0xff]
      %v2916 = vld [vmem:[%s2908 + $0x38] sm:$0xff]
      %v2917 = vld [vmem:[%s2908 + $0x40] sm:$0xff]
      %v2918 = vld [vmem:[%s2908 + $0x48] sm:$0xff]
      %v2919 = vld [vmem:[%s2908 + $0x50] sm:$0xff]
      %v2920 = vld [vmem:[%s2908 + $0x58] sm:$0xff]
      %v2921 = vld [vmem:[%s2908 + $0x60] sm:$0xff]
      %v2922 = vld [vmem:[%s2908 + $0x68] sm:$0xff]
      %v2923 = vld [vmem:[%s2908 + $0x70] sm:$0xff]
      %v2924 = vld [vmem:[%s2908 + $0x78] sm:$0xff]
      %v2941 = vunpack.c.l.b16 %v2909
      %v2942 = vunpack.c.h.b16 %v2909
      %v2943 = vunpack.c.l.b16 %v2910
      %v2944 = vunpack.c.h.b16 %v2910
      %v2945 = vunpack.c.l.b16 %v2911
      %v2946 = vunpack.c.h.b16 %v2911
      %v2947 = vunpack.c.l.b16 %v2912
      %v2948 = vunpack.c.h.b16 %v2912
      %v2949 = vunpack.c.l.b16 %v2913
      %v2950 = vunpack.c.h.b16 %v2913
      %v2951 = vunpack.c.l.b16 %v2914
      %v2952 = vunpack.c.h.b16 %v2914
      %v2953 = vunpack.c.l.b16 %v2915
      %v2954 = vunpack.c.h.b16 %v2915
      %v2955 = vunpack.c.l.b16 %v2916
      %v2956 = vunpack.c.h.b16 %v2916
      %v2957 = vunpack.c.l.b16 %v2917
      %v2958 = vunpack.c.h.b16 %v2917
      %v2959 = vunpack.c.l.b16 %v2918
      %v2960 = vunpack.c.h.b16 %v2918
      %v2961 = vunpack.c.l.b16 %v2919
      %v2962 = vunpack.c.h.b16 %v2919
      %v2963 = vunpack.c.l.b16 %v2920
      %v2964 = vunpack.c.h.b16 %v2920
      %v2965 = vunpack.c.l.b16 %v2921
      %v2966 = vunpack.c.h.b16 %v2921
      %v2967 = vunpack.c.l.b16 %v2922
      %v2968 = vunpack.c.h.b16 %v2922
      %v2969 = vunpack.c.l.b16 %v2923
      %v2970 = vunpack.c.h.b16 %v2923
      %v2971 = vunpack.c.l.b16 %v2924
      %v2972 = vunpack.c.h.b16 %v2924
      %v2973 = vpack.c.b16 %v2943, %v2941
      %v2974 = vpack.c.b16 %v2944, %v2942
      %v2975 = vpack.c.b16 %v2947, %v2945
      %v2976 = vpack.c.b16 %v2948, %v2946
      %v2977 = vpack.c.b16 %v2951, %v2949
      %v2978 = vpack.c.b16 %v2952, %v2950
      %v2979 = vpack.c.b16 %v2955, %v2953
      %v2980 = vpack.c.b16 %v2956, %v2954
      %v2981 = vpack.c.b16 %v2959, %v2957
      %v2982 = vpack.c.b16 %v2960, %v2958
      %v2983 = vpack.c.b16 %v2963, %v2961
      %v2984 = vpack.c.b16 %v2964, %v2962
      %v2985 = vpack.c.b16 %v2967, %v2965
      %v2986 = vpack.c.b16 %v2968, %v2966
      %v2987 = vpack.c.b16 %v2971, %v2969
      %v2988 = vpack.c.b16 %v2972, %v2970
      %3005 = vmatprep.subr.bf16.mxu0 %v2974
      %3006 = vmatpush1.bf16.msra.mxu0 %v2973
      %3007 = vmatprep.subr.bf16.mxu0 %v2976
      %3008 = vmatpush1.bf16.msra.mxu0 %v2975
      %3009 = vmatprep.subr.bf16.mxu0 %v2978
      %3010 = vmatpush1.bf16.msra.mxu0 %v2977
      %3011 = vmatprep.subr.bf16.mxu0 %v2980
      %3012 = vmatpush1.bf16.msra.mxu0 %v2979
      %3013 = vmatprep.subr.bf16.mxu0 %v2982
      %3014 = vmatpush1.bf16.msra.mxu0 %v2981
      %3015 = vmatprep.subr.bf16.mxu0 %v2984
      %3016 = vmatpush1.bf16.msra.mxu0 %v2983
      %3017 = vmatprep.subr.bf16.mxu0 %v2986
      %3018 = vmatpush1.bf16.msra.mxu0 %v2985
      %3019 = vmatprep.subr.bf16.mxu0 %v2988
      %3020 = vmatpush1.bf16.msra.mxu0 %v2987
      %3021 = vmatprep.subr.bf16.mxu0 0
      %3022 = vmatpush1.bf16.msra.mxu0 0
      %3023 = vmatprep.subr.bf16.mxu0 0
      %3024 = vmatpush1.bf16.msra.mxu0 0
      %3025 = vmatprep.subr.bf16.mxu0 0
      %3026 = vmatpush1.bf16.msra.mxu0 0
      %3027 = vmatprep.subr.bf16.mxu0 0
      %3028 = vmatpush1.bf16.msra.mxu0 0
      %3029 = vmatprep.subr.bf16.mxu0 0
      %3030 = vmatpush1.bf16.msra.mxu0 0
      %3031 = vmatprep.subr.bf16.mxu0 0
      %3032 = vmatpush1.bf16.msra.mxu0 0
      %3033 = vmatprep.subr.bf16.mxu0 0
      %3034 = vmatpush1.bf16.msra.mxu0 0
      %3035 = vmatprep.subr.bf16.mxu0 0
      %3036 = vmatpush1.bf16.msra.mxu0 0
      %3037 = vmatprep.mubr.bf16.mxu0 0
      %3038 = vmatmul.mubr.bf16.gmra.mrb[0].mxu0 %v2907
      %v3039 = vpop.f32.mrb[0].mxu0
      %v3040 = vadd.f32 0.0, %v3039
      %v3041 = vpop.f32.mrb[0].mxu0
      %v3042 = vadd.f32 0.0, %v3041
      %v3043 = vpop.f32.mrb[0].mxu0
      %v3044 = vpop.f32.mrb[0].mxu0
      %3045 = vdwg.mxu0
      %v3046 = vadd.f32 %v2860, %v3040
      %v3047 = vadd.f32 %v2861, %v3042
      %s3048 = scalar_lea.vmem %s6, 12
      %v3049 = vld [vmem:[%s3048] sm:$0x3]
      %v3051 = vsel %vm1938, %v3049, 0
      %3053 = vmatprep.subr.bf16.mxu0 0
      %3054 = vmatpush1.bf16.msra.mxu0 %v1936
      %3055 = vmatprep.subr.bf16.mxu0 0
      %3056 = vmatpush1.bf16.msra.mxu0 0
      %3057 = vmatprep.subr.bf16.mxu0 0
      %3058 = vmatpush1.bf16.msra.mxu0 0
      %3059 = vmatprep.subr.bf16.mxu0 0
      %3060 = vmatpush1.bf16.msra.mxu0 0
      %3061 = vmatprep.subr.bf16.mxu0 0
      %3062 = vmatpush1.bf16.msra.mxu0 0
      %3063 = vmatprep.subr.bf16.mxu0 0
      %3064 = vmatpush1.bf16.msra.mxu0 0
      %3065 = vmatprep.subr.bf16.mxu0 0
      %3066 = vmatpush1.bf16.msra.mxu0 0
      %3067 = vmatprep.subr.bf16.mxu0 0
      %3068 = vmatpush1.bf16.msra.mxu0 0
      %3069 = vmatprep.subr.bf16.mxu0 0
      %3070 = vmatpush1.bf16.msra.mxu0 0
      %3071 = vmatprep.subr.bf16.mxu0 0
      %3072 = vmatpush1.bf16.msra.mxu0 0
      %3073 = vmatprep.subr.bf16.mxu0 0
      %3074 = vmatpush1.bf16.msra.mxu0 0
      %3075 = vmatprep.subr.bf16.mxu0 0
      %3076 = vmatpush1.bf16.msra.mxu0 0
      %3077 = vmatprep.subr.bf16.mxu0 0
      %3078 = vmatpush1.bf16.msra.mxu0 0
      %3079 = vmatprep.subr.bf16.mxu0 0
      %3080 = vmatpush1.bf16.msra.mxu0 0
      %3081 = vmatprep.subr.bf16.mxu0 0
      %3082 = vmatpush1.bf16.msra.mxu0 0
      %3083 = vmatprep.subr.bf16.mxu0 0
      %3084 = vmatpush1.bf16.msra.mxu0 0
      %3085 = vmatprep.mubr.bf16.mxu0 0
      %3086 = vmatmul.mubr.bf16.gmra.mrb[0].mxu0 %v3051
      %v3087 = vpop.f32.mrb[0].mxu0
      %v3088 = vadd.f32 0.0, %v3087
      %v3089 = vpop.f32.mrb[0].mxu0
      %v3090 = vpop.f32.mrb[0].mxu0
      %v3091 = vpop.f32.mrb[0].mxu0
      %3092 = vdwg.mxu0
      %v3093 = vpack.c.bf16 %v3088, %v3088
      %s3094 = scalar_lea.vmem %s7, 768
      %v3095 = vld [vmem:[%s3094] sm:$0xff]
      %v3096 = vld [vmem:[%s3094 + $0x8] sm:$0xff]
      %v3097 = vld [vmem:[%s3094 + $0x10] sm:$0xff]
      %v3098 = vld [vmem:[%s3094 + $0x18] sm:$0xff]
      %v3099 = vld [vmem:[%s3094 + $0x20] sm:$0xff]
      %v3100 = vld [vmem:[%s3094 + $0x28] sm:$0xff]
      %v3101 = vld [vmem:[%s3094 + $0x30] sm:$0xff]
      %v3102 = vld [vmem:[%s3094 + $0x38] sm:$0xff]
      %v3103 = vld [vmem:[%s3094 + $0x40] sm:$0xff]
      %v3104 = vld [vmem:[%s3094 + $0x48] sm:$0xff]
      %v3105 = vld [vmem:[%s3094 + $0x50] sm:$0xff]
      %v3106 = vld [vmem:[%s3094 + $0x58] sm:$0xff]
      %v3107 = vld [vmem:[%s3094 + $0x60] sm:$0xff]
      %v3108 = vld [vmem:[%s3094 + $0x68] sm:$0xff]
      %v3109 = vld [vmem:[%s3094 + $0x70] sm:$0xff]
      %v3110 = vld [vmem:[%s3094 + $0x78] sm:$0xff]
      %v3127 = vunpack.c.l.b16 %v3095
      %v3128 = vunpack.c.h.b16 %v3095
      %v3129 = vunpack.c.l.b16 %v3096
      %v3130 = vunpack.c.h.b16 %v3096
      %v3131 = vunpack.c.l.b16 %v3097
      %v3132 = vunpack.c.h.b16 %v3097
      %v3133 = vunpack.c.l.b16 %v3098
      %v3134 = vunpack.c.h.b16 %v3098
      %v3135 = vunpack.c.l.b16 %v3099
      %v3136 = vunpack.c.h.b16 %v3099
      %v3137 = vunpack.c.l.b16 %v3100
      %v3138 = vunpack.c.h.b16 %v3100
      %v3139 = vunpack.c.l.b16 %v3101
      %v3140 = vunpack.c.h.b16 %v3101
      %v3141 = vunpack.c.l.b16 %v3102
      %v3142 = vunpack.c.h.b16 %v3102
      %v3143 = vunpack.c.l.b16 %v3103
      %v3144 = vunpack.c.h.b16 %v3103
      %v3145 = vunpack.c.l.b16 %v3104
      %v3146 = vunpack.c.h.b16 %v3104
      %v3147 = vunpack.c.l.b16 %v3105
      %v3148 = vunpack.c.h.b16 %v3105
      %v3149 = vunpack.c.l.b16 %v3106
      %v3150 = vunpack.c.h.b16 %v3106
      %v3151 = vunpack.c.l.b16 %v3107
      %v3152 = vunpack.c.h.b16 %v3107
      %v3153 = vunpack.c.l.b16 %v3108
      %v3154 = vunpack.c.h.b16 %v3108
      %v3155 = vunpack.c.l.b16 %v3109
      %v3156 = vunpack.c.h.b16 %v3109
      %v3157 = vunpack.c.l.b16 %v3110
      %v3158 = vunpack.c.h.b16 %v3110
      %v3159 = vpack.c.b16 %v3129, %v3127
      %v3160 = vpack.c.b16 %v3130, %v3128
      %v3161 = vpack.c.b16 %v3133, %v3131
      %v3162 = vpack.c.b16 %v3134, %v3132
      %v3163 = vpack.c.b16 %v3137, %v3135
      %v3164 = vpack.c.b16 %v3138, %v3136
      %v3165 = vpack.c.b16 %v3141, %v3139
      %v3166 = vpack.c.b16 %v3142, %v3140
      %v3167 = vpack.c.b16 %v3145, %v3143
      %v3168 = vpack.c.b16 %v3146, %v3144
      %v3169 = vpack.c.b16 %v3149, %v3147
      %v3170 = vpack.c.b16 %v3150, %v3148
      %v3171 = vpack.c.b16 %v3153, %v3151
      %v3172 = vpack.c.b16 %v3154, %v3152
      %v3173 = vpack.c.b16 %v3157, %v3155
      %v3174 = vpack.c.b16 %v3158, %v3156
      %3191 = vmatprep.subr.bf16.mxu0 %v3160
      %3192 = vmatpush1.bf16.msra.mxu0 %v3159
      %3193 = vmatprep.subr.bf16.mxu0 %v3162
      %3194 = vmatpush1.bf16.msra.mxu0 %v3161
      %3195 = vmatprep.subr.bf16.mxu0 %v3164
      %3196 = vmatpush1.bf16.msra.mxu0 %v3163
      %3197 = vmatprep.subr.bf16.mxu0 %v3166
      %3198 = vmatpush1.bf16.msra.mxu0 %v3165
      %3199 = vmatprep.subr.bf16.mxu0 %v3168
      %3200 = vmatpush1.bf16.msra.mxu0 %v3167
      %3201 = vmatprep.subr.bf16.mxu0 %v3170
      %3202 = vmatpush1.bf16.msra.mxu0 %v3169
      %3203 = vmatprep.subr.bf16.mxu0 %v3172
      %3204 = vmatpush1.bf16.msra.mxu0 %v3171
      %3205 = vmatprep.subr.bf16.mxu0 %v3174
      %3206 = vmatpush1.bf16.msra.mxu0 %v3173
      %3207 = vmatprep.subr.bf16.mxu0 0
      %3208 = vmatpush1.bf16.msra.mxu0 0
      %3209 = vmatprep.subr.bf16.mxu0 0
      %3210 = vmatpush1.bf16.msra.mxu0 0
      %3211 = vmatprep.subr.bf16.mxu0 0
      %3212 = vmatpush1.bf16.msra.mxu0 0
      %3213 = vmatprep.subr.bf16.mxu0 0
      %3214 = vmatpush1.bf16.msra.mxu0 0
      %3215 = vmatprep.subr.bf16.mxu0 0
      %3216 = vmatpush1.bf16.msra.mxu0 0
      %3217 = vmatprep.subr.bf16.mxu0 0
      %3218 = vmatpush1.bf16.msra.mxu0 0
      %3219 = vmatprep.subr.bf16.mxu0 0
      %3220 = vmatpush1.bf16.msra.mxu0 0
      %3221 = vmatprep.subr.bf16.mxu0 0
      %3222 = vmatpush1.bf16.msra.mxu0 0
      %3223 = vmatprep.mubr.bf16.mxu0 0
      %3224 = vmatmul.mubr.bf16.gmra.mrb[0].mxu0 %v3093
      %v3225 = vpop.f32.mrb[0].mxu0
      %v3226 = vadd.f32 0.0, %v3225
      %v3227 = vpop.f32.mrb[0].mxu0
      %v3228 = vadd.f32 0.0, %v3227
      %v3229 = vpop.f32.mrb[0].mxu0
      %v3230 = vpop.f32.mrb[0].mxu0
      %3231 = vdwg.mxu0
      %v3232 = vadd.f32 %v3046, %v3226
      %v3233 = vadd.f32 %v3047, %v3228
      %s3234 = scalar_lea.vmem %s6, 14
      %v3235 = vld [vmem:[%s3234] sm:$0x3]
      %v3237 = vsel %vm1938, %v3235, 0
      %3239 = vmatprep.subr.bf16.mxu0 0
      %3240 = vmatpush1.bf16.msra.mxu0 %v1936
      %3241 = vmatprep.subr.bf16.mxu0 0
      %3242 = vmatpush1.bf16.msra.mxu0 0
      %3243 = vmatprep.subr.bf16.mxu0 0
      %3244 = vmatpush1.bf16.msra.mxu0 0
      %3245 = vmatprep.subr.bf16.mxu0 0
      %3246 = vmatpush1.bf16.msra.mxu0 0
      %3247 = vmatprep.subr.bf16.mxu0 0
      %3248 = vmatpush1.bf16.msra.mxu0 0
      %3249 = vmatprep.subr.bf16.mxu0 0
      %3250 = vmatpush1.bf16.msra.mxu0 0
      %3251 = vmatprep.subr.bf16.mxu0 0
      %3252 = vmatpush1.bf16.msra.mxu0 0
      %3253 = vmatprep.subr.bf16.mxu0 0
      %3254 = vmatpush1.bf16.msra.mxu0 0
      %3255 = vmatprep.subr.bf16.mxu0 0
      %3256 = vmatpush1.bf16.msra.mxu0 0
      %3257 = vmatprep.subr.bf16.mxu0 0
      %3258 = vmatpush1.bf16.msra.mxu0 0
      %3259 = vmatprep.subr.bf16.mxu0 0
      %3260 = vmatpush1.bf16.msra.mxu0 0
      %3261 = vmatprep.subr.bf16.mxu0 0
      %3262 = vmatpush1.bf16.msra.mxu0 0
      %3263 = vmatprep.subr.bf16.mxu0 0
      %3264 = vmatpush1.bf16.msra.mxu0 0
      %3265 = vmatprep.subr.bf16.mxu0 0
      %3266 = vmatpush1.bf16.msra.mxu0 0
      %3267 = vmatprep.subr.bf16.mxu0 0
      %3268 = vmatpush1.bf16.msra.mxu0 0
      %3269 = vmatprep.subr.bf16.mxu0 0
      %3270 = vmatpush1.bf16.msra.mxu0 0
      %3271 = vmatprep.mubr.bf16.mxu0 0
      %3272 = vmatmul.mubr.bf16.gmra.mrb[0].mxu0 %v3237
      %v3273 = vpop.f32.mrb[0].mxu0
      %v3274 = vadd.f32 0.0, %v3273
      %v3275 = vpop.f32.mrb[0].mxu0
      %v3276 = vpop.f32.mrb[0].mxu0
      %v3277 = vpop.f32.mrb[0].mxu0
      %3278 = vdwg.mxu0
      %v3279 = vpack.c.bf16 %v3274, %v3274
      %s3280 = scalar_lea.vmem %s7, 896
      %v3281 = vld [vmem:[%s3280] sm:$0xff]
      %v3282 = vld [vmem:[%s3280 + $0x8] sm:$0xff]
      %v3283 = vld [vmem:[%s3280 + $0x10] sm:$0xff]
      %v3284 = vld [vmem:[%s3280 + $0x18] sm:$0xff]
      %v3285 = vld [vmem:[%s3280 + $0x20] sm:$0xff]
      %v3286 = vld [vmem:[%s3280 + $0x28] sm:$0xff]
      %v3287 = vld [vmem:[%s3280 + $0x30] sm:$0xff]
      %v3288 = vld [vmem:[%s3280 + $0x38] sm:$0xff]
      %v3289 = vld [vmem:[%s3280 + $0x40] sm:$0xff]
      %v3290 = vld [vmem:[%s3280 + $0x48] sm:$0xff]
      %v3291 = vld [vmem:[%s3280 + $0x50] sm:$0xff]
      %v3292 = vld [vmem:[%s3280 + $0x58] sm:$0xff]
      %v3293 = vld [vmem:[%s3280 + $0x60] sm:$0xff]
      %v3294 = vld [vmem:[%s3280 + $0x68] sm:$0xff]
      %v3295 = vld [vmem:[%s3280 + $0x70] sm:$0xff]
      %v3296 = vld [vmem:[%s3280 + $0x78] sm:$0xff]
      %v3313 = vunpack.c.l.b16 %v3281
      %v3314 = vunpack.c.h.b16 %v3281
      %v3315 = vunpack.c.l.b16 %v3282
      %v3316 = vunpack.c.h.b16 %v3282
      %v3317 = vunpack.c.l.b16 %v3283
      %v3318 = vunpack.c.h.b16 %v3283
      %v3319 = vunpack.c.l.b16 %v3284
      %v3320 = vunpack.c.h.b16 %v3284
      %v3321 = vunpack.c.l.b16 %v3285
      %v3322 = vunpack.c.h.b16 %v3285
      %v3323 = vunpack.c.l.b16 %v3286
      %v3324 = vunpack.c.h.b16 %v3286
      %v3325 = vunpack.c.l.b16 %v3287
      %v3326 = vunpack.c.h.b16 %v3287
      %v3327 = vunpack.c.l.b16 %v3288
      %v3328 = vunpack.c.h.b16 %v3288
      %v3329 = vunpack.c.l.b16 %v3289
      %v3330 = vunpack.c.h.b16 %v3289
      %v3331 = vunpack.c.l.b16 %v3290
      %v3332 = vunpack.c.h.b16 %v3290
      %v3333 = vunpack.c.l.b16 %v3291
      %v3334 = vunpack.c.h.b16 %v3291
      %v3335 = vunpack.c.l.b16 %v3292
      %v3336 = vunpack.c.h.b16 %v3292
      %v3337 = vunpack.c.l.b16 %v3293
      %v3338 = vunpack.c.h.b16 %v3293
      %v3339 = vunpack.c.l.b16 %v3294
      %v3340 = vunpack.c.h.b16 %v3294
      %v3341 = vunpack.c.l.b16 %v3295
      %v3342 = vunpack.c.h.b16 %v3295
      %v3343 = vunpack.c.l.b16 %v3296
      %v3344 = vunpack.c.h.b16 %v3296
      %v3345 = vpack.c.b16 %v3315, %v3313
      %v3346 = vpack.c.b16 %v3316, %v3314
      %v3347 = vpack.c.b16 %v3319, %v3317
      %v3348 = vpack.c.b16 %v3320, %v3318
      %v3349 = vpack.c.b16 %v3323, %v3321
      %v3350 = vpack.c.b16 %v3324, %v3322
      %v3351 = vpack.c.b16 %v3327, %v3325
      %v3352 = vpack.c.b16 %v3328, %v3326
      %v3353 = vpack.c.b16 %v3331, %v3329
      %v3354 = vpack.c.b16 %v3332, %v3330
      %v3355 = vpack.c.b16 %v3335, %v3333
      %v3356 = vpack.c.b16 %v3336, %v3334
      %v3357 = vpack.c.b16 %v3339, %v3337
      %v3358 = vpack.c.b16 %v3340, %v3338
      %v3359 = vpack.c.b16 %v3343, %v3341
      %v3360 = vpack.c.b16 %v3344, %v3342
      %3377 = vmatprep.subr.bf16.mxu0 %v3346
      %3378 = vmatpush1.bf16.msra.mxu0 %v3345
      %3379 = vmatprep.subr.bf16.mxu0 %v3348
      %3380 = vmatpush1.bf16.msra.mxu0 %v3347
      %3381 = vmatprep.subr.bf16.mxu0 %v3350
      %3382 = vmatpush1.bf16.msra.mxu0 %v3349
      %3383 = vmatprep.subr.bf16.mxu0 %v3352
      %3384 = vmatpush1.bf16.msra.mxu0 %v3351
      %3385 = vmatprep.subr.bf16.mxu0 %v3354
      %3386 = vmatpush1.bf16.msra.mxu0 %v3353
      %3387 = vmatprep.subr.bf16.mxu0 %v3356
      %3388 = vmatpush1.bf16.msra.mxu0 %v3355
      %3389 = vmatprep.subr.bf16.mxu0 %v3358
      %3390 = vmatpush1.bf16.msra.mxu0 %v3357
      %3391 = vmatprep.subr.bf16.mxu0 %v3360
      %3392 = vmatpush1.bf16.msra.mxu0 %v3359
      %3393 = vmatprep.subr.bf16.mxu0 0
      %3394 = vmatpush1.bf16.msra.mxu0 0
      %3395 = vmatprep.subr.bf16.mxu0 0
      %3396 = vmatpush1.bf16.msra.mxu0 0
      %3397 = vmatprep.subr.bf16.mxu0 0
      %3398 = vmatpush1.bf16.msra.mxu0 0
      %3399 = vmatprep.subr.bf16.mxu0 0
      %3400 = vmatpush1.bf16.msra.mxu0 0
      %3401 = vmatprep.subr.bf16.mxu0 0
      %3402 = vmatpush1.bf16.msra.mxu0 0
      %3403 = vmatprep.subr.bf16.mxu0 0
      %3404 = vmatpush1.bf16.msra.mxu0 0
      %3405 = vmatprep.subr.bf16.mxu0 0
      %3406 = vmatpush1.bf16.msra.mxu0 0
      %3407 = vmatprep.subr.bf16.mxu0 0
      %3408 = vmatpush1.bf16.msra.mxu0 0
      %3409 = vmatprep.mubr.bf16.mxu0 0
      %3410 = vmatmul.mubr.bf16.gmra.mrb[0].mxu0 %v3279
      %v3411 = vpop.f32.mrb[0].mxu0
      %v3412 = vadd.f32 0.0, %v3411
      %v3413 = vpop.f32.mrb[0].mxu0
      %v3414 = vadd.f32 0.0, %v3413
      %v3415 = vpop.f32.mrb[0].mxu0
      %v3416 = vpop.f32.mrb[0].mxu0
      %3417 = vdwg.mxu0
      %v3418 = vadd.f32 %v3232, %v3412
      %v3419 = vadd.f32 %v3233, %v3414
      %s3420 = scalar_lea.vmem %s6, 16
      %v3421 = vld [vmem:[%s3420] sm:$0x3]
      %v3423 = vsel %vm1938, %v3421, 0
      %3425 = vmatprep.subr.bf16.mxu0 0
      %3426 = vmatpush1.bf16.msra.mxu0 %v1936
      %3427 = vmatprep.subr.bf16.mxu0 0
      %3428 = vmatpush1.bf16.msra.mxu0 0
      %3429 = vmatprep.subr.bf16.mxu0 0
      %3430 = vmatpush1.bf16.msra.mxu0 0
      %3431 = vmatprep.subr.bf16.mxu0 0
      %3432 = vmatpush1.bf16.msra.mxu0 0
      %3433 = vmatprep.subr.bf16.mxu0 0
      %3434 = vmatpush1.bf16.msra.mxu0 0
      %3435 = vmatprep.subr.bf16.mxu0 0
      %3436 = vmatpush1.bf16.msra.mxu0 0
      %3437 = vmatprep.subr.bf16.mxu0 0
      %3438 = vmatpush1.bf16.msra.mxu0 0
      %3439 = vmatprep.subr.bf16.mxu0 0
      %3440 = vmatpush1.bf16.msra.mxu0 0
      %3441 = vmatprep.subr.bf16.mxu0 0
      %3442 = vmatpush1.bf16.msra.mxu0 0
      %3443 = vmatprep.subr.bf16.mxu0 0
      %3444 = vmatpush1.bf16.msra.mxu0 0
      %3445 = vmatprep.subr.bf16.mxu0 0
      %3446 = vmatpush1.bf16.msra.mxu0 0
      %3447 = vmatprep.subr.bf16.mxu0 0
      %3448 = vmatpush1.bf16.msra.mxu0 0
      %3449 = vmatprep.subr.bf16.mxu0 0
      %3450 = vmatpush1.bf16.msra.mxu0 0
      %3451 = vmatprep.subr.bf16.mxu0 0
      %3452 = vmatpush1.bf16.msra.mxu0 0
      %3453 = vmatprep.subr.bf16.mxu0 0
      %3454 = vmatpush1.bf16.msra.mxu0 0
      %3455 = vmatprep.subr.bf16.mxu0 0
      %3456 = vmatpush1.bf16.msra.mxu0 0
      %3457 = vmatprep.mubr.bf16.mxu0 0
      %3458 = vmatmul.mubr.bf16.gmra.mrb[0].mxu0 %v3423
      %v3459 = vpop.f32.mrb[0].mxu0
      %v3460 = vadd.f32 0.0, %v3459
      %v3461 = vpop.f32.mrb[0].mxu0
      %v3462 = vpop.f32.mrb[0].mxu0
      %v3463 = vpop.f32.mrb[0].mxu0
      %3464 = vdwg.mxu0
      %v3465 = vpack.c.bf16 %v3460, %v3460
      %s3466 = scalar_lea.vmem %s7, 1024
      %v3467 = vld [vmem:[%s3466] sm:$0xff]
      %v3468 = vld [vmem:[%s3466 + $0x8] sm:$0xff]
      %v3469 = vld [vmem:[%s3466 + $0x10] sm:$0xff]
      %v3470 = vld [vmem:[%s3466 + $0x18] sm:$0xff]
      %v3471 = vld [vmem:[%s3466 + $0x20] sm:$0xff]
      %v3472 = vld [vmem:[%s3466 + $0x28] sm:$0xff]
      %v3473 = vld [vmem:[%s3466 + $0x30] sm:$0xff]
      %v3474 = vld [vmem:[%s3466 + $0x38] sm:$0xff]
      %v3475 = vld [vmem:[%s3466 + $0x40] sm:$0xff]
      %v3476 = vld [vmem:[%s3466 + $0x48] sm:$0xff]
      %v3477 = vld [vmem:[%s3466 + $0x50] sm:$0xff]
      %v3478 = vld [vmem:[%s3466 + $0x58] sm:$0xff]
      %v3479 = vld [vmem:[%s3466 + $0x60] sm:$0xff]
      %v3480 = vld [vmem:[%s3466 + $0x68] sm:$0xff]
      %v3481 = vld [vmem:[%s3466 + $0x70] sm:$0xff]
      %v3482 = vld [vmem:[%s3466 + $0x78] sm:$0xff]
      %v3499 = vunpack.c.l.b16 %v3467
      %v3500 = vunpack.c.h.b16 %v3467
      %v3501 = vunpack.c.l.b16 %v3468
      %v3502 = vunpack.c.h.b16 %v3468
      %v3503 = vunpack.c.l.b16 %v3469
      %v3504 = vunpack.c.h.b16 %v3469
      %v3505 = vunpack.c.l.b16 %v3470
      %v3506 = vunpack.c.h.b16 %v3470
      %v3507 = vunpack.c.l.b16 %v3471
      %v3508 = vunpack.c.h.b16 %v3471
      %v3509 = vunpack.c.l.b16 %v3472
      %v3510 = vunpack.c.h.b16 %v3472
      %v3511 = vunpack.c.l.b16 %v3473
      %v3512 = vunpack.c.h.b16 %v3473
      %v3513 = vunpack.c.l.b16 %v3474
      %v3514 = vunpack.c.h.b16 %v3474
      %v3515 = vunpack.c.l.b16 %v3475
      %v3516 = vunpack.c.h.b16 %v3475
      %v3517 = vunpack.c.l.b16 %v3476
      %v3518 = vunpack.c.h.b16 %v3476
      %v3519 = vunpack.c.l.b16 %v3477
      %v3520 = vunpack.c.h.b16 %v3477
      %v3521 = vunpack.c.l.b16 %v3478
      %v3522 = vunpack.c.h.b16 %v3478
      %v3523 = vunpack.c.l.b16 %v3479
      %v3524 = vunpack.c.h.b16 %v3479
      %v3525 = vunpack.c.l.b16 %v3480
      %v3526 = vunpack.c.h.b16 %v3480
      %v3527 = vunpack.c.l.b16 %v3481
      %v3528 = vunpack.c.h.b16 %v3481
      %v3529 = vunpack.c.l.b16 %v3482
      %v3530 = vunpack.c.h.b16 %v3482
      %v3531 = vpack.c.b16 %v3501, %v3499
      %v3532 = vpack.c.b16 %v3502, %v3500
      %v3533 = vpack.c.b16 %v3505, %v3503
      %v3534 = vpack.c.b16 %v3506, %v3504
      %v3535 = vpack.c.b16 %v3509, %v3507
      %v3536 = vpack.c.b16 %v3510, %v3508
      %v3537 = vpack.c.b16 %v3513, %v3511
      %v3538 = vpack.c.b16 %v3514, %v3512
      %v3539 = vpack.c.b16 %v3517, %v3515
      %v3540 = vpack.c.b16 %v3518, %v3516
      %v3541 = vpack.c.b16 %v3521, %v3519
      %v3542 = vpack.c.b16 %v3522, %v3520
      %v3543 = vpack.c.b16 %v3525, %v3523
      %v3544 = vpack.c.b16 %v3526, %v3524
      %v3545 = vpack.c.b16 %v3529, %v3527
      %v3546 = vpack.c.b16 %v3530, %v3528
      %3563 = vmatprep.subr.bf16.mxu0 %v3532
      %3564 = vmatpush1.bf16.msra.mxu0 %v3531
      %3565 = vmatprep.subr.bf16.mxu0 %v3534
      %3566 = vmatpush1.bf16.msra.mxu0 %v3533
      %3567 = vmatprep.subr.bf16.mxu0 %v3536
      %3568 = vmatpush1.bf16.msra.mxu0 %v3535
      %3569 = vmatprep.subr.bf16.mxu0 %v3538
      %3570 = vmatpush1.bf16.msra.mxu0 %v3537
      %3571 = vmatprep.subr.bf16.mxu0 %v3540
      %3572 = vmatpush1.bf16.msra.mxu0 %v3539
      %3573 = vmatprep.subr.bf16.mxu0 %v3542
      %3574 = vmatpush1.bf16.msra.mxu0 %v3541
      %3575 = vmatprep.subr.bf16.mxu0 %v3544
      %3576 = vmatpush1.bf16.msra.mxu0 %v3543
      %3577 = vmatprep.subr.bf16.mxu0 %v3546
      %3578 = vmatpush1.bf16.msra.mxu0 %v3545
      %3579 = vmatprep.subr.bf16.mxu0 0
      %3580 = vmatpush1.bf16.msra.mxu0 0
      %3581 = vmatprep.subr.bf16.mxu0 0
      %3582 = vmatpush1.bf16.msra.mxu0 0
      %3583 = vmatprep.subr.bf16.mxu0 0
      %3584 = vmatpush1.bf16.msra.mxu0 0
      %3585 = vmatprep.subr.bf16.mxu0 0
      %3586 = vmatpush1.bf16.msra.mxu0 0
      %3587 = vmatprep.subr.bf16.mxu0 0
      %3588 = vmatpush1.bf16.msra.mxu0 0
      %3589 = vmatprep.subr.bf16.mxu0 0
      %3590 = vmatpush1.bf16.msra.mxu0 0
      %3591 = vmatprep.subr.bf16.mxu0 0
      %3592 = vmatpush1.bf16.msra.mxu0 0
      %3593 = vmatprep.subr.bf16.mxu0 0
      %3594 = vmatpush1.bf16.msra.mxu0 0
      %3595 = vmatprep.mubr.bf16.mxu0 0
      %3596 = vmatmul.mubr.bf16.gmra.mrb[0].mxu0 %v3465
      %v3597 = vpop.f32.mrb[0].mxu0
      %v3598 = vadd.f32 0.0, %v3597
      %v3599 = vpop.f32.mrb[0].mxu0
      %v3600 = vadd.f32 0.0, %v3599
      %v3601 = vpop.f32.mrb[0].mxu0
      %v3602 = vpop.f32.mrb[0].mxu0
      %3603 = vdwg.mxu0
      %v3604 = vadd.f32 %v3418, %v3598
      %v3605 = vadd.f32 %v3419, %v3600
      %v3606 = vld [vmem:[%s8] sm:$0x3]
      %v3608 = vlaneseq
      %v3609 = vshrl.u32 %v3608, 7
      %v3610 = vsub.s32 0, %v3609
      %v3611 = vrot.slane %v3606, %v3610
      %v3612 = vlaneseq
      %v3613 = vshrl.u32 %v3612, 7
      %v3614 = vsub.s32 1, %v3613
      %v3615 = vrot.slane %v3606, %v3614
      %v3618 = vadd.f32 %v3604, %v3611
      %v3619 = vadd.f32 %v3605, %v3615
      %v3620 = vmax.f32 %v3618, 0.0
      %v3621 = vmax.f32 %v3619, 0.0
      %v3624 = vcombine.low %v3620, %v3621
      %3626 = vst [vmem:[%s332] sm:$0xff] %v3624
      %p3627 = scmp.lt.s32.totalorder %s20, 1
      %s3628 = scalar_select %p3627, %s20, 1
      %s3629 = smul.addr %s3628, 2
      %s3630 = smul.addr %s3629, 4
      %s3631 = scalar_lea.vmem %s9, %s3630
      // Predicated region
      $region57: #{sp_forward.1} parent=55 // pred_check
        %p3632 = pneg %p232
      $region58: #{sp_forward.1} parent=55 // pred_check_branch
        %3634 = sbr.rel (%p3632) target = $region60
      $region59: #{sp_forward.1} parent=55 // pred_region
        _
      $region60: #{sp_forward.1} parent=55 // pred_fallthru
        _
    $region56: #{sp_forward.1} parent=5 // pred_fallthru
      _
    %p3635 = scmp.le.s32.totalorder 2, %s15
    // Predicated region
    $region61: #{sp_forward.1} parent=5 // pred_check
      %p3636 = pneg %p3635
    $region62: #{sp_forward.1} parent=5 // pred_check_branch
      %3638 = sbr.rel (%p3636) target = $region64
    $region63: #{sp_forward.1} parent=5 // pred_region
      %s3639 = ssub.s32 %s15, 2
      // Predicated region
      $region65: #{sp_forward.1} parent=63 // pred_check
        %p3640 = pneg %p238
      $region66: #{sp_forward.1} parent=63 // pred_check_branch
        %3642 = sbr.rel (%p3640) target = $region68
      $region67: #{sp_forward.1} parent=63 // pred_region
        %p3643 = scmp.lt.s32.totalorder %s21, 1
        %s3644 = scalar_select %p3643, %s21, 1
        %s3645 = smul.addr %s3644, 2
        %s3646 = smul.addr %s3645, 4
        %s3647 = scalar_lea.vmem %s9, %s3646
      $region68: #{sp_forward.1} parent=63 // pred_fallthru
        _
    $region64: #{sp_forward.1} parent=5 // pred_fallthru
      _
  $region6: #{sp_forward.1} parent=0 // loop_footer
    %s19 = sadd.s32 1, %s15
  $region7: #{sp_forward.1} parent=0 // loop_footer_branch
    %14 = sbr.rel target = $region3
  $region8: #{sp_forward.1} parent=0 // loop_exit
    _

</llo_original>
